<compile_context>
chip_gen: v7x
topology: tpu7x:2x2x1
jax: 0.10.0
libtpu: 0.0.40
codegen_flags: <defaults>
</compile_context>

<pallas_src>
import jax
import jax.numpy as jnp
from jax.experimental import pallas as pl
from jax.experimental.pallas import tpu as pltpu

LANE = 128
NUM_CLASSES = 10


def _round_up(v, m):
    return ((v + m - 1) // m) * m


def _mlp_kernel(x_ref,
                w1_ref, b1_ref,
                w2_ref, b2_ref,
                w3_ref, b3_ref,
                w4_ref, b4_ref,
                w5_ref, b5_ref,
                w6_ref, b6_ref,
                o_ref):
    # bf16 at every MXU input, f32 accumulation; bias + ReLU + log_softmax in f32.
    h = x_ref[...].astype(jnp.bfloat16)                 # (tile_n, 784)

    def dense_relu(h_bf16, w_ref, b_ref):
        acc = jnp.dot(h_bf16, w_ref[...],
                      preferred_element_type=jnp.float32) + b_ref[...]
        return jnp.maximum(acc, 0.0).astype(jnp.bfloat16)

    # Hidden layers (dropout = identity in eval mode).
    h = dense_relu(h, w1_ref, b1_ref)
    h = dense_relu(h, w2_ref, b2_ref)
    h = dense_relu(h, w3_ref, b3_ref)
    h = dense_relu(h, w4_ref, b4_ref)
    h = dense_relu(h, w5_ref, b5_ref)

    # Output layer: class dim zero-padded to 128 lanes.  Mask padded lanes with
    # a large finite negative (exp underflows to 0) and do a row-wise
    # log_softmax; store the full 128-lane slab (lane-dense, unmasked vst) and
    # let the wrapper slice the 10 real classes.
    logits = jnp.dot(h, w6_ref[...],
                     preferred_element_type=jnp.float32) + b6_ref[...]
    col = jax.lax.broadcasted_iota(jnp.int32, logits.shape, 1)
    logits = jnp.where(col < NUM_CLASSES, logits, jnp.float32(-1e30))
    m = jnp.max(logits, axis=-1, keepdims=True)
    z = logits - m
    lse = jnp.log(jnp.sum(jnp.exp(z), axis=-1, keepdims=True))
    o_ref[...] = z - lse


def prepare_params(params):
    """One-time weight/bias prep (hoisted out of the forward path).

    params: list of (W_(in,out), b) f32 pairs (W is PyTorch W.T).
    Output lane dims are zero-padded to 128; layer-1 input stays 784 so it
    matches the unpadded x; deeper inputs match the previous padded output.
    Weights are cast to bf16 (MXU inputs), biases kept f32.
    """
    padded = []
    prev_pad = params[0][0].shape[0]                    # 784, unpadded
    for w, b in params:
        d_in, d_out = w.shape
        out_pad = _round_up(d_out, LANE)
        w_p = jnp.pad(w.astype(jnp.bfloat16),
                      ((0, prev_pad - d_in), (0, out_pad - d_out)))
        b_p = jnp.pad(b.astype(jnp.float32), (0, out_pad - d_out)).reshape(1, -1)
        padded.append((w_p, b_p))
        prev_pad = out_pad
    return padded


def clothes_classifier_forward(x, padded_params, *, tile_n=1024):
    """x: (N, 1, 28, 28) or (N, 784) (any float dtype).
    padded_params: output of prepare_params()."""
    n = x.shape[0]
    x2d = x.reshape(n, -1)                              # (N, 784), no cast/pad
    in_features = x2d.shape[1]

    # Round the batch only to the 8-sublane granularity (cheap, usually a
    # no-op); no padding to a tile_n multiple -> no wasted rows.
    n_pad = _round_up(n, 8)
    if n_pad != n:
        x2d = jnp.pad(x2d, ((0, n_pad - n), (0, 0)))

    # Cap tile_n so the parallel batch grid has >= 2 steps when n allows it
    # (keeps both v7x TensorCores busy); keep 8-sublane alignment.
    tile_n = max(8, min(tile_n, _round_up(pl.cdiv(n_pad, 2), 8)))
    grid = (pl.cdiv(n_pad, tile_n),)

    def run(pinned_mode):
        # x: tiled along the batch; last dim = full array dim (784) is legal,
        # Mosaic pads K to the lane layout inside VMEM.
        in_specs = [pl.BlockSpec((tile_n, in_features), lambda i: (i, 0))]
        flat_args = [x2d]
        for w_p, b_p in padded_params:
            flat_args += [w_p, b_p]
            if pinned_mode is None:
                in_specs += [pl.BlockSpec(w_p.shape, lambda i: (0, 0)),
                             pl.BlockSpec(b_p.shape, lambda i: (0, 0))]
            else:
                # Grid-invariant operands: a single buffer is enough.
                in_specs += [pl.BlockSpec(w_p.shape, lambda i: (0, 0),
                                          pipeline_mode=pinned_mode),
                             pl.BlockSpec(b_p.shape, lambda i: (0, 0),
                                          pipeline_mode=pinned_mode)]
        return pl.pallas_call(
            _mlp_kernel,
            out_shape=jax.ShapeDtypeStruct((n_pad, LANE), jnp.float32),
            grid=grid,
            in_specs=in_specs,
            out_specs=pl.BlockSpec((tile_n, LANE), lambda i: (i, 0)),
            compiler_params=pltpu.CompilerParams(
                dimension_semantics=("parallel",),
                vmem_limit_bytes=24 << 20),
        )(*flat_args)

    try:
        out = run(pl.Buffered(1))
    except Exception:
        # pipeline_mode / Buffered(1) not supported on this jax version:
        # fall back to default double-buffering (correctness identical).
        out = run(None)

    return out[:n, :NUM_CLASSES]


def init_params(key):
    """Deterministic synthetic weights with nn.Linear's shapes.

    Stored as (in_features, out_features) = W.T of PyTorch's (out, in)."""
    dims = [784, 256, 128, 64, 32, 16, 10]
    params = []
    for i in range(len(dims) - 1):
        key, kw, kb = jax.random.split(key, 3)
        fan_in, fan_out = dims[i], dims[i + 1]
        bound = 1.0 / jnp.sqrt(fan_in)
        w = jax.random.uniform(kw, (fan_in, fan_out), jnp.float32, -bound, bound)
        b = jax.random.uniform(kb, (fan_out,), jnp.float32, -bound, bound)
        params.append((w, b))
    return params


if __name__ == "__main__":
    key = jax.random.PRNGKey(0)
    key, kx = jax.random.split(key)

    # Small batch of Fashion-MNIST-shaped inputs: NCHW (2, 1, 28, 28).
    x = jax.random.normal(kx, (2, 1, 28, 28), dtype=jnp.float32)
    params = init_params(key)
    padded_params = prepare_params(params)          # done once, reused per call

    out = clothes_classifier_forward(x, padded_params)
    out = jax.block_until_ready(out)

    # Sanity: shape and log_softmax rows sum (in prob space) to ~1.
    assert out.shape == (2, 10)
    assert jnp.allclose(jnp.sum(jnp.exp(out), axis=1), 1.0, atol=1e-4)

    # Cross-check against a pure-JAX f32 reference (bf16 matmul tolerance).
    ref = x.reshape(2, -1)
    for i, (w, b) in enumerate(params):
        ref = ref @ w + b
        if i < len(params) - 1:
            ref = jnp.maximum(ref, 0.0)
    ref = jax.nn.log_softmax(ref, axis=1)
    assert jnp.allclose(out, ref, atol=5e-2), float(jnp.max(jnp.abs(out - ref)))

    print("KERNEL_OK")
</pallas_src>

<mosaic_0001>
module attributes {stable_mosaic.version = 11 : i64} {
  func.func @_mlp_kernel(%arg0: i32, %arg1: memref<8x784xf32, #tpu.memory_space<vmem>>, %arg2: memref<784x256xbf16, #tpu.memory_space<vmem>>, %arg3: memref<1x256xf32, #tpu.memory_space<vmem>>, %arg4: memref<256x128xbf16, #tpu.memory_space<vmem>>, %arg5: memref<1x128xf32, #tpu.memory_space<vmem>>, %arg6: memref<128x128xbf16, #tpu.memory_space<vmem>>, %arg7: memref<1x128xf32, #tpu.memory_space<vmem>>, %arg8: memref<128x128xbf16, #tpu.memory_space<vmem>>, %arg9: memref<1x128xf32, #tpu.memory_space<vmem>>, %arg10: memref<128x128xbf16, #tpu.memory_space<vmem>>, %arg11: memref<1x128xf32, #tpu.memory_space<vmem>>, %arg12: memref<128x128xbf16, #tpu.memory_space<vmem>>, %arg13: memref<1x128xf32, #tpu.memory_space<vmem>>, %arg14: memref<8x128xf32, #tpu.memory_space<vmem>>) attributes {dimension_semantics = [#tpu.dimension_semantics<parallel>], iteration_bounds = array<i64: 1>, scalar_prefetch = 0 : i64, scratch_operands = 0 : i64, tpu.core_type = #tpu.core_type<tc>, window_params = [{transform_indices = @transform_0, window_bounds = array<i64: 8, 784>}, {pipeline_mode = #tpu.pipeline_mode<synchronous>, transform_indices = @transform_1, window_bounds = array<i64: 784, 256>}, {pipeline_mode = #tpu.pipeline_mode<synchronous>, transform_indices = @transform_2, window_bounds = array<i64: 1, 256>}, {pipeline_mode = #tpu.pipeline_mode<synchronous>, transform_indices = @transform_3, window_bounds = array<i64: 256, 128>}, {pipeline_mode = #tpu.pipeline_mode<synchronous>, transform_indices = @transform_4, window_bounds = array<i64: 1, 128>}, {pipeline_mode = #tpu.pipeline_mode<synchronous>, transform_indices = @transform_5, window_bounds = array<i64: 128, 128>}, {pipeline_mode = #tpu.pipeline_mode<synchronous>, transform_indices = @transform_6, window_bounds = array<i64: 1, 128>}, {pipeline_mode = #tpu.pipeline_mode<synchronous>, transform_indices = @transform_7, window_bounds = array<i64: 128, 128>}, {pipeline_mode = #tpu.pipeline_mode<synchronous>, transform_indices = @transform_8, window_bounds = array<i64: 1, 128>}, {pipeline_mode = #tpu.pipeline_mode<synchronous>, transform_indices = @transform_9, window_bounds = array<i64: 128, 128>}, {pipeline_mode = #tpu.pipeline_mode<synchronous>, transform_indices = @transform_10, window_bounds = array<i64: 1, 128>}, {pipeline_mode = #tpu.pipeline_mode<synchronous>, transform_indices = @transform_11, window_bounds = array<i64: 128, 128>}, {pipeline_mode = #tpu.pipeline_mode<synchronous>, transform_indices = @transform_12, window_bounds = array<i64: 1, 128>}, {transform_indices = @transform_13, window_bounds = array<i64: 8, 128>}]} {
    %c0 = arith.constant 0 : index
    %c0_0 = arith.constant 0 : index
    %0 = vector.load %arg1[%c0, %c0_0] : memref<8x784xf32, #tpu.memory_space<vmem>>, vector<8x784xf32>
    %1 = arith.truncf %0 : vector<8x784xf32> to vector<8x784xbf16>
    %c0_1 = arith.constant 0 : index
    %c0_2 = arith.constant 0 : index
    %2 = vector.load %arg2[%c0_1, %c0_2] : memref<784x256xbf16, #tpu.memory_space<vmem>>, vector<784x256xbf16>
    %cst = arith.constant dense<0.000000e+00> : vector<8x256xf32>
    %3 = tpu.matmul %1, %2, %cst {dimension_numbers = #tpu.dot_dimension_numbers<[1], [0], [0], [1], [0, 0, 1, 1], [], []>} : vector<8x784xbf16>, vector<784x256xbf16>, vector<8x256xf32> -> vector<8x256xf32>
    %c0_3 = arith.constant 0 : index
    %c0_4 = arith.constant 0 : index
    %4 = vector.load %arg3[%c0_3, %c0_4] : memref<1x256xf32, #tpu.memory_space<vmem>>, vector<1x256xf32>
    %5 = vector.broadcast %4 : vector<1x256xf32> to vector<8x256xf32>
    %6 = arith.addf %3, %5 : vector<8x256xf32>
    %cst_5 = arith.constant 0.000000e+00 : f32
    %7 = vector.broadcast %cst_5 : f32 to vector<8x256xf32>
    %8 = arith.maximumf %6, %7 : vector<8x256xf32>
    %9 = arith.truncf %8 : vector<8x256xf32> to vector<8x256xbf16>
    %c0_6 = arith.constant 0 : index
    %c0_7 = arith.constant 0 : index
    %10 = vector.load %arg4[%c0_6, %c0_7] : memref<256x128xbf16, #tpu.memory_space<vmem>>, vector<256x128xbf16>
    %cst_8 = arith.constant dense<0.000000e+00> : vector<8x128xf32>
    %11 = tpu.matmul %9, %10, %cst_8 {dimension_numbers = #tpu.dot_dimension_numbers<[1], [0], [0], [1], [0, 0, 1, 1], [], []>} : vector<8x256xbf16>, vector<256x128xbf16>, vector<8x128xf32> -> vector<8x128xf32>
    %c0_9 = arith.constant 0 : index
    %c0_10 = arith.constant 0 : index
    %12 = vector.load %arg5[%c0_9, %c0_10] : memref<1x128xf32, #tpu.memory_space<vmem>>, vector<1x128xf32>
    %13 = vector.broadcast %12 : vector<1x128xf32> to vector<8x128xf32>
    %14 = arith.addf %11, %13 : vector<8x128xf32>
    %cst_11 = arith.constant 0.000000e+00 : f32
    %15 = vector.broadcast %cst_11 : f32 to vector<8x128xf32>
    %16 = arith.maximumf %14, %15 : vector<8x128xf32>
    %17 = arith.truncf %16 : vector<8x128xf32> to vector<8x128xbf16>
    %c0_12 = arith.constant 0 : index
    %c0_13 = arith.constant 0 : index
    %18 = vector.load %arg6[%c0_12, %c0_13] : memref<128x128xbf16, #tpu.memory_space<vmem>>, vector<128x128xbf16>
    %cst_14 = arith.constant dense<0.000000e+00> : vector<8x128xf32>
    %19 = tpu.matmul %17, %18, %cst_14 {dimension_numbers = #tpu.dot_dimension_numbers<[1], [0], [0], [1], [0, 0, 1, 1], [], []>} : vector<8x128xbf16>, vector<128x128xbf16>, vector<8x128xf32> -> vector<8x128xf32>
    %c0_15 = arith.constant 0 : index
    %c0_16 = arith.constant 0 : index
    %20 = vector.load %arg7[%c0_15, %c0_16] : memref<1x128xf32, #tpu.memory_space<vmem>>, vector<1x128xf32>
    %21 = vector.broadcast %20 : vector<1x128xf32> to vector<8x128xf32>
    %22 = arith.addf %19, %21 : vector<8x128xf32>
    %cst_17 = arith.constant 0.000000e+00 : f32
    %23 = vector.broadcast %cst_17 : f32 to vector<8x128xf32>
    %24 = arith.maximumf %22, %23 : vector<8x128xf32>
    %25 = arith.truncf %24 : vector<8x128xf32> to vector<8x128xbf16>
    %c0_18 = arith.constant 0 : index
    %c0_19 = arith.constant 0 : index
    %26 = vector.load %arg8[%c0_18, %c0_19] : memref<128x128xbf16, #tpu.memory_space<vmem>>, vector<128x128xbf16>
    %cst_20 = arith.constant dense<0.000000e+00> : vector<8x128xf32>
    %27 = tpu.matmul %25, %26, %cst_20 {dimension_numbers = #tpu.dot_dimension_numbers<[1], [0], [0], [1], [0, 0, 1, 1], [], []>} : vector<8x128xbf16>, vector<128x128xbf16>, vector<8x128xf32> -> vector<8x128xf32>
    %c0_21 = arith.constant 0 : index
    %c0_22 = arith.constant 0 : index
    %28 = vector.load %arg9[%c0_21, %c0_22] : memref<1x128xf32, #tpu.memory_space<vmem>>, vector<1x128xf32>
    %29 = vector.broadcast %28 : vector<1x128xf32> to vector<8x128xf32>
    %30 = arith.addf %27, %29 : vector<8x128xf32>
    %cst_23 = arith.constant 0.000000e+00 : f32
    %31 = vector.broadcast %cst_23 : f32 to vector<8x128xf32>
    %32 = arith.maximumf %30, %31 : vector<8x128xf32>
    %33 = arith.truncf %32 : vector<8x128xf32> to vector<8x128xbf16>
    %c0_24 = arith.constant 0 : index
    %c0_25 = arith.constant 0 : index
    %34 = vector.load %arg10[%c0_24, %c0_25] : memref<128x128xbf16, #tpu.memory_space<vmem>>, vector<128x128xbf16>
    %cst_26 = arith.constant dense<0.000000e+00> : vector<8x128xf32>
    %35 = tpu.matmul %33, %34, %cst_26 {dimension_numbers = #tpu.dot_dimension_numbers<[1], [0], [0], [1], [0, 0, 1, 1], [], []>} : vector<8x128xbf16>, vector<128x128xbf16>, vector<8x128xf32> -> vector<8x128xf32>
    %c0_27 = arith.constant 0 : index
    %c0_28 = arith.constant 0 : index
    %36 = vector.load %arg11[%c0_27, %c0_28] : memref<1x128xf32, #tpu.memory_space<vmem>>, vector<1x128xf32>
    %37 = vector.broadcast %36 : vector<1x128xf32> to vector<8x128xf32>
    %38 = arith.addf %35, %37 : vector<8x128xf32>
    %cst_29 = arith.constant 0.000000e+00 : f32
    %39 = vector.broadcast %cst_29 : f32 to vector<8x128xf32>
    %40 = arith.maximumf %38, %39 : vector<8x128xf32>
    %41 = arith.truncf %40 : vector<8x128xf32> to vector<8x128xbf16>
    %c0_30 = arith.constant 0 : index
    %c0_31 = arith.constant 0 : index
    %42 = vector.load %arg12[%c0_30, %c0_31] : memref<128x128xbf16, #tpu.memory_space<vmem>>, vector<128x128xbf16>
    %cst_32 = arith.constant dense<0.000000e+00> : vector<8x128xf32>
    %43 = tpu.matmul %41, %42, %cst_32 {dimension_numbers = #tpu.dot_dimension_numbers<[1], [0], [0], [1], [0, 0, 1, 1], [], []>} : vector<8x128xbf16>, vector<128x128xbf16>, vector<8x128xf32> -> vector<8x128xf32>
    %c0_33 = arith.constant 0 : index
    %c0_34 = arith.constant 0 : index
    %44 = vector.load %arg13[%c0_33, %c0_34] : memref<1x128xf32, #tpu.memory_space<vmem>>, vector<1x128xf32>
    %45 = vector.broadcast %44 : vector<1x128xf32> to vector<8x128xf32>
    %46 = arith.addf %43, %45 : vector<8x128xf32>
    %47 = tpu.iota {dimensions = array<i32: 1>} : vector<8x128xi32>
    %c10_i32 = arith.constant 10 : i32
    %48 = vector.broadcast %c10_i32 : i32 to vector<8x128xi32>
    %49 = arith.cmpi slt, %47, %48 : vector<8x128xi32>
    %cst_35 = arith.constant -1.000000e+30 : f32
    %50 = vector.broadcast %cst_35 : f32 to vector<8x128xf32>
    %51 = arith.select %49, %46, %50 : vector<8x128xi1>, vector<8x128xf32>
    %cst_36 = arith.constant dense<0xFF800000> : vector<8xf32>
    %52 = vector.multi_reduction <maximumf>, %51, %cst_36 [1] : vector<8x128xf32> to vector<8xf32>
    %53 = vector.shape_cast %52 : vector<8xf32> to vector<8x1xf32>
    %54 = vector.broadcast %53 : vector<8x1xf32> to vector<8x128xf32>
    %55 = arith.subf %51, %54 : vector<8x128xf32>
    %56 = math.exp %55 : vector<8x128xf32>
    %cst_37 = arith.constant dense<0.000000e+00> : vector<8xf32>
    %57 = vector.multi_reduction <add>, %56, %cst_37 [1] : vector<8x128xf32> to vector<8xf32>
    %58 = vector.shape_cast %57 : vector<8xf32> to vector<8x1xf32>
    %59 = math.log %58 : vector<8x1xf32>
    %60 = vector.broadcast %59 : vector<8x1xf32> to vector<8x128xf32>
    %61 = arith.subf %55, %60 : vector<8x128xf32>
    %c0_38 = arith.constant 0 : index
    %c0_39 = arith.constant 0 : index
    %62 = vector.load %arg14[%c0_38, %c0_39] : memref<8x128xf32, #tpu.memory_space<vmem>>, vector<8x128xf32>
    tpu.vector_store %arg14[%c0_38, %c0_39], %61 {strides = array<i32>} : memref<8x128xf32, #tpu.memory_space<vmem>>, vector<8x128xf32>,
    return
  }
  func.func @transform_0(%arg0: i32) -> (i32, i32) {
    %c0_i32 = arith.constant 0 : i32
    %c0_i32_0 = arith.constant 0 : i32
    return %arg0, %c0_i32 : i32, i32
  }
  func.func @transform_1(%arg0: i32) -> (i32, i32) {
    %c0_i32 = arith.constant 0 : i32
    %c0_i32_0 = arith.constant 0 : i32
    %c0_i32_1 = arith.constant 0 : i32
    return %c0_i32, %c0_i32_0 : i32, i32
  }
  func.func @transform_2(%arg0: i32) -> (i32, i32) {
    %c0_i32 = arith.constant 0 : i32
    %c0_i32_0 = arith.constant 0 : i32
    %c0_i32_1 = arith.constant 0 : i32
    return %c0_i32, %c0_i32_0 : i32, i32
  }
  func.func @transform_3(%arg0: i32) -> (i32, i32) {
    %c0_i32 = arith.constant 0 : i32
    %c0_i32_0 = arith.constant 0 : i32
    %c0_i32_1 = arith.constant 0 : i32
    return %c0_i32, %c0_i32_0 : i32, i32
  }
  func.func @transform_4(%arg0: i32) -> (i32, i32) {
    %c0_i32 = arith.constant 0 : i32
    %c0_i32_0 = arith.constant 0 : i32
    %c0_i32_1 = arith.constant 0 : i32
    return %c0_i32, %c0_i32_0 : i32, i32
  }
  func.func @transform_5(%arg0: i32) -> (i32, i32) {
    %c0_i32 = arith.constant 0 : i32
    %c0_i32_0 = arith.constant 0 : i32
    %c0_i32_1 = arith.constant 0 : i32
    return %c0_i32, %c0_i32_0 : i32, i32
  }
  func.func @transform_6(%arg0: i32) -> (i32, i32) {
    %c0_i32 = arith.constant 0 : i32
    %c0_i32_0 = arith.constant 0 : i32
    %c0_i32_1 = arith.constant 0 : i32
    return %c0_i32, %c0_i32_0 : i32, i32
  }
  func.func @transform_7(%arg0: i32) -> (i32, i32) {
    %c0_i32 = arith.constant 0 : i32
    %c0_i32_0 = arith.constant 0 : i32
    %c0_i32_1 = arith.constant 0 : i32
    return %c0_i32, %c0_i32_0 : i32, i32
  }
  func.func @transform_8(%arg0: i32) -> (i32, i32) {
    %c0_i32 = arith.constant 0 : i32
    %c0_i32_0 = arith.constant 0 : i32
    %c0_i32_1 = arith.constant 0 : i32
    return %c0_i32, %c0_i32_0 : i32, i32
  }
  func.func @transform_9(%arg0: i32) -> (i32, i32) {
    %c0_i32 = arith.constant 0 : i32
    %c0_i32_0 = arith.constant 0 : i32
    %c0_i32_1 = arith.constant 0 : i32
    return %c0_i32, %c0_i32_0 : i32, i32
  }
  func.func @transform_10(%arg0: i32) -> (i32, i32) {
    %c0_i32 = arith.constant 0 : i32
    %c0_i32_0 = arith.constant 0 : i32
    %c0_i32_1 = arith.constant 0 : i32
    return %c0_i32, %c0_i32_0 : i32, i32
  }
  func.func @transform_11(%arg0: i32) -> (i32, i32) {
    %c0_i32 = arith.constant 0 : i32
    %c0_i32_0 = arith.constant 0 : i32
    %c0_i32_1 = arith.constant 0 : i32
    return %c0_i32, %c0_i32_0 : i32, i32
  }
  func.func @transform_12(%arg0: i32) -> (i32, i32) {
    %c0_i32 = arith.constant 0 : i32
    %c0_i32_0 = arith.constant 0 : i32
    %c0_i32_1 = arith.constant 0 : i32
    return %c0_i32, %c0_i32_0 : i32, i32
  }
  func.func @transform_13(%arg0: i32) -> (i32, i32) {
    %c0_i32 = arith.constant 0 : i32
    %c0_i32_0 = arith.constant 0 : i32
    return %arg0, %c0_i32 : i32, i32
  }
}

module attributes {stable_mosaic.version = 11 : i64} {
  func.func @_mlp_kernel(%arg0: i32, %arg1: memref<8x784xf32, #tpu.memory_space<vmem>>, %arg2: memref<784x256xbf16, #tpu.memory_space<vmem>>, %arg3: memref<1x256xf32, #tpu.memory_space<vmem>>, %arg4: memref<256x128xbf16, #tpu.memory_space<vmem>>, %arg5: memref<1x128xf32, #tpu.memory_space<vmem>>, %arg6: memref<128x128xbf16, #tpu.memory_space<vmem>>, %arg7: memref<1x128xf32, #tpu.memory_space<vmem>>, %arg8: memref<128x128xbf16, #tpu.memory_space<vmem>>, %arg9: memref<1x128xf32, #tpu.memory_space<vmem>>, %arg10: memref<128x128xbf16, #tpu.memory_space<vmem>>, %arg11: memref<1x128xf32, #tpu.memory_space<vmem>>, %arg12: memref<128x128xbf16, #tpu.memory_space<vmem>>, %arg13: memref<1x128xf32, #tpu.memory_space<vmem>>, %arg14: memref<8x128xf32, #tpu.memory_space<vmem>>) attributes {dimension_semantics = [#tpu.dimension_semantics<parallel>], iteration_bounds = array<i64: 1>, scalar_prefetch = 0 : i64, scratch_operands = 0 : i64, tpu.core_type = #tpu.core_type<tc>, window_params = [{transform_indices = @transform_0, window_bounds = array<i64: 8, 784>}, {pipeline_mode = #tpu.pipeline_mode<synchronous>, transform_indices = @transform_1, window_bounds = array<i64: 784, 256>}, {pipeline_mode = #tpu.pipeline_mode<synchronous>, transform_indices = @transform_2, window_bounds = array<i64: 1, 256>}, {pipeline_mode = #tpu.pipeline_mode<synchronous>, transform_indices = @transform_3, window_bounds = array<i64: 256, 128>}, {pipeline_mode = #tpu.pipeline_mode<synchronous>, transform_indices = @transform_4, window_bounds = array<i64: 1, 128>}, {pipeline_mode = #tpu.pipeline_mode<synchronous>, transform_indices = @transform_5, window_bounds = array<i64: 128, 128>}, {pipeline_mode = #tpu.pipeline_mode<synchronous>, transform_indices = @transform_6, window_bounds = array<i64: 1, 128>}, {pipeline_mode = #tpu.pipeline_mode<synchronous>, transform_indices = @transform_7, window_bounds = array<i64: 128, 128>}, {pipeline_mode = #tpu.pipeline_mode<synchronous>, transform_indices = @transform_8, window_bounds = array<i64: 1, 128>}, {pipeline_mode = #tpu.pipeline_mode<synchronous>, transform_indices = @transform_9, window_bounds = array<i64: 128, 128>}, {pipeline_mode = #tpu.pipeline_mode<synchronous>, transform_indices = @transform_10, window_bounds = array<i64: 1, 128>}, {pipeline_mode = #tpu.pipeline_mode<synchronous>, transform_indices = @transform_11, window_bounds = array<i64: 128, 128>}, {pipeline_mode = #tpu.pipeline_mode<synchronous>, transform_indices = @transform_12, window_bounds = array<i64: 1, 128>}, {transform_indices = @transform_13, window_bounds = array<i64: 8, 128>}]} {
    %c0 = arith.constant 0 : index
    %c0_0 = arith.constant 0 : index
    %0 = vector.load %arg1[%c0, %c0_0] : memref<8x784xf32, #tpu.memory_space<vmem>>, vector<8x784xf32>
    %1 = arith.truncf %0 : vector<8x784xf32> to vector<8x784xbf16>
    %c0_1 = arith.constant 0 : index
    %c0_2 = arith.constant 0 : index
    %2 = vector.load %arg2[%c0_1, %c0_2] : memref<784x256xbf16, #tpu.memory_space<vmem>>, vector<784x256xbf16>
    %cst = arith.constant dense<0.000000e+00> : vector<8x256xf32>
    %3 = tpu.matmul %1, %2, %cst {dimension_numbers = #tpu.dot_dimension_numbers<[1], [0], [0], [1], [0, 0, 1, 1], [], []>} : vector<8x784xbf16>, vector<784x256xbf16>, vector<8x256xf32> -> vector<8x256xf32>
    %c0_3 = arith.constant 0 : index
    %c0_4 = arith.constant 0 : index
    %4 = vector.load %arg3[%c0_3, %c0_4] : memref<1x256xf32, #tpu.memory_space<vmem>>, vector<1x256xf32>
    %5 = vector.broadcast %4 : vector<1x256xf32> to vector<8x256xf32>
    %6 = arith.addf %3, %5 : vector<8x256xf32>
    %cst_5 = arith.constant 0.000000e+00 : f32
    %7 = vector.broadcast %cst_5 : f32 to vector<8x256xf32>
    %8 = arith.maximumf %6, %7 : vector<8x256xf32>
    %9 = arith.truncf %8 : vector<8x256xf32> to vector<8x256xbf16>
    %c0_6 = arith.constant 0 : index
    %c0_7 = arith.constant 0 : index
    %10 = vector.load %arg4[%c0_6, %c0_7] : memref<256x128xbf16, #tpu.memory_space<vmem>>, vector<256x128xbf16>
    %cst_8 = arith.constant dense<0.000000e+00> : vector<8x128xf32>
    %11 = tpu.matmul %9, %10, %cst_8 {dimension_numbers = #tpu.dot_dimension_numbers<[1], [0], [0], [1], [0, 0, 1, 1], [], []>} : vector<8x256xbf16>, vector<256x128xbf16>, vector<8x128xf32> -> vector<8x128xf32>
    %c0_9 = arith.constant 0 : index
    %c0_10 = arith.constant 0 : index
    %12 = vector.load %arg5[%c0_9, %c0_10] : memref<1x128xf32, #tpu.memory_space<vmem>>, vector<1x128xf32>
    %13 = vector.broadcast %12 : vector<1x128xf32> to vector<8x128xf32>
    %14 = arith.addf %11, %13 : vector<8x128xf32>
    %cst_11 = arith.constant 0.000000e+00 : f32
    %15 = vector.broadcast %cst_11 : f32 to vector<8x128xf32>
    %16 = arith.maximumf %14, %15 : vector<8x128xf32>
    %17 = arith.truncf %16 : vector<8x128xf32> to vector<8x128xbf16>
    %c0_12 = arith.constant 0 : index
    %c0_13 = arith.constant 0 : index
    %18 = vector.load %arg6[%c0_12, %c0_13] : memref<128x128xbf16, #tpu.memory_space<vmem>>, vector<128x128xbf16>
    %cst_14 = arith.constant dense<0.000000e+00> : vector<8x128xf32>
    %19 = tpu.matmul %17, %18, %cst_14 {dimension_numbers = #tpu.dot_dimension_numbers<[1], [0], [0], [1], [0, 0, 1, 1], [], []>} : vector<8x128xbf16>, vector<128x128xbf16>, vector<8x128xf32> -> vector<8x128xf32>
    %c0_15 = arith.constant 0 : index
    %c0_16 = arith.constant 0 : index
    %20 = vector.load %arg7[%c0_15, %c0_16] : memref<1x128xf32, #tpu.memory_space<vmem>>, vector<1x128xf32>
    %21 = vector.broadcast %20 : vector<1x128xf32> to vector<8x128xf32>
    %22 = arith.addf %19, %21 : vector<8x128xf32>
    %cst_17 = arith.constant 0.000000e+00 : f32
    %23 = vector.broadcast %cst_17 : f32 to vector<8x128xf32>
    %24 = arith.maximumf %22, %23 : vector<8x128xf32>
    %25 = arith.truncf %24 : vector<8x128xf32> to vector<8x128xbf16>
    %c0_18 = arith.constant 0 : index
    %c0_19 = arith.constant 0 : index
    %26 = vector.load %arg8[%c0_18, %c0_19] : memref<128x128xbf16, #tpu.memory_space<vmem>>, vector<128x128xbf16>
    %cst_20 = arith.constant dense<0.000000e+00> : vector<8x128xf32>
    %27 = tpu.matmul %25, %26, %cst_20 {dimension_numbers = #tpu.dot_dimension_numbers<[1], [0], [0], [1], [0, 0, 1, 1], [], []>} : vector<8x128xbf16>, vector<128x128xbf16>, vector<8x128xf32> -> vector<8x128xf32>
    %c0_21 = arith.constant 0 : index
    %c0_22 = arith.constant 0 : index
    %28 = vector.load %arg9[%c0_21, %c0_22] : memref<1x128xf32, #tpu.memory_space<vmem>>, vector<1x128xf32>
    %29 = vector.broadcast %28 : vector<1x128xf32> to vector<8x128xf32>
    %30 = arith.addf %27, %29 : vector<8x128xf32>
    %cst_23 = arith.constant 0.000000e+00 : f32
    %31 = vector.broadcast %cst_23 : f32 to vector<8x128xf32>
    %32 = arith.maximumf %30, %31 : vector<8x128xf32>
    %33 = arith.truncf %32 : vector<8x128xf32> to vector<8x128xbf16>
    %c0_24 = arith.constant 0 : index
    %c0_25 = arith.constant 0 : index
    %34 = vector.load %arg10[%c0_24, %c0_25] : memref<128x128xbf16, #tpu.memory_space<vmem>>, vector<128x128xbf16>
    %cst_26 = arith.constant dense<0.000000e+00> : vector<8x128xf32>
    %35 = tpu.matmul %33, %34, %cst_26 {dimension_numbers = #tpu.dot_dimension_numbers<[1], [0], [0], [1], [0, 0, 1, 1], [], []>} : vector<8x128xbf16>, vector<128x128xbf16>, vector<8x128xf32> -> vector<8x128xf32>
    %c0_27 = arith.constant 0 : index
    %c0_28 = arith.constant 0 : index
    %36 = vector.load %arg11[%c0_27, %c0_28] : memref<1x128xf32, #tpu.memory_space<vmem>>, vector<1x128xf32>
    %37 = vector.broadcast %36 : vector<1x128xf32> to vector<8x128xf32>
    %38 = arith.addf %35, %37 : vector<8x128xf32>
    %cst_29 = arith.constant 0.000000e+00 : f32
    %39 = vector.broadcast %cst_29 : f32 to vector<8x128xf32>
    %40 = arith.maximumf %38, %39 : vector<8x128xf32>
    %41 = arith.truncf %40 : vector<8x128xf32> to vector<8x128xbf16>
    %c0_30 = arith.constant 0 : index
    %c0_31 = arith.constant 0 : index
    %42 = vector.load %arg12[%c0_30, %c0_31] : memref<128x128xbf16, #tpu.memory_space<vmem>>, vector<128x128xbf16>
    %cst_32 = arith.constant dense<0.000000e+00> : vector<8x128xf32>
    %43 = tpu.matmul %41, %42, %cst_32 {dimension_numbers = #tpu.dot_dimension_numbers<[1], [0], [0], [1], [0, 0, 1, 1], [], []>} : vector<8x128xbf16>, vector<128x128xbf16>, vector<8x128xf32> -> vector<8x128xf32>
    %c0_33 = arith.constant 0 : index
    %c0_34 = arith.constant 0 : index
    %44 = vector.load %arg13[%c0_33, %c0_34] : memref<1x128xf32, #tpu.memory_space<vmem>>, vector<1x128xf32>
    %45 = vector.broadcast %44 : vector<1x128xf32> to vector<8x128xf32>
    %46 = arith.addf %43, %45 : vector<8x128xf32>
    %47 = tpu.iota {dimensions = array<i32: 1>} : vector<8x128xi32>
    %c10_i32 = arith.constant 10 : i32
    %48 = vector.broadcast %c10_i32 : i32 to vector<8x128xi32>
    %49 = arith.cmpi slt, %47, %48 : vector<8x128xi32>
    %cst_35 = arith.constant -1.000000e+30 : f32
    %50 = vector.broadcast %cst_35 : f32 to vector<8x128xf32>
    %51 = arith.select %49, %46, %50 : vector<8x128xi1>, vector<8x128xf32>
    %cst_36 = arith.constant dense<0xFF800000> : vector<8xf32>
    %52 = vector.multi_reduction <maximumf>, %51, %cst_36 [1] : vector<8x128xf32> to vector<8xf32>
    %53 = vector.shape_cast %52 : vector<8xf32> to vector<8x1xf32>
    %54 = vector.broadcast %53 : vector<8x1xf32> to vector<8x128xf32>
    %55 = arith.subf %51, %54 : vector<8x128xf32>
    %56 = math.exp %55 : vector<8x128xf32>
    %cst_37 = arith.constant dense<0.000000e+00> : vector<8xf32>
    %57 = vector.multi_reduction <add>, %56, %cst_37 [1] : vector<8x128xf32> to vector<8xf32>
    %58 = vector.shape_cast %57 : vector<8xf32> to vector<8x1xf32>
    %59 = math.log %58 : vector<8x1xf32>
    %60 = vector.broadcast %59 : vector<8x1xf32> to vector<8x128xf32>
    %61 = arith.subf %55, %60 : vector<8x128xf32>
    %c0_38 = arith.constant 0 : index
    %c0_39 = arith.constant 0 : index
    %62 = vector.load %arg14[%c0_38, %c0_39] : memref<8x128xf32, #tpu.memory_space<vmem>>, vector<8x128xf32>
    tpu.vector_store %arg14[%c0_38, %c0_39], %61 {strides = array<i32>} : memref<8x128xf32, #tpu.memory_space<vmem>>, vector<8x128xf32>,
    return
  }
  func.func @transform_0(%arg0: i32) -> (i32, i32) {
    %c0_i32 = arith.constant 0 : i32
    %c0_i32_0 = arith.constant 0 : i32
    return %arg0, %c0_i32 : i32, i32
  }
  func.func @transform_1(%arg0: i32) -> (i32, i32) {
    %c0_i32 = arith.constant 0 : i32
    %c0_i32_0 = arith.constant 0 : i32
    %c0_i32_1 = arith.constant 0 : i32
    return %c0_i32, %c0_i32_0 : i32, i32
  }
  func.func @transform_2(%arg0: i32) -> (i32, i32) {
    %c0_i32 = arith.constant 0 : i32
    %c0_i32_0 = arith.constant 0 : i32
    %c0_i32_1 = arith.constant 0 : i32
    return %c0_i32, %c0_i32_0 : i32, i32
  }
  func.func @transform_3(%arg0: i32) -> (i32, i32) {
    %c0_i32 = arith.constant 0 : i32
    %c0_i32_0 = arith.constant 0 : i32
    %c0_i32_1 = arith.constant 0 : i32
    return %c0_i32, %c0_i32_0 : i32, i32
  }
  func.func @transform_4(%arg0: i32) -> (i32, i32) {
    %c0_i32 = arith.constant 0 : i32
    %c0_i32_0 = arith.constant 0 : i32
    %c0_i32_1 = arith.constant 0 : i32
    return %c0_i32, %c0_i32_0 : i32, i32
  }
  func.func @transform_5(%arg0: i32) -> (i32, i32) {
    %c0_i32 = arith.constant 0 : i32
    %c0_i32_0 = arith.constant 0 : i32
    %c0_i32_1 = arith.constant 0 : i32
    return %c0_i32, %c0_i32_0 : i32, i32
  }
  func.func @transform_6(%arg0: i32) -> (i32, i32) {
    %c0_i32 = arith.constant 0 : i32
    %c0_i32_0 = arith.constant 0 : i32
    %c0_i32_1 = arith.constant 0 : i32
    return %c0_i32, %c0_i32_0 : i32, i32
  }
  func.func @transform_7(%arg0: i32) -> (i32, i32) {
    %c0_i32 = arith.constant 0 : i32
    %c0_i32_0 = arith.constant 0 : i32
    %c0_i32_1 = arith.constant 0 : i32
    return %c0_i32, %c0_i32_0 : i32, i32
  }
  func.func @transform_8(%arg0: i32) -> (i32, i32) {
    %c0_i32 = arith.constant 0 : i32
    %c0_i32_0 = arith.constant 0 : i32
    %c0_i32_1 = arith.constant 0 : i32
    return %c0_i32, %c0_i32_0 : i32, i32
  }
  func.func @transform_9(%arg0: i32) -> (i32, i32) {
    %c0_i32 = arith.constant 0 : i32
    %c0_i32_0 = arith.constant 0 : i32
    %c0_i32_1 = arith.constant 0 : i32
    return %c0_i32, %c0_i32_0 : i32, i32
  }
  func.func @transform_10(%arg0: i32) -> (i32, i32) {
    %c0_i32 = arith.constant 0 : i32
    %c0_i32_0 = arith.constant 0 : i32
    %c0_i32_1 = arith.constant 0 : i32
    return %c0_i32, %c0_i32_0 : i32, i32
  }
  func.func @transform_11(%arg0: i32) -> (i32, i32) {
    %c0_i32 = arith.constant 0 : i32
    %c0_i32_0 = arith.constant 0 : i32
    %c0_i32_1 = arith.constant 0 : i32
    return %c0_i32, %c0_i32_0 : i32, i32
  }
  func.func @transform_12(%arg0: i32) -> (i32, i32) {
    %c0_i32 = arith.constant 0 : i32
    %c0_i32_0 = arith.constant 0 : i32
    %c0_i32_1 = arith.constant 0 : i32
    return %c0_i32, %c0_i32_0 : i32, i32
  }
  func.func @transform_13(%arg0: i32) -> (i32, i32) {
    %c0_i32 = arith.constant 0 : i32
    %c0_i32_0 = arith.constant 0 : i32
    return %arg0, %c0_i32 : i32, i32
  }
}

</mosaic_0001>

<llo_original>
// kernel: tpu_custom_call.1
$region0: #{tpu_custom_call.1}
  #allocation0 [shape = 'u32[]', space=smem, size = 0x4, offset = 0x4, fixed_abs, tag = 'smem constant byte address 0x4 - core index']
  #allocation1 [shape = 'u32[144,128]{1,0:T(1,128)}', space=vmem, size = 0x12000, scoped, tag = 'internal scratch']
  %s0 = inlined_call_operand.hbm [shape: f32[8,784], index: 0, kind: input, shape index: {}]
  %s1 = inlined_call_operand.hbm [shape: bf16[784,256], index: 1, kind: input, shape index: {}]
  %s2 = inlined_call_operand.vmem [shape: f32[1,256], index: 2, kind: input, shape index: {}]
  %s3 = inlined_call_operand.hbm [shape: bf16[256,128], index: 3, kind: input, shape index: {}]
  %s4 = inlined_call_operand.vmem [shape: f32[1,128], index: 4, kind: input, shape index: {}]
  %s5 = inlined_call_operand.hbm [shape: bf16[128,128], index: 5, kind: input, shape index: {}]
  %s6 = inlined_call_operand.vmem [shape: f32[1,128], index: 6, kind: input, shape index: {}]
  %s7 = inlined_call_operand.hbm [shape: bf16[128,128], index: 7, kind: input, shape index: {}]
  %s8 = inlined_call_operand.vmem [shape: f32[1,128], index: 8, kind: input, shape index: {}]
  %s9 = inlined_call_operand.hbm [shape: bf16[128,128], index: 9, kind: input, shape index: {}]
  %s10 = inlined_call_operand.vmem [shape: f32[1,128], index: 10, kind: input, shape index: {}]
  %s11 = inlined_call_operand.hbm [shape: bf16[128,128], index: 11, kind: input, shape index: {}]
  %s12 = inlined_call_operand.vmem [shape: f32[1,128], index: 12, kind: input, shape index: {}]
  %s13 = inlined_call_operand.hbm [shape: f32[8,128], index: 13, kind: output, shape index: {}]
  %s14 = sld [smem:[#allocation0]]
  $region90: #{tpu_custom_call.1} parent=0
    _
  %s16 = ssub.s32 1, %s14
  %s17 = scalar_select 0, %s16, %s14
  $region1: #{tpu_custom_call.1} parent=0
    #allocation2 [shape = 'u8[28672]{0}', space=vmem, size = 0x7000, scoped, tag = 'input window, operand 0, single buffered']
    #allocation3 [shape = 's32[1]{0}', space=sflag, size = 0x4, scoped, tag = 'scoped memory for tpu_custom_call.1']
    #allocation4 [shape = 's32[1]{0}', space=sflag, size = 0x4, scoped, tag = 'scoped memory for tpu_custom_call.1']
    #allocation5 [shape = 'u8[401408]{0}', space=vmem, size = 0x62000, scoped, tag = 'input window, operand 1, single buffered']
    #allocation6 [shape = 's32[1]{0}', space=sflag, size = 0x4, scoped, tag = 'scoped memory for tpu_custom_call.1']
    #allocation7 [shape = 'u8[65536]{0}', space=vmem, size = 0x10000, scoped, tag = 'input window, operand 3, single buffered']
    #allocation8 [shape = 'u8[32768]{0}', space=vmem, size = 0x8000, scoped, tag = 'input window, operand 5, single buffered']
    #allocation9 [shape = 's32[1]{0}', space=sflag, size = 0x4, scoped, tag = 'scoped memory for tpu_custom_call.1']
    #allocation10 [shape = 'u8[32768]{0}', space=vmem, size = 0x8000, scoped, tag = 'input window, operand 7, single buffered']
    #allocation11 [shape = 'u8[32768]{0}', space=vmem, size = 0x8000, scoped, tag = 'input window, operand 9, single buffered']
    #allocation12 [shape = 's32[1]{0}', space=sflag, size = 0x4, scoped, tag = 'scoped memory for tpu_custom_call.1']
    #allocation13 [shape = 'u8[32768]{0}', space=vmem, size = 0x8000, scoped, tag = 'input window, operand 11, single buffered']
    #allocation14 [shape = 'u8[4096]{0}', space=vmem, size = 0x1000, scoped, tag = 'output window, operand 0, single buffered']
    %18 = vsyncpa [#allocation3], 0
    %19 = vsyncpa [#allocation6], 0
    %20 = vsyncpa [#allocation9], 0
    %21 = vsyncpa [#allocation12], 0
    %22 = vsyncpa [#allocation4], 0
    // Predicated region
    $region2: #{tpu_custom_call.1} parent=1 // pred_check
      _
    $region3: #{tpu_custom_call.1} parent=1 // pred_check_branch
      %24 = sbr.rel (0) target = $region5
    $region4: #{tpu_custom_call.1} parent=1 // pred_region
      %s26 = ssub.s32 896, 896
      %27 = vsyncadd [#allocation3], %s26
      %s29 = sshll.u32 [#allocation2], 4
      %s30 = int_to_ptr.vmem [resolvable:$true] %s29
      %32 = dma.hbm_to_vmem [thread:$0]  %s0, 896, %s30, [#allocation3]
    $region5: #{tpu_custom_call.1} parent=1 // pred_fallthru
      _
    // Predicated region
    $region6: #{tpu_custom_call.1} parent=1 // pred_check
      _
    $region7: #{tpu_custom_call.1} parent=1 // pred_check_branch
      %34 = sbr.rel (0) target = $region9
    $region8: #{tpu_custom_call.1} parent=1 // pred_region
      %s36 = ssub.s32 12544, 12544
      %37 = vsyncadd [#allocation6], %s36
      %s38 = sshll.u32 [#allocation5], 4
      %s39 = int_to_ptr.vmem [resolvable:$true] %s38
      %44 = dma.hbm_to_vmem [thread:$0]  %s1, 12544, %s39, [#allocation6], 128, 128, 8
    $region9: #{tpu_custom_call.1} parent=1 // pred_fallthru
      _
    // Predicated region
    $region10: #{tpu_custom_call.1} parent=1 // pred_check
      _
    $region11: #{tpu_custom_call.1} parent=1 // pred_check_branch
      %46 = sbr.rel (0) target = $region13
    $region12: #{tpu_custom_call.1} parent=1 // pred_region
      _
    $region13: #{tpu_custom_call.1} parent=1 // pred_fallthru
      _
    // Predicated region
    $region14: #{tpu_custom_call.1} parent=1 // pred_check
      _
    $region15: #{tpu_custom_call.1} parent=1 // pred_check_branch
      %48 = sbr.rel (0) target = $region17
    $region16: #{tpu_custom_call.1} parent=1 // pred_region
      %s50 = ssub.s32 2048, 2048
      %51 = vsyncadd [#allocation6], %s50
      %s52 = sshll.u32 [#allocation7], 4
      %s53 = int_to_ptr.vmem [resolvable:$true] %s52
      %58 = dma.hbm_to_vmem [thread:$0]  %s3, 2048, %s53, [#allocation6], 64, 64, 4
    $region17: #{tpu_custom_call.1} parent=1 // pred_fallthru
      _
    // Predicated region
    $region18: #{tpu_custom_call.1} parent=1 // pred_check
      _
    $region19: #{tpu_custom_call.1} parent=1 // pred_check_branch
      %60 = sbr.rel (0) target = $region21
    $region20: #{tpu_custom_call.1} parent=1 // pred_region
      _
    $region21: #{tpu_custom_call.1} parent=1 // pred_fallthru
      _
    // Predicated region
    $region22: #{tpu_custom_call.1} parent=1 // pred_check
      _
    $region23: #{tpu_custom_call.1} parent=1 // pred_check_branch
      %62 = sbr.rel (0) target = $region25
    $region24: #{tpu_custom_call.1} parent=1 // pred_region
      %s64 = ssub.s32 1024, 1024
      %65 = vsyncadd [#allocation9], %s64
      %s66 = sshll.u32 [#allocation8], 4
      %s67 = int_to_ptr.vmem [resolvable:$true] %s66
      %72 = dma.hbm_to_vmem [thread:$0]  %s5, 1024, %s67, [#allocation9], 64, 64, 4
    $region25: #{tpu_custom_call.1} parent=1 // pred_fallthru
      _
    // Predicated region
    $region26: #{tpu_custom_call.1} parent=1 // pred_check
      _
    $region27: #{tpu_custom_call.1} parent=1 // pred_check_branch
      %74 = sbr.rel (0) target = $region29
    $region28: #{tpu_custom_call.1} parent=1 // pred_region
      _
    $region29: #{tpu_custom_call.1} parent=1 // pred_fallthru
      _
    // Predicated region
    $region30: #{tpu_custom_call.1} parent=1 // pred_check
      _
    $region31: #{tpu_custom_call.1} parent=1 // pred_check_branch
      %76 = sbr.rel (0) target = $region33
    $region32: #{tpu_custom_call.1} parent=1 // pred_region
      %s78 = ssub.s32 1024, 1024
      %79 = vsyncadd [#allocation9], %s78
      %s80 = sshll.u32 [#allocation10], 4
      %s81 = int_to_ptr.vmem [resolvable:$true] %s80
      %86 = dma.hbm_to_vmem [thread:$0]  %s7, 1024, %s81, [#allocation9], 64, 64, 4
    $region33: #{tpu_custom_call.1} parent=1 // pred_fallthru
      _
    // Predicated region
    $region34: #{tpu_custom_call.1} parent=1 // pred_check
      _
    $region35: #{tpu_custom_call.1} parent=1 // pred_check_branch
      %88 = sbr.rel (0) target = $region37
    $region36: #{tpu_custom_call.1} parent=1 // pred_region
      _
    $region37: #{tpu_custom_call.1} parent=1 // pred_fallthru
      _
    // Predicated region
    $region38: #{tpu_custom_call.1} parent=1 // pred_check
      _
    $region39: #{tpu_custom_call.1} parent=1 // pred_check_branch
      %90 = sbr.rel (0) target = $region41
    $region40: #{tpu_custom_call.1} parent=1 // pred_region
      %s92 = ssub.s32 1024, 1024
      %93 = vsyncadd [#allocation12], %s92
      %s94 = sshll.u32 [#allocation11], 4
      %s95 = int_to_ptr.vmem [resolvable:$true] %s94
      %100 = dma.hbm_to_vmem [thread:$0]  %s9, 1024, %s95, [#allocation12], 64, 64, 4
    $region41: #{tpu_custom_call.1} parent=1 // pred_fallthru
      _
    // Predicated region
    $region42: #{tpu_custom_call.1} parent=1 // pred_check
      _
    $region43: #{tpu_custom_call.1} parent=1 // pred_check_branch
      %102 = sbr.rel (0) target = $region45
    $region44: #{tpu_custom_call.1} parent=1 // pred_region
      _
    $region45: #{tpu_custom_call.1} parent=1 // pred_fallthru
      _
    // Predicated region
    $region46: #{tpu_custom_call.1} parent=1 // pred_check
      _
    $region47: #{tpu_custom_call.1} parent=1 // pred_check_branch
      %104 = sbr.rel (0) target = $region49
    $region48: #{tpu_custom_call.1} parent=1 // pred_region
      %s106 = ssub.s32 1024, 1024
      %107 = vsyncadd [#allocation12], %s106
      %s108 = sshll.u32 [#allocation13], 4
      %s109 = int_to_ptr.vmem [resolvable:$true] %s108
      %114 = dma.hbm_to_vmem [thread:$0]  %s11, 1024, %s109, [#allocation12], 64, 64, 4
    $region49: #{tpu_custom_call.1} parent=1 // pred_fallthru
      _
    // Predicated region
    $region50: #{tpu_custom_call.1} parent=1 // pred_check
      _
    $region51: #{tpu_custom_call.1} parent=1 // pred_check_branch
      %116 = sbr.rel (0) target = $region53
    $region52: #{tpu_custom_call.1} parent=1 // pred_region
      _
    $region53: #{tpu_custom_call.1} parent=1 // pred_fallthru
      _
    // Predicated region
    $region54: #{tpu_custom_call.1} parent=1 // pred_check
      _
    $region55: #{tpu_custom_call.1} parent=1 // pred_check_branch
      %118 = sbr.rel (0) target = $region57
    $region56: #{tpu_custom_call.1} parent=1 // pred_region
      %119 = dma.done [#allocation3], 896
    $region57: #{tpu_custom_call.1} parent=1 // pred_fallthru
      _
    // Predicated region
    $region58: #{tpu_custom_call.1} parent=1 // pred_check
      _
    $region59: #{tpu_custom_call.1} parent=1 // pred_check_branch
      %121 = sbr.rel (0) target = $region61
    $region60: #{tpu_custom_call.1} parent=1 // pred_region
      %122 = dma.done [#allocation6], 12544
    $region61: #{tpu_custom_call.1} parent=1 // pred_fallthru
      _
    // Predicated region
    $region62: #{tpu_custom_call.1} parent=1 // pred_check
      _
    $region63: #{tpu_custom_call.1} parent=1 // pred_check_branch
      %124 = sbr.rel (0) target = $region65
    $region64: #{tpu_custom_call.1} parent=1 // pred_region
      %125 = dma.done [#allocation6], 2048
    $region65: #{tpu_custom_call.1} parent=1 // pred_fallthru
      _
    // Predicated region
    $region66: #{tpu_custom_call.1} parent=1 // pred_check
      _
    $region67: #{tpu_custom_call.1} parent=1 // pred_check_branch
      %127 = sbr.rel (0) target = $region69
    $region68: #{tpu_custom_call.1} parent=1 // pred_region
      %128 = dma.done [#allocation9], 1024
    $region69: #{tpu_custom_call.1} parent=1 // pred_fallthru
      _
    // Predicated region
    $region70: #{tpu_custom_call.1} parent=1 // pred_check
      _
    $region71: #{tpu_custom_call.1} parent=1 // pred_check_branch
      %130 = sbr.rel (0) target = $region73
    $region72: #{tpu_custom_call.1} parent=1 // pred_region
      %131 = dma.done [#allocation9], 1024
    $region73: #{tpu_custom_call.1} parent=1 // pred_fallthru
      _
    // Predicated region
    $region74: #{tpu_custom_call.1} parent=1 // pred_check
      _
    $region75: #{tpu_custom_call.1} parent=1 // pred_check_branch
      %133 = sbr.rel (0) target = $region77
    $region76: #{tpu_custom_call.1} parent=1 // pred_region
      %134 = dma.done [#allocation12], 1024
    $region77: #{tpu_custom_call.1} parent=1 // pred_fallthru
      _
    // Predicated region
    $region78: #{tpu_custom_call.1} parent=1 // pred_check
      _
    $region79: #{tpu_custom_call.1} parent=1 // pred_check_branch
      %136 = sbr.rel (0) target = $region81
    $region80: #{tpu_custom_call.1} parent=1 // pred_region
      %137 = dma.done [#allocation12], 1024
    $region81: #{tpu_custom_call.1} parent=1 // pred_fallthru
      _
    %v139 = vld [vmem:[#allocation2] sm:$0xff]
    %v140 = vld [vmem:[#allocation2 + $0x8] sm:$0xff]
    %v141 = vld [vmem:[#allocation2 + $0x10] sm:$0xff]
    %v142 = vld [vmem:[#allocation2 + $0x18] sm:$0xff]
    %v143 = vld [vmem:[#allocation2 + $0x20] sm:$0xff]
    %v144 = vld [vmem:[#allocation2 + $0x28] sm:$0xff]
    %v145 = vld [vmem:[#allocation2 + $0x30] sm:$0xff]
    %v146 = vpack.c.bf16 %v139, %v139
    %v147 = vpack.c.bf16 %v140, %v140
    %v148 = vpack.c.bf16 %v141, %v141
    %v149 = vpack.c.bf16 %v142, %v142
    %v150 = vpack.c.bf16 %v143, %v143
    %v151 = vpack.c.bf16 %v144, %v144
    %v152 = vpack.c.bf16 %v145, %v145
    %v153 = vld [vmem:[#allocation5] sm:$0xff]
    %v154 = vld [vmem:[#allocation5 + $0x8] sm:$0xff]
    %v155 = vld [vmem:[#allocation5 + $0x10] sm:$0xff]
    %v156 = vld [vmem:[#allocation5 + $0x18] sm:$0xff]
    %v157 = vld [vmem:[#allocation5 + $0x20] sm:$0xff]
    %v158 = vld [vmem:[#allocation5 + $0x28] sm:$0xff]
    %v159 = vld [vmem:[#allocation5 + $0x30] sm:$0xff]
    %v160 = vld [vmem:[#allocation5 + $0x38] sm:$0xff]
    %v161 = vld [vmem:[#allocation5 + $0x40] sm:$0xff]
    %v162 = vld [vmem:[#allocation5 + $0x48] sm:$0xff]
    %v163 = vld [vmem:[#allocation5 + $0x50] sm:$0xff]
    %v164 = vld [vmem:[#allocation5 + $0x58] sm:$0xff]
    %v165 = vld [vmem:[#allocation5 + $0x60] sm:$0xff]
    %v166 = vld [vmem:[#allocation5 + $0x68] sm:$0xff]
    %v167 = vld [vmem:[#allocation5 + $0x70] sm:$0xff]
    %v168 = vld [vmem:[#allocation5 + $0x78] sm:$0xff]
    %v169 = vld [vmem:[#allocation5 + $0x80] sm:$0xff]
    %v170 = vld [vmem:[#allocation5 + $0x88] sm:$0xff]
    %v171 = vld [vmem:[#allocation5 + $0x90] sm:$0xff]
    %v172 = vld [vmem:[#allocation5 + $0x98] sm:$0xff]
    %v173 = vld [vmem:[#allocation5 + $0xa0] sm:$0xff]
    %v174 = vld [vmem:[#allocation5 + $0xa8] sm:$0xff]
    %v175 = vld [vmem:[#allocation5 + $0xb0] sm:$0xff]
    %v176 = vld [vmem:[#allocation5 + $0xb8] sm:$0xff]
    %v177 = vld [vmem:[#allocation5 + $0xc0] sm:$0xff]
    %v178 = vld [vmem:[#allocation5 + $0xc8] sm:$0xff]
    %v179 = vld [vmem:[#allocation5 + $0xd0] sm:$0xff]
    %v180 = vld [vmem:[#allocation5 + $0xd8] sm:$0xff]
    %v181 = vld [vmem:[#allocation5 + $0xe0] sm:$0xff]
    %v182 = vld [vmem:[#allocation5 + $0xe8] sm:$0xff]
    %v183 = vld [vmem:[#allocation5 + $0xf0] sm:$0xff]
    %v184 = vld [vmem:[#allocation5 + $0xf8] sm:$0xff]
    %v185 = vld [vmem:[#allocation5 + $0x100] sm:$0xff]
    %v186 = vld [vmem:[#allocation5 + $0x108] sm:$0xff]
    %v187 = vld [vmem:[#allocation5 + $0x110] sm:$0xff]
    %v188 = vld [vmem:[#allocation5 + $0x118] sm:$0xff]
    %v189 = vld [vmem:[#allocation5 + $0x120] sm:$0xff]
    %v190 = vld [vmem:[#allocation5 + $0x128] sm:$0xff]
    %v191 = vld [vmem:[#allocation5 + $0x130] sm:$0xff]
    %v192 = vld [vmem:[#allocation5 + $0x138] sm:$0xff]
    %v193 = vld [vmem:[#allocation5 + $0x140] sm:$0xff]
    %v194 = vld [vmem:[#allocation5 + $0x148] sm:$0xff]
    %v195 = vld [vmem:[#allocation5 + $0x150] sm:$0xff]
    %v196 = vld [vmem:[#allocation5 + $0x158] sm:$0xff]
    %v197 = vld [vmem:[#allocation5 + $0x160] sm:$0xff]
    %v198 = vld [vmem:[#allocation5 + $0x168] sm:$0xff]
    %v199 = vld [vmem:[#allocation5 + $0x170] sm:$0xff]
    %v200 = vld [vmem:[#allocation5 + $0x178] sm:$0xff]
    %v201 = vld [vmem:[#allocation5 + $0x180] sm:$0xff]
    %v202 = vld [vmem:[#allocation5 + $0x188] sm:$0xff]
    %v203 = vld [vmem:[#allocation5 + $0x190] sm:$0xff]
    %v204 = vld [vmem:[#allocation5 + $0x198] sm:$0xff]
    %v205 = vld [vmem:[#allocation5 + $0x1a0] sm:$0xff]
    %v206 = vld [vmem:[#allocation5 + $0x1a8] sm:$0xff]
    %v207 = vld [vmem:[#allocation5 + $0x1b0] sm:$0xff]
    %v208 = vld [vmem:[#allocation5 + $0x1b8] sm:$0xff]
    %v209 = vld [vmem:[#allocation5 + $0x1c0] sm:$0xff]
    %v210 = vld [vmem:[#allocation5 + $0x1c8] sm:$0xff]
    %v211 = vld [vmem:[#allocation5 + $0x1d0] sm:$0xff]
    %v212 = vld [vmem:[#allocation5 + $0x1d8] sm:$0xff]
    %v213 = vld [vmem:[#allocation5 + $0x1e0] sm:$0xff]
    %v214 = vld [vmem:[#allocation5 + $0x1e8] sm:$0xff]
    %v215 = vld [vmem:[#allocation5 + $0x1f0] sm:$0xff]
    %v216 = vld [vmem:[#allocation5 + $0x1f8] sm:$0xff]
    %v217 = vld [vmem:[#allocation5 + $0x200] sm:$0xff]
    %v218 = vld [vmem:[#allocation5 + $0x208] sm:$0xff]
    %v219 = vld [vmem:[#allocation5 + $0x210] sm:$0xff]
    %v220 = vld [vmem:[#allocation5 + $0x218] sm:$0xff]
    %v221 = vld [vmem:[#allocation5 + $0x220] sm:$0xff]
    %v222 = vld [vmem:[#allocation5 + $0x228] sm:$0xff]
    %v223 = vld [vmem:[#allocation5 + $0x230] sm:$0xff]
    %v224 = vld [vmem:[#allocation5 + $0x238] sm:$0xff]
    %v225 = vld [vmem:[#allocation5 + $0x240] sm:$0xff]
    %v226 = vld [vmem:[#allocation5 + $0x248] sm:$0xff]
    %v227 = vld [vmem:[#allocation5 + $0x250] sm:$0xff]
    %v228 = vld [vmem:[#allocation5 + $0x258] sm:$0xff]
    %v229 = vld [vmem:[#allocation5 + $0x260] sm:$0xff]
    %v230 = vld [vmem:[#allocation5 + $0x268] sm:$0xff]
    %v231 = vld [vmem:[#allocation5 + $0x270] sm:$0xff]
    %v232 = vld [vmem:[#allocation5 + $0x278] sm:$0xff]
    %v233 = vld [vmem:[#allocation5 + $0x280] sm:$0xff]
    %v234 = vld [vmem:[#allocation5 + $0x288] sm:$0xff]
    %v235 = vld [vmem:[#allocation5 + $0x290] sm:$0xff]
    %v236 = vld [vmem:[#allocation5 + $0x298] sm:$0xff]
    %v237 = vld [vmem:[#allocation5 + $0x2a0] sm:$0xff]
    %v238 = vld [vmem:[#allocation5 + $0x2a8] sm:$0xff]
    %v239 = vld [vmem:[#allocation5 + $0x2b0] sm:$0xff]
    %v240 = vld [vmem:[#allocation5 + $0x2b8] sm:$0xff]
    %v241 = vld [vmem:[#allocation5 + $0x2c0] sm:$0xff]
    %v242 = vld [vmem:[#allocation5 + $0x2c8] sm:$0xff]
    %v243 = vld [vmem:[#allocation5 + $0x2d0] sm:$0xff]
    %v244 = vld [vmem:[#allocation5 + $0x2d8] sm:$0xff]
    %v245 = vld [vmem:[#allocation5 + $0x2e0] sm:$0xff]
    %v246 = vld [vmem:[#allocation5 + $0x2e8] sm:$0xff]
    %v247 = vld [vmem:[#allocation5 + $0x2f0] sm:$0xff]
    %v248 = vld [vmem:[#allocation5 + $0x2f8] sm:$0xff]
    %v249 = vld [vmem:[#allocation5 + $0x300] sm:$0xff]
    %v250 = vld [vmem:[#allocation5 + $0x308] sm:$0xff]
    %v251 = vld [vmem:[%s2] sm:$0x3]
    %v253 = vlaneseq
    %v254 = vshrl.u32 %v253, 7
    %v255 = vsub.s32 0, %v254
    %v256 = vrot.slane %v251, %v255
    %v257 = vlaneseq
    %v258 = vshrl.u32 %v257, 7
    %v259 = vsub.s32 1, %v258
    %v260 = vrot.slane %v251, %v259
    %v361 = vunpack.c.l.b16 %v153
    %v362 = vunpack.c.h.b16 %v153
    %v363 = vunpack.c.l.b16 %v154
    %v364 = vunpack.c.h.b16 %v154
    %v365 = vunpack.c.l.b16 %v155
    %v366 = vunpack.c.h.b16 %v155
    %v367 = vunpack.c.l.b16 %v156
    %v368 = vunpack.c.h.b16 %v156
    %v369 = vunpack.c.l.b16 %v157
    %v370 = vunpack.c.h.b16 %v157
    %v371 = vunpack.c.l.b16 %v158
    %v372 = vunpack.c.h.b16 %v158
    %v373 = vunpack.c.l.b16 %v159
    %v374 = vunpack.c.h.b16 %v159
    %v375 = vunpack.c.l.b16 %v160
    %v376 = vunpack.c.h.b16 %v160
    %v377 = vunpack.c.l.b16 %v161
    %v378 = vunpack.c.h.b16 %v161
    %v379 = vunpack.c.l.b16 %v162
    %v380 = vunpack.c.h.b16 %v162
    %v381 = vunpack.c.l.b16 %v163
    %v382 = vunpack.c.h.b16 %v163
    %v383 = vunpack.c.l.b16 %v164
    %v384 = vunpack.c.h.b16 %v164
    %v385 = vunpack.c.l.b16 %v165
    %v386 = vunpack.c.h.b16 %v165
    %v387 = vunpack.c.l.b16 %v166
    %v388 = vunpack.c.h.b16 %v166
    %v389 = vunpack.c.l.b16 %v167
    %v390 = vunpack.c.h.b16 %v167
    %v391 = vunpack.c.l.b16 %v168
    %v392 = vunpack.c.h.b16 %v168
    %v393 = vunpack.c.l.b16 %v169
    %v394 = vunpack.c.h.b16 %v169
    %v395 = vunpack.c.l.b16 %v170
    %v396 = vunpack.c.h.b16 %v170
    %v397 = vunpack.c.l.b16 %v171
    %v398 = vunpack.c.h.b16 %v171
    %v399 = vunpack.c.l.b16 %v172
    %v400 = vunpack.c.h.b16 %v172
    %v401 = vunpack.c.l.b16 %v173
    %v402 = vunpack.c.h.b16 %v173
    %v403 = vunpack.c.l.b16 %v174
    %v404 = vunpack.c.h.b16 %v174
    %v405 = vunpack.c.l.b16 %v175
    %v406 = vunpack.c.h.b16 %v175
    %v407 = vunpack.c.l.b16 %v176
    %v408 = vunpack.c.h.b16 %v176
    %v409 = vunpack.c.l.b16 %v177
    %v410 = vunpack.c.h.b16 %v177
    %v411 = vunpack.c.l.b16 %v178
    %v412 = vunpack.c.h.b16 %v178
    %v413 = vunpack.c.l.b16 %v179
    %v414 = vunpack.c.h.b16 %v179
    %v415 = vunpack.c.l.b16 %v180
    %v416 = vunpack.c.h.b16 %v180
    %v417 = vunpack.c.l.b16 %v181
    %v418 = vunpack.c.h.b16 %v181
    %v419 = vunpack.c.l.b16 %v182
    %v420 = vunpack.c.h.b16 %v182
    %v421 = vunpack.c.l.b16 %v183
    %v422 = vunpack.c.h.b16 %v183
    %v423 = vunpack.c.l.b16 %v184
    %v424 = vunpack.c.h.b16 %v184
    %v425 = vunpack.c.l.b16 %v185
    %v426 = vunpack.c.h.b16 %v185
    %v427 = vunpack.c.l.b16 %v186
    %v428 = vunpack.c.h.b16 %v186
    %v429 = vunpack.c.l.b16 %v187
    %v430 = vunpack.c.h.b16 %v187
    %v431 = vunpack.c.l.b16 %v188
    %v432 = vunpack.c.h.b16 %v188
    %v433 = vunpack.c.l.b16 %v189
    %v434 = vunpack.c.h.b16 %v189
    %v435 = vunpack.c.l.b16 %v190
    %v436 = vunpack.c.h.b16 %v190
    %v437 = vunpack.c.l.b16 %v191
    %v438 = vunpack.c.h.b16 %v191
    %v439 = vunpack.c.l.b16 %v192
    %v440 = vunpack.c.h.b16 %v192
    %v441 = vunpack.c.l.b16 %v193
    %v442 = vunpack.c.h.b16 %v193
    %v443 = vunpack.c.l.b16 %v194
    %v444 = vunpack.c.h.b16 %v194
    %v445 = vunpack.c.l.b16 %v195
    %v446 = vunpack.c.h.b16 %v195
    %v447 = vunpack.c.l.b16 %v196
    %v448 = vunpack.c.h.b16 %v196
    %v449 = vunpack.c.l.b16 %v197
    %v450 = vunpack.c.h.b16 %v197
    %v451 = vunpack.c.l.b16 %v198
    %v452 = vunpack.c.h.b16 %v198
    %v453 = vunpack.c.l.b16 %v199
    %v454 = vunpack.c.h.b16 %v199
    %v455 = vunpack.c.l.b16 %v200
    %v456 = vunpack.c.h.b16 %v200
    %v457 = vunpack.c.l.b16 %v201
    %v458 = vunpack.c.h.b16 %v201
    %v459 = vunpack.c.l.b16 %v202
    %v460 = vunpack.c.h.b16 %v202
    %v461 = vunpack.c.l.b16 %v203
    %v462 = vunpack.c.h.b16 %v203
    %v463 = vunpack.c.l.b16 %v204
    %v464 = vunpack.c.h.b16 %v204
    %v465 = vunpack.c.l.b16 %v205
    %v466 = vunpack.c.h.b16 %v205
    %v467 = vunpack.c.l.b16 %v206
    %v468 = vunpack.c.h.b16 %v206
    %v469 = vunpack.c.l.b16 %v207
    %v470 = vunpack.c.h.b16 %v207
    %v471 = vunpack.c.l.b16 %v208
    %v472 = vunpack.c.h.b16 %v208
    %v473 = vunpack.c.l.b16 %v209
    %v474 = vunpack.c.h.b16 %v209
    %v475 = vunpack.c.l.b16 %v210
    %v476 = vunpack.c.h.b16 %v210
    %v477 = vunpack.c.l.b16 %v211
    %v478 = vunpack.c.h.b16 %v211
    %v479 = vunpack.c.l.b16 %v212
    %v480 = vunpack.c.h.b16 %v212
    %v481 = vunpack.c.l.b16 %v213
    %v482 = vunpack.c.h.b16 %v213
    %v483 = vunpack.c.l.b16 %v214
    %v484 = vunpack.c.h.b16 %v214
    %v485 = vunpack.c.l.b16 %v215
    %v486 = vunpack.c.h.b16 %v215
    %v487 = vunpack.c.l.b16 %v216
    %v488 = vunpack.c.h.b16 %v216
    %v489 = vunpack.c.l.b16 %v217
    %v490 = vunpack.c.h.b16 %v217
    %v491 = vunpack.c.l.b16 %v218
    %v492 = vunpack.c.h.b16 %v218
    %v493 = vunpack.c.l.b16 %v219
    %v494 = vunpack.c.h.b16 %v219
    %v495 = vunpack.c.l.b16 %v220
    %v496 = vunpack.c.h.b16 %v220
    %v497 = vunpack.c.l.b16 %v221
    %v498 = vunpack.c.h.b16 %v221
    %v499 = vunpack.c.l.b16 %v222
    %v500 = vunpack.c.h.b16 %v222
    %v501 = vunpack.c.l.b16 %v223
    %v502 = vunpack.c.h.b16 %v223
    %v503 = vunpack.c.l.b16 %v224
    %v504 = vunpack.c.h.b16 %v224
    %v505 = vunpack.c.l.b16 %v225
    %v506 = vunpack.c.h.b16 %v225
    %v507 = vunpack.c.l.b16 %v226
    %v508 = vunpack.c.h.b16 %v226
    %v509 = vunpack.c.l.b16 %v227
    %v510 = vunpack.c.h.b16 %v227
    %v511 = vunpack.c.l.b16 %v228
    %v512 = vunpack.c.h.b16 %v228
    %v513 = vunpack.c.l.b16 %v229
    %v514 = vunpack.c.h.b16 %v229
    %v515 = vunpack.c.l.b16 %v230
    %v516 = vunpack.c.h.b16 %v230
    %v517 = vunpack.c.l.b16 %v231
    %v518 = vunpack.c.h.b16 %v231
    %v519 = vunpack.c.l.b16 %v232
    %v520 = vunpack.c.h.b16 %v232
    %v521 = vunpack.c.l.b16 %v233
    %v522 = vunpack.c.h.b16 %v233
    %v523 = vunpack.c.l.b16 %v234
    %v524 = vunpack.c.h.b16 %v234
    %v525 = vunpack.c.l.b16 %v235
    %v526 = vunpack.c.h.b16 %v235
    %v527 = vunpack.c.l.b16 %v236
    %v528 = vunpack.c.h.b16 %v236
    %v529 = vunpack.c.l.b16 %v237
    %v530 = vunpack.c.h.b16 %v237
    %v531 = vunpack.c.l.b16 %v238
    %v532 = vunpack.c.h.b16 %v238
    %v533 = vunpack.c.l.b16 %v239
    %v534 = vunpack.c.h.b16 %v239
    %v535 = vunpack.c.l.b16 %v240
    %v536 = vunpack.c.h.b16 %v240
    %v537 = vunpack.c.l.b16 %v241
    %v538 = vunpack.c.h.b16 %v241
    %v539 = vunpack.c.l.b16 %v242
    %v540 = vunpack.c.h.b16 %v242
    %v541 = vunpack.c.l.b16 %v243
    %v542 = vunpack.c.h.b16 %v243
    %v543 = vunpack.c.l.b16 %v244
    %v544 = vunpack.c.h.b16 %v244
    %v545 = vunpack.c.l.b16 %v245
    %v546 = vunpack.c.h.b16 %v245
    %v547 = vunpack.c.l.b16 %v246
    %v548 = vunpack.c.h.b16 %v246
    %v549 = vunpack.c.l.b16 %v247
    %v550 = vunpack.c.h.b16 %v247
    %v551 = vunpack.c.l.b16 %v248
    %v552 = vunpack.c.h.b16 %v248
    %v553 = vunpack.c.l.b16 %v249
    %v554 = vunpack.c.h.b16 %v249
    %v555 = vunpack.c.l.b16 %v250
    %v556 = vunpack.c.h.b16 %v250
    %v557 = vpack.c.b16 %v363, %v361
    %v558 = vpack.c.b16 %v364, %v362
    %v559 = vpack.c.b16 %v367, %v365
    %v560 = vpack.c.b16 %v368, %v366
    %v561 = vpack.c.b16 %v371, %v369
    %v562 = vpack.c.b16 %v372, %v370
    %v563 = vpack.c.b16 %v375, %v373
    %v564 = vpack.c.b16 %v376, %v374
    %v565 = vpack.c.b16 %v379, %v377
    %v566 = vpack.c.b16 %v380, %v378
    %v567 = vpack.c.b16 %v383, %v381
    %v568 = vpack.c.b16 %v384, %v382
    %v569 = vpack.c.b16 %v387, %v385
    %v570 = vpack.c.b16 %v388, %v386
    %v571 = vpack.c.b16 %v391, %v389
    %v572 = vpack.c.b16 %v392, %v390
    %v573 = vpack.c.b16 %v395, %v393
    %v574 = vpack.c.b16 %v396, %v394
    %v575 = vpack.c.b16 %v399, %v397
    %v576 = vpack.c.b16 %v400, %v398
    %v577 = vpack.c.b16 %v403, %v401
    %v578 = vpack.c.b16 %v404, %v402
    %v579 = vpack.c.b16 %v407, %v405
    %v580 = vpack.c.b16 %v408, %v406
    %v581 = vpack.c.b16 %v411, %v409
    %v582 = vpack.c.b16 %v412, %v410
    %v583 = vpack.c.b16 %v415, %v413
    %v584 = vpack.c.b16 %v416, %v414
    %v585 = vpack.c.b16 %v419, %v417
    %v586 = vpack.c.b16 %v420, %v418
    %v587 = vpack.c.b16 %v423, %v421
    %v588 = vpack.c.b16 %v424, %v422
    %v589 = vpack.c.b16 %v427, %v425
    %v590 = vpack.c.b16 %v428, %v426
    %v591 = vpack.c.b16 %v431, %v429
    %v592 = vpack.c.b16 %v432, %v430
    %v593 = vpack.c.b16 %v435, %v433
    %v594 = vpack.c.b16 %v436, %v434
    %v595 = vpack.c.b16 %v439, %v437
    %v596 = vpack.c.b16 %v440, %v438
    %v597 = vpack.c.b16 %v443, %v441
    %v598 = vpack.c.b16 %v444, %v442
    %v599 = vpack.c.b16 %v447, %v445
    %v600 = vpack.c.b16 %v448, %v446
    %v601 = vpack.c.b16 %v451, %v449
    %v602 = vpack.c.b16 %v452, %v450
    %v603 = vpack.c.b16 %v455, %v453
    %v604 = vpack.c.b16 %v456, %v454
    %v605 = vpack.c.b16 %v459, %v457
    %v606 = vpack.c.b16 %v460, %v458
    %v607 = vpack.c.b16 %v463, %v461
    %v608 = vpack.c.b16 %v464, %v462
    %v609 = vpack.c.b16 %v467, %v465
    %v610 = vpack.c.b16 %v468, %v466
    %v611 = vpack.c.b16 %v471, %v469
    %v612 = vpack.c.b16 %v472, %v470
    %v613 = vpack.c.b16 %v475, %v473
    %v614 = vpack.c.b16 %v476, %v474
    %v615 = vpack.c.b16 %v479, %v477
    %v616 = vpack.c.b16 %v480, %v478
    %v617 = vpack.c.b16 %v483, %v481
    %v618 = vpack.c.b16 %v484, %v482
    %v619 = vpack.c.b16 %v487, %v485
    %v620 = vpack.c.b16 %v488, %v486
    %v621 = vpack.c.b16 %v491, %v489
    %v622 = vpack.c.b16 %v492, %v490
    %v623 = vpack.c.b16 %v495, %v493
    %v624 = vpack.c.b16 %v496, %v494
    %v625 = vpack.c.b16 %v499, %v497
    %v626 = vpack.c.b16 %v500, %v498
    %v627 = vpack.c.b16 %v503, %v501
    %v628 = vpack.c.b16 %v504, %v502
    %v629 = vpack.c.b16 %v507, %v505
    %v630 = vpack.c.b16 %v508, %v506
    %v631 = vpack.c.b16 %v511, %v509
    %v632 = vpack.c.b16 %v512, %v510
    %v633 = vpack.c.b16 %v515, %v513
    %v634 = vpack.c.b16 %v516, %v514
    %v635 = vpack.c.b16 %v519, %v517
    %v636 = vpack.c.b16 %v520, %v518
    %v637 = vpack.c.b16 %v523, %v521
    %v638 = vpack.c.b16 %v524, %v522
    %v639 = vpack.c.b16 %v527, %v525
    %v640 = vpack.c.b16 %v528, %v526
    %v641 = vpack.c.b16 %v531, %v529
    %v642 = vpack.c.b16 %v532, %v530
    %v643 = vpack.c.b16 %v535, %v533
    %v644 = vpack.c.b16 %v536, %v534
    %v645 = vpack.c.b16 %v539, %v537
    %v646 = vpack.c.b16 %v540, %v538
    %v647 = vpack.c.b16 %v543, %v541
    %v648 = vpack.c.b16 %v544, %v542
    %v649 = vpack.c.b16 %v547, %v545
    %v650 = vpack.c.b16 %v548, %v546
    %v651 = vpack.c.b16 %v551, %v549
    %v652 = vpack.c.b16 %v552, %v550
    %v653 = vpack.c.b16 %v555, %v553
    %v654 = vpack.c.b16 %v556, %v554
    %vm753 = vcmask 130048
    %v755 = vsel %vm753, %v152, 0
    %757 = vmatprep.subr.bf16.mxu0 %v558
    %758 = vmatpush1.bf16.msra.mxu0 %v557
    %759 = vmatprep.subr.bf16.mxu0 %v560
    %760 = vmatpush1.bf16.msra.mxu0 %v559
    %761 = vmatprep.subr.bf16.mxu0 %v562
    %762 = vmatpush1.bf16.msra.mxu0 %v561
    %763 = vmatprep.subr.bf16.mxu0 %v564
    %764 = vmatpush1.bf16.msra.mxu0 %v563
    %765 = vmatprep.subr.bf16.mxu0 %v566
    %766 = vmatpush1.bf16.msra.mxu0 %v565
    %767 = vmatprep.subr.bf16.mxu0 %v568
    %768 = vmatpush1.bf16.msra.mxu0 %v567
    %769 = vmatprep.subr.bf16.mxu0 %v570
    %770 = vmatpush1.bf16.msra.mxu0 %v569
    %771 = vmatprep.subr.bf16.mxu0 %v572
    %772 = vmatpush1.bf16.msra.mxu0 %v571
    %773 = vmatprep.subr.bf16.mxu0 %v574
    %774 = vmatpush1.bf16.msra.mxu0 %v573
    %775 = vmatprep.subr.bf16.mxu0 %v576
    %776 = vmatpush1.bf16.msra.mxu0 %v575
    %777 = vmatprep.subr.bf16.mxu0 %v578
    %778 = vmatpush1.bf16.msra.mxu0 %v577
    %779 = vmatprep.subr.bf16.mxu0 %v580
    %780 = vmatpush1.bf16.msra.mxu0 %v579
    %781 = vmatprep.subr.bf16.mxu0 %v582
    %782 = vmatpush1.bf16.msra.mxu0 %v581
    %783 = vmatprep.subr.bf16.mxu0 %v584
    %784 = vmatpush1.bf16.msra.mxu0 %v583
    %785 = vmatprep.subr.bf16.mxu0 %v586
    %786 = vmatpush1.bf16.msra.mxu0 %v585
    %787 = vmatprep.subr.bf16.mxu0 %v588
    %788 = vmatpush1.bf16.msra.mxu0 %v587
    %789 = vmatprep.mubr.bf16.mxu0 %v147
    %790 = vmatmul.mubr.bf16.gmra.mrb[0].mxu0 %v146
    %v791 = vpop.f32.mrb[0].mxu0
    %v792 = vadd.f32 %v256, %v791
    %v793 = vpop.f32.mrb[0].mxu0
    %v794 = vadd.f32 %v260, %v793
    %v795 = vpop.f32.mrb[0].mxu0
    %v796 = vpop.f32.mrb[0].mxu0
    %797 = vdwg.mxu0
    %798 = vmatprep.subr.bf16.mxu0 %v590
    %799 = vmatpush1.bf16.msra.mxu0 %v589
    %800 = vmatprep.subr.bf16.mxu0 %v592
    %801 = vmatpush1.bf16.msra.mxu0 %v591
    %802 = vmatprep.subr.bf16.mxu0 %v594
    %803 = vmatpush1.bf16.msra.mxu0 %v593
    %804 = vmatprep.subr.bf16.mxu0 %v596
    %805 = vmatpush1.bf16.msra.mxu0 %v595
    %806 = vmatprep.subr.bf16.mxu0 %v598
    %807 = vmatpush1.bf16.msra.mxu0 %v597
    %808 = vmatprep.subr.bf16.mxu0 %v600
    %809 = vmatpush1.bf16.msra.mxu0 %v599
    %810 = vmatprep.subr.bf16.mxu0 %v602
    %811 = vmatpush1.bf16.msra.mxu0 %v601
    %812 = vmatprep.subr.bf16.mxu0 %v604
    %813 = vmatpush1.bf16.msra.mxu0 %v603
    %814 = vmatprep.subr.bf16.mxu0 %v606
    %815 = vmatpush1.bf16.msra.mxu0 %v605
    %816 = vmatprep.subr.bf16.mxu0 %v608
    %817 = vmatpush1.bf16.msra.mxu0 %v607
    %818 = vmatprep.subr.bf16.mxu0 %v610
    %819 = vmatpush1.bf16.msra.mxu0 %v609
    %820 = vmatprep.subr.bf16.mxu0 %v612
    %821 = vmatpush1.bf16.msra.mxu0 %v611
    %822 = vmatprep.subr.bf16.mxu0 %v614
    %823 = vmatpush1.bf16.msra.mxu0 %v613
    %824 = vmatprep.subr.bf16.mxu0 %v616
    %825 = vmatpush1.bf16.msra.mxu0 %v615
    %826 = vmatprep.subr.bf16.mxu0 %v618
    %827 = vmatpush1.bf16.msra.mxu0 %v617
    %828 = vmatprep.subr.bf16.mxu0 %v620
    %829 = vmatpush1.bf16.msra.mxu0 %v619
    %830 = vmatprep.mubr.bf16.mxu0 %v149
    %831 = vmatmul.mubr.bf16.gmra.mrb[0].mxu0 %v148
    %v832 = vpop.f32.mrb[0].mxu0
    %v833 = vadd.f32 %v792, %v832
    %v834 = vpop.f32.mrb[0].mxu0
    %v835 = vadd.f32 %v794, %v834
    %v836 = vpop.f32.mrb[0].mxu0
    %v837 = vpop.f32.mrb[0].mxu0
    %838 = vdwg.mxu0
    %839 = vmatprep.subr.bf16.mxu0 %v622
    %840 = vmatpush1.bf16.msra.mxu0 %v621
    %841 = vmatprep.subr.bf16.mxu0 %v624
    %842 = vmatpush1.bf16.msra.mxu0 %v623
    %843 = vmatprep.subr.bf16.mxu0 %v626
    %844 = vmatpush1.bf16.msra.mxu0 %v625
    %845 = vmatprep.subr.bf16.mxu0 %v628
    %846 = vmatpush1.bf16.msra.mxu0 %v627
    %847 = vmatprep.subr.bf16.mxu0 %v630
    %848 = vmatpush1.bf16.msra.mxu0 %v629
    %849 = vmatprep.subr.bf16.mxu0 %v632
    %850 = vmatpush1.bf16.msra.mxu0 %v631
    %851 = vmatprep.subr.bf16.mxu0 %v634
    %852 = vmatpush1.bf16.msra.mxu0 %v633
    %853 = vmatprep.subr.bf16.mxu0 %v636
    %854 = vmatpush1.bf16.msra.mxu0 %v635
    %855 = vmatprep.subr.bf16.mxu0 %v638
    %856 = vmatpush1.bf16.msra.mxu0 %v637
    %857 = vmatprep.subr.bf16.mxu0 %v640
    %858 = vmatpush1.bf16.msra.mxu0 %v639
    %859 = vmatprep.subr.bf16.mxu0 %v642
    %860 = vmatpush1.bf16.msra.mxu0 %v641
    %861 = vmatprep.subr.bf16.mxu0 %v644
    %862 = vmatpush1.bf16.msra.mxu0 %v643
    %863 = vmatprep.subr.bf16.mxu0 %v646
    %864 = vmatpush1.bf16.msra.mxu0 %v645
    %865 = vmatprep.subr.bf16.mxu0 %v648
    %866 = vmatpush1.bf16.msra.mxu0 %v647
    %867 = vmatprep.subr.bf16.mxu0 %v650
    %868 = vmatpush1.bf16.msra.mxu0 %v649
    %869 = vmatprep.subr.bf16.mxu0 %v652
    %870 = vmatpush1.bf16.msra.mxu0 %v651
    %871 = vmatprep.mubr.bf16.mxu0 %v151
    %872 = vmatmul.mubr.bf16.gmra.mrb[0].mxu0 %v150
    %v873 = vpop.f32.mrb[0].mxu0
    %v874 = vadd.f32 %v833, %v873
    %v875 = vpop.f32.mrb[0].mxu0
    %v876 = vadd.f32 %v835, %v875
    %v877 = vpop.f32.mrb[0].mxu0
    %v878 = vpop.f32.mrb[0].mxu0
    %879 = vdwg.mxu0
    %880 = vmatprep.subr.bf16.mxu0 %v654
    %881 = vmatpush1.bf16.msra.mxu0 %v653
    %882 = vmatprep.subr.bf16.mxu0 0
    %883 = vmatpush1.bf16.msra.mxu0 0
    %884 = vmatprep.subr.bf16.mxu0 0
    %885 = vmatpush1.bf16.msra.mxu0 0
    %886 = vmatprep.subr.bf16.mxu0 0
    %887 = vmatpush1.bf16.msra.mxu0 0
    %888 = vmatprep.subr.bf16.mxu0 0
    %889 = vmatpush1.bf16.msra.mxu0 0
    %890 = vmatprep.subr.bf16.mxu0 0
    %891 = vmatpush1.bf16.msra.mxu0 0
    %892 = vmatprep.subr.bf16.mxu0 0
    %893 = vmatpush1.bf16.msra.mxu0 0
    %894 = vmatprep.subr.bf16.mxu0 0
    %895 = vmatpush1.bf16.msra.mxu0 0
    %896 = vmatprep.subr.bf16.mxu0 0
    %897 = vmatpush1.bf16.msra.mxu0 0
    %898 = vmatprep.subr.bf16.mxu0 0
    %899 = vmatpush1.bf16.msra.mxu0 0
    %900 = vmatprep.subr.bf16.mxu0 0
    %901 = vmatpush1.bf16.msra.mxu0 0
    %902 = vmatprep.subr.bf16.mxu0 0
    %903 = vmatpush1.bf16.msra.mxu0 0
    %904 = vmatprep.subr.bf16.mxu0 0
    %905 = vmatpush1.bf16.msra.mxu0 0
    %906 = vmatprep.subr.bf16.mxu0 0
    %907 = vmatpush1.bf16.msra.mxu0 0
    %908 = vmatprep.subr.bf16.mxu0 0
    %909 = vmatpush1.bf16.msra.mxu0 0
    %910 = vmatprep.subr.bf16.mxu0 0
    %911 = vmatpush1.bf16.msra.mxu0 0
    %912 = vmatprep.mubr.bf16.mxu0 0
    %913 = vmatmul.mubr.bf16.gmra.mrb[0].mxu0 %v755
    %v914 = vpop.f32.mrb[0].mxu0
    %v915 = vadd.f32 %v874, %v914
    %v916 = vpop.f32.mrb[0].mxu0
    %v917 = vadd.f32 %v876, %v916
    %v918 = vpop.f32.mrb[0].mxu0
    %v919 = vpop.f32.mrb[0].mxu0
    %920 = vdwg.mxu0
    %v921 = vmax.f32 %v915, 0.0
    %v922 = vmax.f32 %v917, 0.0
    %v923 = vpack.c.bf16 %v921, %v921
    %v924 = vpack.c.bf16 %v922, %v922
    %v925 = vld [vmem:[#allocation7] sm:$0xf]
    %v926 = vld [vmem:[#allocation7 + $0x4] sm:$0xf]
    %v927 = vld [vmem:[#allocation7 + $0x8] sm:$0xf]
    %v928 = vld [vmem:[#allocation7 + $0xc] sm:$0xf]
    %v929 = vld [vmem:[#allocation7 + $0x10] sm:$0xf]
    %v930 = vld [vmem:[#allocation7 + $0x14] sm:$0xf]
    %v931 = vld [vmem:[#allocation7 + $0x18] sm:$0xf]
    %v932 = vld [vmem:[#allocation7 + $0x1c] sm:$0xf]
    %v933 = vld [vmem:[#allocation7 + $0x20] sm:$0xf]
    %v934 = vld [vmem:[#allocation7 + $0x24] sm:$0xf]
    %v935 = vld [vmem:[#allocation7 + $0x28] sm:$0xf]
    %v936 = vld [vmem:[#allocation7 + $0x2c] sm:$0xf]
    %v937 = vld [vmem:[#allocation7 + $0x30] sm:$0xf]
    %v938 = vld [vmem:[#allocation7 + $0x34] sm:$0xf]
    %v939 = vld [vmem:[#allocation7 + $0x38] sm:$0xf]
    %v940 = vld [vmem:[#allocation7 + $0x3c] sm:$0xf]
    %v941 = vld [vmem:[#allocation7 + $0x40] sm:$0xf]
    %v942 = vld [vmem:[#allocation7 + $0x44] sm:$0xf]
    %v943 = vld [vmem:[#allocation7 + $0x48] sm:$0xf]
    %v944 = vld [vmem:[#allocation7 + $0x4c] sm:$0xf]
    %v945 = vld [vmem:[#allocation7 + $0x50] sm:$0xf]
    %v946 = vld [vmem:[#allocation7 + $0x54] sm:$0xf]
    %v947 = vld [vmem:[#allocation7 + $0x58] sm:$0xf]
    %v948 = vld [vmem:[#allocation7 + $0x5c] sm:$0xf]
    %v949 = vld [vmem:[#allocation7 + $0x60] sm:$0xf]
    %v950 = vld [vmem:[#allocation7 + $0x64] sm:$0xf]
    %v951 = vld [vmem:[#allocation7 + $0x68] sm:$0xf]
    %v952 = vld [vmem:[#allocation7 + $0x6c] sm:$0xf]
    %v953 = vld [vmem:[#allocation7 + $0x70] sm:$0xf]
    %v954 = vld [vmem:[#allocation7 + $0x74] sm:$0xf]
    %v955 = vld [vmem:[#allocation7 + $0x78] sm:$0xf]
    %v956 = vld [vmem:[#allocation7 + $0x7c] sm:$0xf]
    %v957 = vld [vmem:[%s4] sm:$0x1]
    %v959 = vlaneseq
    %v960 = vshrl.u32 %v959, 7
    %v961 = vsub.s32 0, %v960
    %v962 = vrot.slane %v957, %v961
    %v996 = vunpack.c.l.b16 %v925
    %v997 = vunpack.c.l.b16 %v926
    %v998 = vunpack.c.l.b16 %v927
    %v999 = vunpack.c.l.b16 %v928
    %v1000 = vunpack.c.l.b16 %v929
    %v1001 = vunpack.c.l.b16 %v930
    %v1002 = vunpack.c.l.b16 %v931
    %v1003 = vunpack.c.l.b16 %v932
    %v1004 = vunpack.c.l.b16 %v933
    %v1005 = vunpack.c.l.b16 %v934
    %v1006 = vunpack.c.l.b16 %v935
    %v1007 = vunpack.c.l.b16 %v936
    %v1008 = vunpack.c.l.b16 %v937
    %v1009 = vunpack.c.l.b16 %v938
    %v1010 = vunpack.c.l.b16 %v939
    %v1011 = vunpack.c.l.b16 %v940
    %v1012 = vunpack.c.l.b16 %v941
    %v1013 = vunpack.c.l.b16 %v942
    %v1014 = vunpack.c.l.b16 %v943
    %v1015 = vunpack.c.l.b16 %v944
    %v1016 = vunpack.c.l.b16 %v945
    %v1017 = vunpack.c.l.b16 %v946
    %v1018 = vunpack.c.l.b16 %v947
    %v1019 = vunpack.c.l.b16 %v948
    %v1020 = vunpack.c.l.b16 %v949
    %v1021 = vunpack.c.l.b16 %v950
    %v1022 = vunpack.c.l.b16 %v951
    %v1023 = vunpack.c.l.b16 %v952
    %v1024 = vunpack.c.l.b16 %v953
    %v1025 = vunpack.c.l.b16 %v954
    %v1026 = vunpack.c.l.b16 %v955
    %v1027 = vunpack.c.l.b16 %v956
    %v1028 = vpack.c.b16 %v997, %v996
    %v1029 = vpack.c.b16 %v999, %v998
    %v1030 = vpack.c.b16 %v1001, %v1000
    %v1031 = vpack.c.b16 %v1003, %v1002
    %v1032 = vpack.c.b16 %v1005, %v1004
    %v1033 = vpack.c.b16 %v1007, %v1006
    %v1034 = vpack.c.b16 %v1009, %v1008
    %v1035 = vpack.c.b16 %v1011, %v1010
    %v1036 = vpack.c.b16 %v1013, %v1012
    %v1037 = vpack.c.b16 %v1015, %v1014
    %v1038 = vpack.c.b16 %v1017, %v1016
    %v1039 = vpack.c.b16 %v1019, %v1018
    %v1040 = vpack.c.b16 %v1021, %v1020
    %v1041 = vpack.c.b16 %v1023, %v1022
    %v1042 = vpack.c.b16 %v1025, %v1024
    %v1043 = vpack.c.b16 %v1027, %v1026
    %1060 = vmatprep.subr.bf16.mxu0 0
    %1061 = vmatpush1.bf16.msra.mxu0 %v1028
    %1062 = vmatprep.subr.bf16.mxu0 0
    %1063 = vmatpush1.bf16.msra.mxu0 %v1029
    %1064 = vmatprep.subr.bf16.mxu0 0
    %1065 = vmatpush1.bf16.msra.mxu0 %v1030
    %1066 = vmatprep.subr.bf16.mxu0 0
    %1067 = vmatpush1.bf16.msra.mxu0 %v1031
    %1068 = vmatprep.subr.bf16.mxu0 0
    %1069 = vmatpush1.bf16.msra.mxu0 %v1032
    %1070 = vmatprep.subr.bf16.mxu0 0
    %1071 = vmatpush1.bf16.msra.mxu0 %v1033
    %1072 = vmatprep.subr.bf16.mxu0 0
    %1073 = vmatpush1.bf16.msra.mxu0 %v1034
    %1074 = vmatprep.subr.bf16.mxu0 0
    %1075 = vmatpush1.bf16.msra.mxu0 %v1035
    %1076 = vmatprep.subr.bf16.mxu0 0
    %1077 = vmatpush1.bf16.msra.mxu0 %v1036
    %1078 = vmatprep.subr.bf16.mxu0 0
    %1079 = vmatpush1.bf16.msra.mxu0 %v1037
    %1080 = vmatprep.subr.bf16.mxu0 0
    %1081 = vmatpush1.bf16.msra.mxu0 %v1038
    %1082 = vmatprep.subr.bf16.mxu0 0
    %1083 = vmatpush1.bf16.msra.mxu0 %v1039
    %1084 = vmatprep.subr.bf16.mxu0 0
    %1085 = vmatpush1.bf16.msra.mxu0 %v1040
    %1086 = vmatprep.subr.bf16.mxu0 0
    %1087 = vmatpush1.bf16.msra.mxu0 %v1041
    %1088 = vmatprep.subr.bf16.mxu0 0
    %1089 = vmatpush1.bf16.msra.mxu0 %v1042
    %1090 = vmatprep.subr.bf16.mxu0 0
    %1091 = vmatpush1.bf16.msra.mxu0 %v1043
    %1092 = vmatprep.mubr.bf16.mxu0 %v924
    %1093 = vmatmul.mubr.bf16.gmra.mrb[0].mxu0 %v923
    %v1094 = vpop.f32.mrb[0].mxu0
    %v1095 = vadd.f32 %v962, %v1094
    %v1096 = vpop.f32.mrb[0].mxu0
    %v1097 = vpop.f32.mrb[0].mxu0
    %v1098 = vpop.f32.mrb[0].mxu0
    %1099 = vdwg.mxu0
    %v1100 = vmax.f32 %v1095, 0.0
    %v1101 = vpack.c.bf16 %v1100, %v1100
    %v1102 = vld [vmem:[#allocation8] sm:$0xf]
    %v1103 = vld [vmem:[#allocation8 + $0x4] sm:$0xf]
    %v1104 = vld [vmem:[#allocation8 + $0x8] sm:$0xf]
    %v1105 = vld [vmem:[#allocation8 + $0xc] sm:$0xf]
    %v1106 = vld [vmem:[#allocation8 + $0x10] sm:$0xf]
    %v1107 = vld [vmem:[#allocation8 + $0x14] sm:$0xf]
    %v1108 = vld [vmem:[#allocation8 + $0x18] sm:$0xf]
    %v1109 = vld [vmem:[#allocation8 + $0x1c] sm:$0xf]
    %v1110 = vld [vmem:[#allocation8 + $0x20] sm:$0xf]
    %v1111 = vld [vmem:[#allocation8 + $0x24] sm:$0xf]
    %v1112 = vld [vmem:[#allocation8 + $0x28] sm:$0xf]
    %v1113 = vld [vmem:[#allocation8 + $0x2c] sm:$0xf]
    %v1114 = vld [vmem:[#allocation8 + $0x30] sm:$0xf]
    %v1115 = vld [vmem:[#allocation8 + $0x34] sm:$0xf]
    %v1116 = vld [vmem:[#allocation8 + $0x38] sm:$0xf]
    %v1117 = vld [vmem:[#allocation8 + $0x3c] sm:$0xf]
    %v1118 = vld [vmem:[%s6] sm:$0x1]
    %v1120 = vlaneseq
    %v1121 = vshrl.u32 %v1120, 7
    %v1122 = vsub.s32 0, %v1121
    %v1123 = vrot.slane %v1118, %v1122
    %v1141 = vunpack.c.l.b16 %v1102
    %v1142 = vunpack.c.l.b16 %v1103
    %v1143 = vunpack.c.l.b16 %v1104
    %v1144 = vunpack.c.l.b16 %v1105
    %v1145 = vunpack.c.l.b16 %v1106
    %v1146 = vunpack.c.l.b16 %v1107
    %v1147 = vunpack.c.l.b16 %v1108
    %v1148 = vunpack.c.l.b16 %v1109
    %v1149 = vunpack.c.l.b16 %v1110
    %v1150 = vunpack.c.l.b16 %v1111
    %v1151 = vunpack.c.l.b16 %v1112
    %v1152 = vunpack.c.l.b16 %v1113
    %v1153 = vunpack.c.l.b16 %v1114
    %v1154 = vunpack.c.l.b16 %v1115
    %v1155 = vunpack.c.l.b16 %v1116
    %v1156 = vunpack.c.l.b16 %v1117
    %v1157 = vpack.c.b16 %v1142, %v1141
    %v1158 = vpack.c.b16 %v1144, %v1143
    %v1159 = vpack.c.b16 %v1146, %v1145
    %v1160 = vpack.c.b16 %v1148, %v1147
    %v1161 = vpack.c.b16 %v1150, %v1149
    %v1162 = vpack.c.b16 %v1152, %v1151
    %v1163 = vpack.c.b16 %v1154, %v1153
    %v1164 = vpack.c.b16 %v1156, %v1155
    %1173 = vmatprep.subr.bf16.mxu0 0
    %1174 = vmatpush1.bf16.msra.mxu0 %v1157
    %1175 = vmatprep.subr.bf16.mxu0 0
    %1176 = vmatpush1.bf16.msra.mxu0 %v1158
    %1177 = vmatprep.subr.bf16.mxu0 0
    %1178 = vmatpush1.bf16.msra.mxu0 %v1159
    %1179 = vmatprep.subr.bf16.mxu0 0
    %1180 = vmatpush1.bf16.msra.mxu0 %v1160
    %1181 = vmatprep.subr.bf16.mxu0 0
    %1182 = vmatpush1.bf16.msra.mxu0 %v1161
    %1183 = vmatprep.subr.bf16.mxu0 0
    %1184 = vmatpush1.bf16.msra.mxu0 %v1162
    %1185 = vmatprep.subr.bf16.mxu0 0
    %1186 = vmatpush1.bf16.msra.mxu0 %v1163
    %1187 = vmatprep.subr.bf16.mxu0 0
    %1188 = vmatpush1.bf16.msra.mxu0 %v1164
    %1189 = vmatprep.subr.bf16.mxu0 0
    %1190 = vmatpush1.bf16.msra.mxu0 0
    %1191 = vmatprep.subr.bf16.mxu0 0
    %1192 = vmatpush1.bf16.msra.mxu0 0
    %1193 = vmatprep.subr.bf16.mxu0 0
    %1194 = vmatpush1.bf16.msra.mxu0 0
    %1195 = vmatprep.subr.bf16.mxu0 0
    %1196 = vmatpush1.bf16.msra.mxu0 0
    %1197 = vmatprep.subr.bf16.mxu0 0
    %1198 = vmatpush1.bf16.msra.mxu0 0
    %1199 = vmatprep.subr.bf16.mxu0 0
    %1200 = vmatpush1.bf16.msra.mxu0 0
    %1201 = vmatprep.subr.bf16.mxu0 0
    %1202 = vmatpush1.bf16.msra.mxu0 0
    %1203 = vmatprep.subr.bf16.mxu0 0
    %1204 = vmatpush1.bf16.msra.mxu0 0
    %1205 = vmatprep.mubr.bf16.mxu0 0
    %1206 = vmatmul.mubr.bf16.gmra.mrb[0].mxu0 %v1101
    %v1207 = vpop.f32.mrb[0].mxu0
    %v1208 = vadd.f32 %v1123, %v1207
    %v1209 = vpop.f32.mrb[0].mxu0
    %v1210 = vpop.f32.mrb[0].mxu0
    %v1211 = vpop.f32.mrb[0].mxu0
    %1212 = vdwg.mxu0
    %v1213 = vmax.f32 %v1208, 0.0
    %v1214 = vpack.c.bf16 %v1213, %v1213
    %v1215 = vld [vmem:[#allocation10] sm:$0xf]
    %v1216 = vld [vmem:[#allocation10 + $0x4] sm:$0xf]
    %v1217 = vld [vmem:[#allocation10 + $0x8] sm:$0xf]
    %v1218 = vld [vmem:[#allocation10 + $0xc] sm:$0xf]
    %v1219 = vld [vmem:[#allocation10 + $0x10] sm:$0xf]
    %v1220 = vld [vmem:[#allocation10 + $0x14] sm:$0xf]
    %v1221 = vld [vmem:[#allocation10 + $0x18] sm:$0xf]
    %v1222 = vld [vmem:[#allocation10 + $0x1c] sm:$0xf]
    %v1223 = vld [vmem:[#allocation10 + $0x20] sm:$0xf]
    %v1224 = vld [vmem:[#allocation10 + $0x24] sm:$0xf]
    %v1225 = vld [vmem:[#allocation10 + $0x28] sm:$0xf]
    %v1226 = vld [vmem:[#allocation10 + $0x2c] sm:$0xf]
    %v1227 = vld [vmem:[#allocation10 + $0x30] sm:$0xf]
    %v1228 = vld [vmem:[#allocation10 + $0x34] sm:$0xf]
    %v1229 = vld [vmem:[#allocation10 + $0x38] sm:$0xf]
    %v1230 = vld [vmem:[#allocation10 + $0x3c] sm:$0xf]
    %v1231 = vld [vmem:[%s8] sm:$0x1]
    %v1233 = vlaneseq
    %v1234 = vshrl.u32 %v1233, 7
    %v1235 = vsub.s32 0, %v1234
    %v1236 = vrot.slane %v1231, %v1235
    %v1254 = vunpack.c.l.b16 %v1215
    %v1255 = vunpack.c.l.b16 %v1216
    %v1256 = vunpack.c.l.b16 %v1217
    %v1257 = vunpack.c.l.b16 %v1218
    %v1258 = vunpack.c.l.b16 %v1219
    %v1259 = vunpack.c.l.b16 %v1220
    %v1260 = vunpack.c.l.b16 %v1221
    %v1261 = vunpack.c.l.b16 %v1222
    %v1262 = vunpack.c.l.b16 %v1223
    %v1263 = vunpack.c.l.b16 %v1224
    %v1264 = vunpack.c.l.b16 %v1225
    %v1265 = vunpack.c.l.b16 %v1226
    %v1266 = vunpack.c.l.b16 %v1227
    %v1267 = vunpack.c.l.b16 %v1228
    %v1268 = vunpack.c.l.b16 %v1229
    %v1269 = vunpack.c.l.b16 %v1230
    %v1270 = vpack.c.b16 %v1255, %v1254
    %v1271 = vpack.c.b16 %v1257, %v1256
    %v1272 = vpack.c.b16 %v1259, %v1258
    %v1273 = vpack.c.b16 %v1261, %v1260
    %v1274 = vpack.c.b16 %v1263, %v1262
    %v1275 = vpack.c.b16 %v1265, %v1264
    %v1276 = vpack.c.b16 %v1267, %v1266
    %v1277 = vpack.c.b16 %v1269, %v1268
    %1286 = vmatprep.subr.bf16.mxu0 0
    %1287 = vmatpush1.bf16.msra.mxu0 %v1270
    %1288 = vmatprep.subr.bf16.mxu0 0
    %1289 = vmatpush1.bf16.msra.mxu0 %v1271
    %1290 = vmatprep.subr.bf16.mxu0 0
    %1291 = vmatpush1.bf16.msra.mxu0 %v1272
    %1292 = vmatprep.subr.bf16.mxu0 0
    %1293 = vmatpush1.bf16.msra.mxu0 %v1273
    %1294 = vmatprep.subr.bf16.mxu0 0
    %1295 = vmatpush1.bf16.msra.mxu0 %v1274
    %1296 = vmatprep.subr.bf16.mxu0 0
    %1297 = vmatpush1.bf16.msra.mxu0 %v1275
    %1298 = vmatprep.subr.bf16.mxu0 0
    %1299 = vmatpush1.bf16.msra.mxu0 %v1276
    %1300 = vmatprep.subr.bf16.mxu0 0
    %1301 = vmatpush1.bf16.msra.mxu0 %v1277
    %1302 = vmatprep.subr.bf16.mxu0 0
    %1303 = vmatpush1.bf16.msra.mxu0 0
    %1304 = vmatprep.subr.bf16.mxu0 0
    %1305 = vmatpush1.bf16.msra.mxu0 0
    %1306 = vmatprep.subr.bf16.mxu0 0
    %1307 = vmatpush1.bf16.msra.mxu0 0
    %1308 = vmatprep.subr.bf16.mxu0 0
    %1309 = vmatpush1.bf16.msra.mxu0 0
    %1310 = vmatprep.subr.bf16.mxu0 0
    %1311 = vmatpush1.bf16.msra.mxu0 0
    %1312 = vmatprep.subr.bf16.mxu0 0
    %1313 = vmatpush1.bf16.msra.mxu0 0
    %1314 = vmatprep.subr.bf16.mxu0 0
    %1315 = vmatpush1.bf16.msra.mxu0 0
    %1316 = vmatprep.subr.bf16.mxu0 0
    %1317 = vmatpush1.bf16.msra.mxu0 0
    %1318 = vmatprep.mubr.bf16.mxu0 0
    %1319 = vmatmul.mubr.bf16.gmra.mrb[0].mxu0 %v1214
    %v1320 = vpop.f32.mrb[0].mxu0
    %v1321 = vadd.f32 %v1236, %v1320
    %v1322 = vpop.f32.mrb[0].mxu0
    %v1323 = vpop.f32.mrb[0].mxu0
    %v1324 = vpop.f32.mrb[0].mxu0
    %1325 = vdwg.mxu0
    %v1326 = vmax.f32 %v1321, 0.0
    %v1327 = vpack.c.bf16 %v1326, %v1326
    %v1328 = vld [vmem:[#allocation11] sm:$0xf]
    %v1329 = vld [vmem:[#allocation11 + $0x4] sm:$0xf]
    %v1330 = vld [vmem:[#allocation11 + $0x8] sm:$0xf]
    %v1331 = vld [vmem:[#allocation11 + $0xc] sm:$0xf]
    %v1332 = vld [vmem:[#allocation11 + $0x10] sm:$0xf]
    %v1333 = vld [vmem:[#allocation11 + $0x14] sm:$0xf]
    %v1334 = vld [vmem:[#allocation11 + $0x18] sm:$0xf]
    %v1335 = vld [vmem:[#allocation11 + $0x1c] sm:$0xf]
    %v1336 = vld [vmem:[#allocation11 + $0x20] sm:$0xf]
    %v1337 = vld [vmem:[#allocation11 + $0x24] sm:$0xf]
    %v1338 = vld [vmem:[#allocation11 + $0x28] sm:$0xf]
    %v1339 = vld [vmem:[#allocation11 + $0x2c] sm:$0xf]
    %v1340 = vld [vmem:[#allocation11 + $0x30] sm:$0xf]
    %v1341 = vld [vmem:[#allocation11 + $0x34] sm:$0xf]
    %v1342 = vld [vmem:[#allocation11 + $0x38] sm:$0xf]
    %v1343 = vld [vmem:[#allocation11 + $0x3c] sm:$0xf]
    %v1344 = vld [vmem:[%s10] sm:$0x1]
    %v1346 = vlaneseq
    %v1347 = vshrl.u32 %v1346, 7
    %v1348 = vsub.s32 0, %v1347
    %v1349 = vrot.slane %v1344, %v1348
    %v1367 = vunpack.c.l.b16 %v1328
    %v1368 = vunpack.c.l.b16 %v1329
    %v1369 = vunpack.c.l.b16 %v1330
    %v1370 = vunpack.c.l.b16 %v1331
    %v1371 = vunpack.c.l.b16 %v1332
    %v1372 = vunpack.c.l.b16 %v1333
    %v1373 = vunpack.c.l.b16 %v1334
    %v1374 = vunpack.c.l.b16 %v1335
    %v1375 = vunpack.c.l.b16 %v1336
    %v1376 = vunpack.c.l.b16 %v1337
    %v1377 = vunpack.c.l.b16 %v1338
    %v1378 = vunpack.c.l.b16 %v1339
    %v1379 = vunpack.c.l.b16 %v1340
    %v1380 = vunpack.c.l.b16 %v1341
    %v1381 = vunpack.c.l.b16 %v1342
    %v1382 = vunpack.c.l.b16 %v1343
    %v1383 = vpack.c.b16 %v1368, %v1367
    %v1384 = vpack.c.b16 %v1370, %v1369
    %v1385 = vpack.c.b16 %v1372, %v1371
    %v1386 = vpack.c.b16 %v1374, %v1373
    %v1387 = vpack.c.b16 %v1376, %v1375
    %v1388 = vpack.c.b16 %v1378, %v1377
    %v1389 = vpack.c.b16 %v1380, %v1379
    %v1390 = vpack.c.b16 %v1382, %v1381
    %1399 = vmatprep.subr.bf16.mxu0 0
    %1400 = vmatpush1.bf16.msra.mxu0 %v1383
    %1401 = vmatprep.subr.bf16.mxu0 0
    %1402 = vmatpush1.bf16.msra.mxu0 %v1384
    %1403 = vmatprep.subr.bf16.mxu0 0
    %1404 = vmatpush1.bf16.msra.mxu0 %v1385
    %1405 = vmatprep.subr.bf16.mxu0 0
    %1406 = vmatpush1.bf16.msra.mxu0 %v1386
    %1407 = vmatprep.subr.bf16.mxu0 0
    %1408 = vmatpush1.bf16.msra.mxu0 %v1387
    %1409 = vmatprep.subr.bf16.mxu0 0
    %1410 = vmatpush1.bf16.msra.mxu0 %v1388
    %1411 = vmatprep.subr.bf16.mxu0 0
    %1412 = vmatpush1.bf16.msra.mxu0 %v1389
    %1413 = vmatprep.subr.bf16.mxu0 0
    %1414 = vmatpush1.bf16.msra.mxu0 %v1390
    %1415 = vmatprep.subr.bf16.mxu0 0
    %1416 = vmatpush1.bf16.msra.mxu0 0
    %1417 = vmatprep.subr.bf16.mxu0 0
    %1418 = vmatpush1.bf16.msra.mxu0 0
    %1419 = vmatprep.subr.bf16.mxu0 0
    %1420 = vmatpush1.bf16.msra.mxu0 0
    %1421 = vmatprep.subr.bf16.mxu0 0
    %1422 = vmatpush1.bf16.msra.mxu0 0
    %1423 = vmatprep.subr.bf16.mxu0 0
    %1424 = vmatpush1.bf16.msra.mxu0 0
    %1425 = vmatprep.subr.bf16.mxu0 0
    %1426 = vmatpush1.bf16.msra.mxu0 0
    %1427 = vmatprep.subr.bf16.mxu0 0
    %1428 = vmatpush1.bf16.msra.mxu0 0
    %1429 = vmatprep.subr.bf16.mxu0 0
    %1430 = vmatpush1.bf16.msra.mxu0 0
    %1431 = vmatprep.mubr.bf16.mxu0 0
    %1432 = vmatmul.mubr.bf16.gmra.mrb[0].mxu0 %v1327
    %v1433 = vpop.f32.mrb[0].mxu0
    %v1434 = vadd.f32 %v1349, %v1433
    %v1435 = vpop.f32.mrb[0].mxu0
    %v1436 = vpop.f32.mrb[0].mxu0
    %v1437 = vpop.f32.mrb[0].mxu0
    %1438 = vdwg.mxu0
    %v1439 = vmax.f32 %v1434, 0.0
    %v1440 = vpack.c.bf16 %v1439, %v1439
    %v1441 = vld [vmem:[#allocation13] sm:$0xf]
    %v1442 = vld [vmem:[#allocation13 + $0x4] sm:$0xf]
    %v1443 = vld [vmem:[#allocation13 + $0x8] sm:$0xf]
    %v1444 = vld [vmem:[#allocation13 + $0xc] sm:$0xf]
    %v1445 = vld [vmem:[#allocation13 + $0x10] sm:$0xf]
    %v1446 = vld [vmem:[#allocation13 + $0x14] sm:$0xf]
    %v1447 = vld [vmem:[#allocation13 + $0x18] sm:$0xf]
    %v1448 = vld [vmem:[#allocation13 + $0x1c] sm:$0xf]
    %v1449 = vld [vmem:[#allocation13 + $0x20] sm:$0xf]
    %v1450 = vld [vmem:[#allocation13 + $0x24] sm:$0xf]
    %v1451 = vld [vmem:[#allocation13 + $0x28] sm:$0xf]
    %v1452 = vld [vmem:[#allocation13 + $0x2c] sm:$0xf]
    %v1453 = vld [vmem:[#allocation13 + $0x30] sm:$0xf]
    %v1454 = vld [vmem:[#allocation13 + $0x34] sm:$0xf]
    %v1455 = vld [vmem:[#allocation13 + $0x38] sm:$0xf]
    %v1456 = vld [vmem:[#allocation13 + $0x3c] sm:$0xf]
    %v1457 = vld [vmem:[%s12] sm:$0x1]
    %v1459 = vlaneseq
    %v1460 = vshrl.u32 %v1459, 7
    %v1461 = vsub.s32 0, %v1460
    %v1462 = vrot.slane %v1457, %v1461
    %v1480 = vunpack.c.l.b16 %v1441
    %v1481 = vunpack.c.l.b16 %v1442
    %v1482 = vunpack.c.l.b16 %v1443
    %v1483 = vunpack.c.l.b16 %v1444
    %v1484 = vunpack.c.l.b16 %v1445
    %v1485 = vunpack.c.l.b16 %v1446
    %v1486 = vunpack.c.l.b16 %v1447
    %v1487 = vunpack.c.l.b16 %v1448
    %v1488 = vunpack.c.l.b16 %v1449
    %v1489 = vunpack.c.l.b16 %v1450
    %v1490 = vunpack.c.l.b16 %v1451
    %v1491 = vunpack.c.l.b16 %v1452
    %v1492 = vunpack.c.l.b16 %v1453
    %v1493 = vunpack.c.l.b16 %v1454
    %v1494 = vunpack.c.l.b16 %v1455
    %v1495 = vunpack.c.l.b16 %v1456
    %v1496 = vpack.c.b16 %v1481, %v1480
    %v1497 = vpack.c.b16 %v1483, %v1482
    %v1498 = vpack.c.b16 %v1485, %v1484
    %v1499 = vpack.c.b16 %v1487, %v1486
    %v1500 = vpack.c.b16 %v1489, %v1488
    %v1501 = vpack.c.b16 %v1491, %v1490
    %v1502 = vpack.c.b16 %v1493, %v1492
    %v1503 = vpack.c.b16 %v1495, %v1494
    %1512 = vmatprep.subr.bf16.mxu0 0
    %1513 = vmatpush1.bf16.msra.mxu0 %v1496
    %1514 = vmatprep.subr.bf16.mxu0 0
    %1515 = vmatpush1.bf16.msra.mxu0 %v1497
    %1516 = vmatprep.subr.bf16.mxu0 0
    %1517 = vmatpush1.bf16.msra.mxu0 %v1498
    %1518 = vmatprep.subr.bf16.mxu0 0
    %1519 = vmatpush1.bf16.msra.mxu0 %v1499
    %1520 = vmatprep.subr.bf16.mxu0 0
    %1521 = vmatpush1.bf16.msra.mxu0 %v1500
    %1522 = vmatprep.subr.bf16.mxu0 0
    %1523 = vmatpush1.bf16.msra.mxu0 %v1501
    %1524 = vmatprep.subr.bf16.mxu0 0
    %1525 = vmatpush1.bf16.msra.mxu0 %v1502
    %1526 = vmatprep.subr.bf16.mxu0 0
    %1527 = vmatpush1.bf16.msra.mxu0 %v1503
    %1528 = vmatprep.subr.bf16.mxu0 0
    %1529 = vmatpush1.bf16.msra.mxu0 0
    %1530 = vmatprep.subr.bf16.mxu0 0
    %1531 = vmatpush1.bf16.msra.mxu0 0
    %1532 = vmatprep.subr.bf16.mxu0 0
    %1533 = vmatpush1.bf16.msra.mxu0 0
    %1534 = vmatprep.subr.bf16.mxu0 0
    %1535 = vmatpush1.bf16.msra.mxu0 0
    %1536 = vmatprep.subr.bf16.mxu0 0
    %1537 = vmatpush1.bf16.msra.mxu0 0
    %1538 = vmatprep.subr.bf16.mxu0 0
    %1539 = vmatpush1.bf16.msra.mxu0 0
    %1540 = vmatprep.subr.bf16.mxu0 0
    %1541 = vmatpush1.bf16.msra.mxu0 0
    %1542 = vmatprep.subr.bf16.mxu0 0
    %1543 = vmatpush1.bf16.msra.mxu0 0
    %1544 = vmatprep.mubr.bf16.mxu0 0
    %1545 = vmatmul.mubr.bf16.gmra.mrb[0].mxu0 %v1440
    %v1546 = vpop.f32.mrb[0].mxu0
    %v1547 = vadd.f32 %v1462, %v1546
    %v1548 = vpop.f32.mrb[0].mxu0
    %v1549 = vpop.f32.mrb[0].mxu0
    %v1550 = vpop.f32.mrb[0].mxu0
    %1551 = vdwg.mxu0
    %v1552 = vlaneseq
    %v1553 = vand.u32 %v1552, 127
    %vm1554 = vcmp.lt.s32.totalorder %v1553, 10
    %v1555 = vsel %vm1554, %v1547, -1e+30
    %1556 = vmax.xlane.f32.xlu0 %v1555
    %v1557 = vpop.xlane.xlu0 %1556
    %v1558 = vsub.f32 %v1555, %v1557
    %v1559 = vmul.f32 %v1558, 1.442695
    %v1560 = vpow.pop %v1559
    %1561 = vadd.xlane.f32.xlu0 %v1560
    %v1562 = vpop.xlane.xlu0 %1561
    %v1563 = vlog2.pop %v1562
    %v1564 = vmul.f32 %v1563, 0.6931472
    %v1565 = vsub.f32 %v1558, %v1564
    %1566 = vst [vmem:[#allocation14] sm:$0xff] %v1565
    // Predicated region
    $region82: #{tpu_custom_call.1} parent=1 // pred_check
      _
    $region83: #{tpu_custom_call.1} parent=1 // pred_check_branch
      %1568 = sbr.rel (0) target = $region85
    $region84: #{tpu_custom_call.1} parent=1 // pred_region
      %s1570 = ssub.s32 128, 128
      %1571 = vsyncadd [#allocation4], %s1570
      %s1573 = sshll.u32 [#allocation14], 4
      %s1574 = int_to_ptr.vmem [resolvable:$true] %s1573
      %1576 = dma.vmem_to_hbm [thread:$0]  %s1574, 128, %s13, [#allocation4]
    $region85: #{tpu_custom_call.1} parent=1 // pred_fallthru
      _
    // Predicated region
    $region86: #{tpu_custom_call.1} parent=1 // pred_check
      _
    $region87: #{tpu_custom_call.1} parent=1 // pred_check_branch
      %1578 = sbr.rel (0) target = $region89
    $region88: #{tpu_custom_call.1} parent=1 // pred_region
      %1579 = dma.done [#allocation4], 128
    $region89: #{tpu_custom_call.1} parent=1 // pred_fallthru
      _
    %1580 = vsyncpa [#allocation3], 1
    %1581 = vsyncpa [#allocation6], 1
    %1582 = vsyncpa [#allocation9], 1
    %1583 = vsyncpa [#allocation12], 1
    %1584 = vsyncpa [#allocation4], 1

// kernel: tpu_custom_call.1
$region0: #{tpu_custom_call.1}
  #allocation0 [shape = 'u32[]', space=smem, size = 0x4, offset = 0x4, fixed_abs, tag = 'smem constant byte address 0x4 - core index']
  #allocation1 [shape = 'u32[144,128]{1,0:T(1,128)}', space=vmem, size = 0x12000, scoped, tag = 'internal scratch']
  %s0 = inlined_call_operand.hbm [shape: f32[8,784], index: 0, kind: input, shape index: {}]
  %s1 = inlined_call_operand.hbm [shape: bf16[784,256], index: 1, kind: input, shape index: {}]
  %s2 = inlined_call_operand.vmem [shape: f32[1,256], index: 2, kind: input, shape index: {}]
  %s3 = inlined_call_operand.hbm [shape: bf16[256,128], index: 3, kind: input, shape index: {}]
  %s4 = inlined_call_operand.vmem [shape: f32[1,128], index: 4, kind: input, shape index: {}]
  %s5 = inlined_call_operand.hbm [shape: bf16[128,128], index: 5, kind: input, shape index: {}]
  %s6 = inlined_call_operand.vmem [shape: f32[1,128], index: 6, kind: input, shape index: {}]
  %s7 = inlined_call_operand.hbm [shape: bf16[128,128], index: 7, kind: input, shape index: {}]
  %s8 = inlined_call_operand.vmem [shape: f32[1,128], index: 8, kind: input, shape index: {}]
  %s9 = inlined_call_operand.hbm [shape: bf16[128,128], index: 9, kind: input, shape index: {}]
  %s10 = inlined_call_operand.vmem [shape: f32[1,128], index: 10, kind: input, shape index: {}]
  %s11 = inlined_call_operand.hbm [shape: bf16[128,128], index: 11, kind: input, shape index: {}]
  %s12 = inlined_call_operand.vmem [shape: f32[1,128], index: 12, kind: input, shape index: {}]
  %s13 = inlined_call_operand.hbm [shape: f32[8,128], index: 13, kind: output, shape index: {}]
  %s14 = sld [smem:[#allocation0]]
  $region90: #{tpu_custom_call.1} parent=0
    _
  %s16 = ssub.s32 1, %s14
  %s17 = scalar_select 0, %s16, %s14
  $region1: #{tpu_custom_call.1} parent=0
    #allocation2 [shape = 'u8[28672]{0}', space=vmem, size = 0x7000, scoped, tag = 'input window, operand 0, single buffered']
    #allocation3 [shape = 's32[1]{0}', space=sflag, size = 0x4, scoped, tag = 'scoped memory for tpu_custom_call.1']
    #allocation4 [shape = 's32[1]{0}', space=sflag, size = 0x4, scoped, tag = 'scoped memory for tpu_custom_call.1']
    #allocation5 [shape = 'u8[401408]{0}', space=vmem, size = 0x62000, scoped, tag = 'input window, operand 1, single buffered']
    #allocation6 [shape = 's32[1]{0}', space=sflag, size = 0x4, scoped, tag = 'scoped memory for tpu_custom_call.1']
    #allocation7 [shape = 'u8[65536]{0}', space=vmem, size = 0x10000, scoped, tag = 'input window, operand 3, single buffered']
    #allocation8 [shape = 'u8[32768]{0}', space=vmem, size = 0x8000, scoped, tag = 'input window, operand 5, single buffered']
    #allocation9 [shape = 's32[1]{0}', space=sflag, size = 0x4, scoped, tag = 'scoped memory for tpu_custom_call.1']
    #allocation10 [shape = 'u8[32768]{0}', space=vmem, size = 0x8000, scoped, tag = 'input window, operand 7, single buffered']
    #allocation11 [shape = 'u8[32768]{0}', space=vmem, size = 0x8000, scoped, tag = 'input window, operand 9, single buffered']
    #allocation12 [shape = 's32[1]{0}', space=sflag, size = 0x4, scoped, tag = 'scoped memory for tpu_custom_call.1']
    #allocation13 [shape = 'u8[32768]{0}', space=vmem, size = 0x8000, scoped, tag = 'input window, operand 11, single buffered']
    #allocation14 [shape = 'u8[4096]{0}', space=vmem, size = 0x1000, scoped, tag = 'output window, operand 0, single buffered']
    %18 = vsyncpa [#allocation3], 0
    %19 = vsyncpa [#allocation6], 0
    %20 = vsyncpa [#allocation9], 0
    %21 = vsyncpa [#allocation12], 0
    %22 = vsyncpa [#allocation4], 0
    // Predicated region
    $region2: #{tpu_custom_call.1} parent=1 // pred_check
      _
    $region3: #{tpu_custom_call.1} parent=1 // pred_check_branch
      %24 = sbr.rel (0) target = $region5
    $region4: #{tpu_custom_call.1} parent=1 // pred_region
      %s26 = ssub.s32 896, 896
      %27 = vsyncadd [#allocation3], %s26
      %s29 = sshll.u32 [#allocation2], 4
      %s30 = int_to_ptr.vmem [resolvable:$true] %s29
      %32 = dma.hbm_to_vmem [thread:$0]  %s0, 896, %s30, [#allocation3]
    $region5: #{tpu_custom_call.1} parent=1 // pred_fallthru
      _
    // Predicated region
    $region6: #{tpu_custom_call.1} parent=1 // pred_check
      _
    $region7: #{tpu_custom_call.1} parent=1 // pred_check_branch
      %34 = sbr.rel (0) target = $region9
    $region8: #{tpu_custom_call.1} parent=1 // pred_region
      %s36 = ssub.s32 12544, 12544
      %37 = vsyncadd [#allocation6], %s36
      %s38 = sshll.u32 [#allocation5], 4
      %s39 = int_to_ptr.vmem [resolvable:$true] %s38
      %44 = dma.hbm_to_vmem [thread:$0]  %s1, 12544, %s39, [#allocation6], 128, 128, 8
    $region9: #{tpu_custom_call.1} parent=1 // pred_fallthru
      _
    // Predicated region
    $region10: #{tpu_custom_call.1} parent=1 // pred_check
      _
    $region11: #{tpu_custom_call.1} parent=1 // pred_check_branch
      %46 = sbr.rel (0) target = $region13
    $region12: #{tpu_custom_call.1} parent=1 // pred_region
      _
    $region13: #{tpu_custom_call.1} parent=1 // pred_fallthru
      _
    // Predicated region
    $region14: #{tpu_custom_call.1} parent=1 // pred_check
      _
    $region15: #{tpu_custom_call.1} parent=1 // pred_check_branch
      %48 = sbr.rel (0) target = $region17
    $region16: #{tpu_custom_call.1} parent=1 // pred_region
      %s50 = ssub.s32 2048, 2048
      %51 = vsyncadd [#allocation6], %s50
      %s52 = sshll.u32 [#allocation7], 4
      %s53 = int_to_ptr.vmem [resolvable:$true] %s52
      %58 = dma.hbm_to_vmem [thread:$0]  %s3, 2048, %s53, [#allocation6], 64, 64, 4
    $region17: #{tpu_custom_call.1} parent=1 // pred_fallthru
      _
    // Predicated region
    $region18: #{tpu_custom_call.1} parent=1 // pred_check
      _
    $region19: #{tpu_custom_call.1} parent=1 // pred_check_branch
      %60 = sbr.rel (0) target = $region21
    $region20: #{tpu_custom_call.1} parent=1 // pred_region
      _
    $region21: #{tpu_custom_call.1} parent=1 // pred_fallthru
      _
    // Predicated region
    $region22: #{tpu_custom_call.1} parent=1 // pred_check
      _
    $region23: #{tpu_custom_call.1} parent=1 // pred_check_branch
      %62 = sbr.rel (0) target = $region25
    $region24: #{tpu_custom_call.1} parent=1 // pred_region
      %s64 = ssub.s32 1024, 1024
      %65 = vsyncadd [#allocation9], %s64
      %s66 = sshll.u32 [#allocation8], 4
      %s67 = int_to_ptr.vmem [resolvable:$true] %s66
      %72 = dma.hbm_to_vmem [thread:$0]  %s5, 1024, %s67, [#allocation9], 64, 64, 4
    $region25: #{tpu_custom_call.1} parent=1 // pred_fallthru
      _
    // Predicated region
    $region26: #{tpu_custom_call.1} parent=1 // pred_check
      _
    $region27: #{tpu_custom_call.1} parent=1 // pred_check_branch
      %74 = sbr.rel (0) target = $region29
    $region28: #{tpu_custom_call.1} parent=1 // pred_region
      _
    $region29: #{tpu_custom_call.1} parent=1 // pred_fallthru
      _
    // Predicated region
    $region30: #{tpu_custom_call.1} parent=1 // pred_check
      _
    $region31: #{tpu_custom_call.1} parent=1 // pred_check_branch
      %76 = sbr.rel (0) target = $region33
    $region32: #{tpu_custom_call.1} parent=1 // pred_region
      %s78 = ssub.s32 1024, 1024
      %79 = vsyncadd [#allocation9], %s78
      %s80 = sshll.u32 [#allocation10], 4
      %s81 = int_to_ptr.vmem [resolvable:$true] %s80
      %86 = dma.hbm_to_vmem [thread:$0]  %s7, 1024, %s81, [#allocation9], 64, 64, 4
    $region33: #{tpu_custom_call.1} parent=1 // pred_fallthru
      _
    // Predicated region
    $region34: #{tpu_custom_call.1} parent=1 // pred_check
      _
    $region35: #{tpu_custom_call.1} parent=1 // pred_check_branch
      %88 = sbr.rel (0) target = $region37
    $region36: #{tpu_custom_call.1} parent=1 // pred_region
      _
    $region37: #{tpu_custom_call.1} parent=1 // pred_fallthru
      _
    // Predicated region
    $region38: #{tpu_custom_call.1} parent=1 // pred_check
      _
    $region39: #{tpu_custom_call.1} parent=1 // pred_check_branch
      %90 = sbr.rel (0) target = $region41
    $region40: #{tpu_custom_call.1} parent=1 // pred_region
      %s92 = ssub.s32 1024, 1024
      %93 = vsyncadd [#allocation12], %s92
      %s94 = sshll.u32 [#allocation11], 4
      %s95 = int_to_ptr.vmem [resolvable:$true] %s94
      %100 = dma.hbm_to_vmem [thread:$0]  %s9, 1024, %s95, [#allocation12], 64, 64, 4
    $region41: #{tpu_custom_call.1} parent=1 // pred_fallthru
      _
    // Predicated region
    $region42: #{tpu_custom_call.1} parent=1 // pred_check
      _
    $region43: #{tpu_custom_call.1} parent=1 // pred_check_branch
      %102 = sbr.rel (0) target = $region45
    $region44: #{tpu_custom_call.1} parent=1 // pred_region
      _
    $region45: #{tpu_custom_call.1} parent=1 // pred_fallthru
      _
    // Predicated region
    $region46: #{tpu_custom_call.1} parent=1 // pred_check
      _
    $region47: #{tpu_custom_call.1} parent=1 // pred_check_branch
      %104 = sbr.rel (0) target = $region49
    $region48: #{tpu_custom_call.1} parent=1 // pred_region
      %s106 = ssub.s32 1024, 1024
      %107 = vsyncadd [#allocation12], %s106
      %s108 = sshll.u32 [#allocation13], 4
      %s109 = int_to_ptr.vmem [resolvable:$true] %s108
      %114 = dma.hbm_to_vmem [thread:$0]  %s11, 1024, %s109, [#allocation12], 64, 64, 4
    $region49: #{tpu_custom_call.1} parent=1 // pred_fallthru
      _
    // Predicated region
    $region50: #{tpu_custom_call.1} parent=1 // pred_check
      _
    $region51: #{tpu_custom_call.1} parent=1 // pred_check_branch
      %116 = sbr.rel (0) target = $region53
    $region52: #{tpu_custom_call.1} parent=1 // pred_region
      _
    $region53: #{tpu_custom_call.1} parent=1 // pred_fallthru
      _
    // Predicated region
    $region54: #{tpu_custom_call.1} parent=1 // pred_check
      _
    $region55: #{tpu_custom_call.1} parent=1 // pred_check_branch
      %118 = sbr.rel (0) target = $region57
    $region56: #{tpu_custom_call.1} parent=1 // pred_region
      %119 = dma.done [#allocation3], 896
    $region57: #{tpu_custom_call.1} parent=1 // pred_fallthru
      _
    // Predicated region
    $region58: #{tpu_custom_call.1} parent=1 // pred_check
      _
    $region59: #{tpu_custom_call.1} parent=1 // pred_check_branch
      %121 = sbr.rel (0) target = $region61
    $region60: #{tpu_custom_call.1} parent=1 // pred_region
      %122 = dma.done [#allocation6], 12544
    $region61: #{tpu_custom_call.1} parent=1 // pred_fallthru
      _
    // Predicated region
    $region62: #{tpu_custom_call.1} parent=1 // pred_check
      _
    $region63: #{tpu_custom_call.1} parent=1 // pred_check_branch
      %124 = sbr.rel (0) target = $region65
    $region64: #{tpu_custom_call.1} parent=1 // pred_region
      %125 = dma.done [#allocation6], 2048
    $region65: #{tpu_custom_call.1} parent=1 // pred_fallthru
      _
    // Predicated region
    $region66: #{tpu_custom_call.1} parent=1 // pred_check
      _
    $region67: #{tpu_custom_call.1} parent=1 // pred_check_branch
      %127 = sbr.rel (0) target = $region69
    $region68: #{tpu_custom_call.1} parent=1 // pred_region
      %128 = dma.done [#allocation9], 1024
    $region69: #{tpu_custom_call.1} parent=1 // pred_fallthru
      _
    // Predicated region
    $region70: #{tpu_custom_call.1} parent=1 // pred_check
      _
    $region71: #{tpu_custom_call.1} parent=1 // pred_check_branch
      %130 = sbr.rel (0) target = $region73
    $region72: #{tpu_custom_call.1} parent=1 // pred_region
      %131 = dma.done [#allocation9], 1024
    $region73: #{tpu_custom_call.1} parent=1 // pred_fallthru
      _
    // Predicated region
    $region74: #{tpu_custom_call.1} parent=1 // pred_check
      _
    $region75: #{tpu_custom_call.1} parent=1 // pred_check_branch
      %133 = sbr.rel (0) target = $region77
    $region76: #{tpu_custom_call.1} parent=1 // pred_region
      %134 = dma.done [#allocation12], 1024
    $region77: #{tpu_custom_call.1} parent=1 // pred_fallthru
      _
    // Predicated region
    $region78: #{tpu_custom_call.1} parent=1 // pred_check
      _
    $region79: #{tpu_custom_call.1} parent=1 // pred_check_branch
      %136 = sbr.rel (0) target = $region81
    $region80: #{tpu_custom_call.1} parent=1 // pred_region
      %137 = dma.done [#allocation12], 1024
    $region81: #{tpu_custom_call.1} parent=1 // pred_fallthru
      _
    %v139 = vld [vmem:[#allocation2] sm:$0xff]
    %v140 = vld [vmem:[#allocation2 + $0x8] sm:$0xff]
    %v141 = vld [vmem:[#allocation2 + $0x10] sm:$0xff]
    %v142 = vld [vmem:[#allocation2 + $0x18] sm:$0xff]
    %v143 = vld [vmem:[#allocation2 + $0x20] sm:$0xff]
    %v144 = vld [vmem:[#allocation2 + $0x28] sm:$0xff]
    %v145 = vld [vmem:[#allocation2 + $0x30] sm:$0xff]
    %v146 = vpack.c.bf16 %v139, %v139
    %v147 = vpack.c.bf16 %v140, %v140
    %v148 = vpack.c.bf16 %v141, %v141
    %v149 = vpack.c.bf16 %v142, %v142
    %v150 = vpack.c.bf16 %v143, %v143
    %v151 = vpack.c.bf16 %v144, %v144
    %v152 = vpack.c.bf16 %v145, %v145
    %v153 = vld [vmem:[#allocation5] sm:$0xff]
    %v154 = vld [vmem:[#allocation5 + $0x8] sm:$0xff]
    %v155 = vld [vmem:[#allocation5 + $0x10] sm:$0xff]
    %v156 = vld [vmem:[#allocation5 + $0x18] sm:$0xff]
    %v157 = vld [vmem:[#allocation5 + $0x20] sm:$0xff]
    %v158 = vld [vmem:[#allocation5 + $0x28] sm:$0xff]
    %v159 = vld [vmem:[#allocation5 + $0x30] sm:$0xff]
    %v160 = vld [vmem:[#allocation5 + $0x38] sm:$0xff]
    %v161 = vld [vmem:[#allocation5 + $0x40] sm:$0xff]
    %v162 = vld [vmem:[#allocation5 + $0x48] sm:$0xff]
    %v163 = vld [vmem:[#allocation5 + $0x50] sm:$0xff]
    %v164 = vld [vmem:[#allocation5 + $0x58] sm:$0xff]
    %v165 = vld [vmem:[#allocation5 + $0x60] sm:$0xff]
    %v166 = vld [vmem:[#allocation5 + $0x68] sm:$0xff]
    %v167 = vld [vmem:[#allocation5 + $0x70] sm:$0xff]
    %v168 = vld [vmem:[#allocation5 + $0x78] sm:$0xff]
    %v169 = vld [vmem:[#allocation5 + $0x80] sm:$0xff]
    %v170 = vld [vmem:[#allocation5 + $0x88] sm:$0xff]
    %v171 = vld [vmem:[#allocation5 + $0x90] sm:$0xff]
    %v172 = vld [vmem:[#allocation5 + $0x98] sm:$0xff]
    %v173 = vld [vmem:[#allocation5 + $0xa0] sm:$0xff]
    %v174 = vld [vmem:[#allocation5 + $0xa8] sm:$0xff]
    %v175 = vld [vmem:[#allocation5 + $0xb0] sm:$0xff]
    %v176 = vld [vmem:[#allocation5 + $0xb8] sm:$0xff]
    %v177 = vld [vmem:[#allocation5 + $0xc0] sm:$0xff]
    %v178 = vld [vmem:[#allocation5 + $0xc8] sm:$0xff]
    %v179 = vld [vmem:[#allocation5 + $0xd0] sm:$0xff]
    %v180 = vld [vmem:[#allocation5 + $0xd8] sm:$0xff]
    %v181 = vld [vmem:[#allocation5 + $0xe0] sm:$0xff]
    %v182 = vld [vmem:[#allocation5 + $0xe8] sm:$0xff]
    %v183 = vld [vmem:[#allocation5 + $0xf0] sm:$0xff]
    %v184 = vld [vmem:[#allocation5 + $0xf8] sm:$0xff]
    %v185 = vld [vmem:[#allocation5 + $0x100] sm:$0xff]
    %v186 = vld [vmem:[#allocation5 + $0x108] sm:$0xff]
    %v187 = vld [vmem:[#allocation5 + $0x110] sm:$0xff]
    %v188 = vld [vmem:[#allocation5 + $0x118] sm:$0xff]
    %v189 = vld [vmem:[#allocation5 + $0x120] sm:$0xff]
    %v190 = vld [vmem:[#allocation5 + $0x128] sm:$0xff]
    %v191 = vld [vmem:[#allocation5 + $0x130] sm:$0xff]
    %v192 = vld [vmem:[#allocation5 + $0x138] sm:$0xff]
    %v193 = vld [vmem:[#allocation5 + $0x140] sm:$0xff]
    %v194 = vld [vmem:[#allocation5 + $0x148] sm:$0xff]
    %v195 = vld [vmem:[#allocation5 + $0x150] sm:$0xff]
    %v196 = vld [vmem:[#allocation5 + $0x158] sm:$0xff]
    %v197 = vld [vmem:[#allocation5 + $0x160] sm:$0xff]
    %v198 = vld [vmem:[#allocation5 + $0x168] sm:$0xff]
    %v199 = vld [vmem:[#allocation5 + $0x170] sm:$0xff]
    %v200 = vld [vmem:[#allocation5 + $0x178] sm:$0xff]
    %v201 = vld [vmem:[#allocation5 + $0x180] sm:$0xff]
    %v202 = vld [vmem:[#allocation5 + $0x188] sm:$0xff]
    %v203 = vld [vmem:[#allocation5 + $0x190] sm:$0xff]
    %v204 = vld [vmem:[#allocation5 + $0x198] sm:$0xff]
    %v205 = vld [vmem:[#allocation5 + $0x1a0] sm:$0xff]
    %v206 = vld [vmem:[#allocation5 + $0x1a8] sm:$0xff]
    %v207 = vld [vmem:[#allocation5 + $0x1b0] sm:$0xff]
    %v208 = vld [vmem:[#allocation5 + $0x1b8] sm:$0xff]
    %v209 = vld [vmem:[#allocation5 + $0x1c0] sm:$0xff]
    %v210 = vld [vmem:[#allocation5 + $0x1c8] sm:$0xff]
    %v211 = vld [vmem:[#allocation5 + $0x1d0] sm:$0xff]
    %v212 = vld [vmem:[#allocation5 + $0x1d8] sm:$0xff]
    %v213 = vld [vmem:[#allocation5 + $0x1e0] sm:$0xff]
    %v214 = vld [vmem:[#allocation5 + $0x1e8] sm:$0xff]
    %v215 = vld [vmem:[#allocation5 + $0x1f0] sm:$0xff]
    %v216 = vld [vmem:[#allocation5 + $0x1f8] sm:$0xff]
    %v217 = vld [vmem:[#allocation5 + $0x200] sm:$0xff]
    %v218 = vld [vmem:[#allocation5 + $0x208] sm:$0xff]
    %v219 = vld [vmem:[#allocation5 + $0x210] sm:$0xff]
    %v220 = vld [vmem:[#allocation5 + $0x218] sm:$0xff]
    %v221 = vld [vmem:[#allocation5 + $0x220] sm:$0xff]
    %v222 = vld [vmem:[#allocation5 + $0x228] sm:$0xff]
    %v223 = vld [vmem:[#allocation5 + $0x230] sm:$0xff]
    %v224 = vld [vmem:[#allocation5 + $0x238] sm:$0xff]
    %v225 = vld [vmem:[#allocation5 + $0x240] sm:$0xff]
    %v226 = vld [vmem:[#allocation5 + $0x248] sm:$0xff]
    %v227 = vld [vmem:[#allocation5 + $0x250] sm:$0xff]
    %v228 = vld [vmem:[#allocation5 + $0x258] sm:$0xff]
    %v229 = vld [vmem:[#allocation5 + $0x260] sm:$0xff]
    %v230 = vld [vmem:[#allocation5 + $0x268] sm:$0xff]
    %v231 = vld [vmem:[#allocation5 + $0x270] sm:$0xff]
    %v232 = vld [vmem:[#allocation5 + $0x278] sm:$0xff]
    %v233 = vld [vmem:[#allocation5 + $0x280] sm:$0xff]
    %v234 = vld [vmem:[#allocation5 + $0x288] sm:$0xff]
    %v235 = vld [vmem:[#allocation5 + $0x290] sm:$0xff]
    %v236 = vld [vmem:[#allocation5 + $0x298] sm:$0xff]
    %v237 = vld [vmem:[#allocation5 + $0x2a0] sm:$0xff]
    %v238 = vld [vmem:[#allocation5 + $0x2a8] sm:$0xff]
    %v239 = vld [vmem:[#allocation5 + $0x2b0] sm:$0xff]
    %v240 = vld [vmem:[#allocation5 + $0x2b8] sm:$0xff]
    %v241 = vld [vmem:[#allocation5 + $0x2c0] sm:$0xff]
    %v242 = vld [vmem:[#allocation5 + $0x2c8] sm:$0xff]
    %v243 = vld [vmem:[#allocation5 + $0x2d0] sm:$0xff]
    %v244 = vld [vmem:[#allocation5 + $0x2d8] sm:$0xff]
    %v245 = vld [vmem:[#allocation5 + $0x2e0] sm:$0xff]
    %v246 = vld [vmem:[#allocation5 + $0x2e8] sm:$0xff]
    %v247 = vld [vmem:[#allocation5 + $0x2f0] sm:$0xff]
    %v248 = vld [vmem:[#allocation5 + $0x2f8] sm:$0xff]
    %v249 = vld [vmem:[#allocation5 + $0x300] sm:$0xff]
    %v250 = vld [vmem:[#allocation5 + $0x308] sm:$0xff]
    %v251 = vld [vmem:[%s2] sm:$0x3]
    %v253 = vlaneseq
    %v254 = vshrl.u32 %v253, 7
    %v255 = vsub.s32 0, %v254
    %v256 = vrot.slane %v251, %v255
    %v257 = vlaneseq
    %v258 = vshrl.u32 %v257, 7
    %v259 = vsub.s32 1, %v258
    %v260 = vrot.slane %v251, %v259
    %v361 = vunpack.c.l.b16 %v153
    %v362 = vunpack.c.h.b16 %v153
    %v363 = vunpack.c.l.b16 %v154
    %v364 = vunpack.c.h.b16 %v154
    %v365 = vunpack.c.l.b16 %v155
    %v366 = vunpack.c.h.b16 %v155
    %v367 = vunpack.c.l.b16 %v156
    %v368 = vunpack.c.h.b16 %v156
    %v369 = vunpack.c.l.b16 %v157
    %v370 = vunpack.c.h.b16 %v157
    %v371 = vunpack.c.l.b16 %v158
    %v372 = vunpack.c.h.b16 %v158
    %v373 = vunpack.c.l.b16 %v159
    %v374 = vunpack.c.h.b16 %v159
    %v375 = vunpack.c.l.b16 %v160
    %v376 = vunpack.c.h.b16 %v160
    %v377 = vunpack.c.l.b16 %v161
    %v378 = vunpack.c.h.b16 %v161
    %v379 = vunpack.c.l.b16 %v162
    %v380 = vunpack.c.h.b16 %v162
    %v381 = vunpack.c.l.b16 %v163
    %v382 = vunpack.c.h.b16 %v163
    %v383 = vunpack.c.l.b16 %v164
    %v384 = vunpack.c.h.b16 %v164
    %v385 = vunpack.c.l.b16 %v165
    %v386 = vunpack.c.h.b16 %v165
    %v387 = vunpack.c.l.b16 %v166
    %v388 = vunpack.c.h.b16 %v166
    %v389 = vunpack.c.l.b16 %v167
    %v390 = vunpack.c.h.b16 %v167
    %v391 = vunpack.c.l.b16 %v168
    %v392 = vunpack.c.h.b16 %v168
    %v393 = vunpack.c.l.b16 %v169
    %v394 = vunpack.c.h.b16 %v169
    %v395 = vunpack.c.l.b16 %v170
    %v396 = vunpack.c.h.b16 %v170
    %v397 = vunpack.c.l.b16 %v171
    %v398 = vunpack.c.h.b16 %v171
    %v399 = vunpack.c.l.b16 %v172
    %v400 = vunpack.c.h.b16 %v172
    %v401 = vunpack.c.l.b16 %v173
    %v402 = vunpack.c.h.b16 %v173
    %v403 = vunpack.c.l.b16 %v174
    %v404 = vunpack.c.h.b16 %v174
    %v405 = vunpack.c.l.b16 %v175
    %v406 = vunpack.c.h.b16 %v175
    %v407 = vunpack.c.l.b16 %v176
    %v408 = vunpack.c.h.b16 %v176
    %v409 = vunpack.c.l.b16 %v177
    %v410 = vunpack.c.h.b16 %v177
    %v411 = vunpack.c.l.b16 %v178
    %v412 = vunpack.c.h.b16 %v178
    %v413 = vunpack.c.l.b16 %v179
    %v414 = vunpack.c.h.b16 %v179
    %v415 = vunpack.c.l.b16 %v180
    %v416 = vunpack.c.h.b16 %v180
    %v417 = vunpack.c.l.b16 %v181
    %v418 = vunpack.c.h.b16 %v181
    %v419 = vunpack.c.l.b16 %v182
    %v420 = vunpack.c.h.b16 %v182
    %v421 = vunpack.c.l.b16 %v183
    %v422 = vunpack.c.h.b16 %v183
    %v423 = vunpack.c.l.b16 %v184
    %v424 = vunpack.c.h.b16 %v184
    %v425 = vunpack.c.l.b16 %v185
    %v426 = vunpack.c.h.b16 %v185
    %v427 = vunpack.c.l.b16 %v186
    %v428 = vunpack.c.h.b16 %v186
    %v429 = vunpack.c.l.b16 %v187
    %v430 = vunpack.c.h.b16 %v187
    %v431 = vunpack.c.l.b16 %v188
    %v432 = vunpack.c.h.b16 %v188
    %v433 = vunpack.c.l.b16 %v189
    %v434 = vunpack.c.h.b16 %v189
    %v435 = vunpack.c.l.b16 %v190
    %v436 = vunpack.c.h.b16 %v190
    %v437 = vunpack.c.l.b16 %v191
    %v438 = vunpack.c.h.b16 %v191
    %v439 = vunpack.c.l.b16 %v192
    %v440 = vunpack.c.h.b16 %v192
    %v441 = vunpack.c.l.b16 %v193
    %v442 = vunpack.c.h.b16 %v193
    %v443 = vunpack.c.l.b16 %v194
    %v444 = vunpack.c.h.b16 %v194
    %v445 = vunpack.c.l.b16 %v195
    %v446 = vunpack.c.h.b16 %v195
    %v447 = vunpack.c.l.b16 %v196
    %v448 = vunpack.c.h.b16 %v196
    %v449 = vunpack.c.l.b16 %v197
    %v450 = vunpack.c.h.b16 %v197
    %v451 = vunpack.c.l.b16 %v198
    %v452 = vunpack.c.h.b16 %v198
    %v453 = vunpack.c.l.b16 %v199
    %v454 = vunpack.c.h.b16 %v199
    %v455 = vunpack.c.l.b16 %v200
    %v456 = vunpack.c.h.b16 %v200
    %v457 = vunpack.c.l.b16 %v201
    %v458 = vunpack.c.h.b16 %v201
    %v459 = vunpack.c.l.b16 %v202
    %v460 = vunpack.c.h.b16 %v202
    %v461 = vunpack.c.l.b16 %v203
    %v462 = vunpack.c.h.b16 %v203
    %v463 = vunpack.c.l.b16 %v204
    %v464 = vunpack.c.h.b16 %v204
    %v465 = vunpack.c.l.b16 %v205
    %v466 = vunpack.c.h.b16 %v205
    %v467 = vunpack.c.l.b16 %v206
    %v468 = vunpack.c.h.b16 %v206
    %v469 = vunpack.c.l.b16 %v207
    %v470 = vunpack.c.h.b16 %v207
    %v471 = vunpack.c.l.b16 %v208
    %v472 = vunpack.c.h.b16 %v208
    %v473 = vunpack.c.l.b16 %v209
    %v474 = vunpack.c.h.b16 %v209
    %v475 = vunpack.c.l.b16 %v210
    %v476 = vunpack.c.h.b16 %v210
    %v477 = vunpack.c.l.b16 %v211
    %v478 = vunpack.c.h.b16 %v211
    %v479 = vunpack.c.l.b16 %v212
    %v480 = vunpack.c.h.b16 %v212
    %v481 = vunpack.c.l.b16 %v213
    %v482 = vunpack.c.h.b16 %v213
    %v483 = vunpack.c.l.b16 %v214
    %v484 = vunpack.c.h.b16 %v214
    %v485 = vunpack.c.l.b16 %v215
    %v486 = vunpack.c.h.b16 %v215
    %v487 = vunpack.c.l.b16 %v216
    %v488 = vunpack.c.h.b16 %v216
    %v489 = vunpack.c.l.b16 %v217
    %v490 = vunpack.c.h.b16 %v217
    %v491 = vunpack.c.l.b16 %v218
    %v492 = vunpack.c.h.b16 %v218
    %v493 = vunpack.c.l.b16 %v219
    %v494 = vunpack.c.h.b16 %v219
    %v495 = vunpack.c.l.b16 %v220
    %v496 = vunpack.c.h.b16 %v220
    %v497 = vunpack.c.l.b16 %v221
    %v498 = vunpack.c.h.b16 %v221
    %v499 = vunpack.c.l.b16 %v222
    %v500 = vunpack.c.h.b16 %v222
    %v501 = vunpack.c.l.b16 %v223
    %v502 = vunpack.c.h.b16 %v223
    %v503 = vunpack.c.l.b16 %v224
    %v504 = vunpack.c.h.b16 %v224
    %v505 = vunpack.c.l.b16 %v225
    %v506 = vunpack.c.h.b16 %v225
    %v507 = vunpack.c.l.b16 %v226
    %v508 = vunpack.c.h.b16 %v226
    %v509 = vunpack.c.l.b16 %v227
    %v510 = vunpack.c.h.b16 %v227
    %v511 = vunpack.c.l.b16 %v228
    %v512 = vunpack.c.h.b16 %v228
    %v513 = vunpack.c.l.b16 %v229
    %v514 = vunpack.c.h.b16 %v229
    %v515 = vunpack.c.l.b16 %v230
    %v516 = vunpack.c.h.b16 %v230
    %v517 = vunpack.c.l.b16 %v231
    %v518 = vunpack.c.h.b16 %v231
    %v519 = vunpack.c.l.b16 %v232
    %v520 = vunpack.c.h.b16 %v232
    %v521 = vunpack.c.l.b16 %v233
    %v522 = vunpack.c.h.b16 %v233
    %v523 = vunpack.c.l.b16 %v234
    %v524 = vunpack.c.h.b16 %v234
    %v525 = vunpack.c.l.b16 %v235
    %v526 = vunpack.c.h.b16 %v235
    %v527 = vunpack.c.l.b16 %v236
    %v528 = vunpack.c.h.b16 %v236
    %v529 = vunpack.c.l.b16 %v237
    %v530 = vunpack.c.h.b16 %v237
    %v531 = vunpack.c.l.b16 %v238
    %v532 = vunpack.c.h.b16 %v238
    %v533 = vunpack.c.l.b16 %v239
    %v534 = vunpack.c.h.b16 %v239
    %v535 = vunpack.c.l.b16 %v240
    %v536 = vunpack.c.h.b16 %v240
    %v537 = vunpack.c.l.b16 %v241
    %v538 = vunpack.c.h.b16 %v241
    %v539 = vunpack.c.l.b16 %v242
    %v540 = vunpack.c.h.b16 %v242
    %v541 = vunpack.c.l.b16 %v243
    %v542 = vunpack.c.h.b16 %v243
    %v543 = vunpack.c.l.b16 %v244
    %v544 = vunpack.c.h.b16 %v244
    %v545 = vunpack.c.l.b16 %v245
    %v546 = vunpack.c.h.b16 %v245
    %v547 = vunpack.c.l.b16 %v246
    %v548 = vunpack.c.h.b16 %v246
    %v549 = vunpack.c.l.b16 %v247
    %v550 = vunpack.c.h.b16 %v247
    %v551 = vunpack.c.l.b16 %v248
    %v552 = vunpack.c.h.b16 %v248
    %v553 = vunpack.c.l.b16 %v249
    %v554 = vunpack.c.h.b16 %v249
    %v555 = vunpack.c.l.b16 %v250
    %v556 = vunpack.c.h.b16 %v250
    %v557 = vpack.c.b16 %v363, %v361
    %v558 = vpack.c.b16 %v364, %v362
    %v559 = vpack.c.b16 %v367, %v365
    %v560 = vpack.c.b16 %v368, %v366
    %v561 = vpack.c.b16 %v371, %v369
    %v562 = vpack.c.b16 %v372, %v370
    %v563 = vpack.c.b16 %v375, %v373
    %v564 = vpack.c.b16 %v376, %v374
    %v565 = vpack.c.b16 %v379, %v377
    %v566 = vpack.c.b16 %v380, %v378
    %v567 = vpack.c.b16 %v383, %v381
    %v568 = vpack.c.b16 %v384, %v382
    %v569 = vpack.c.b16 %v387, %v385
    %v570 = vpack.c.b16 %v388, %v386
    %v571 = vpack.c.b16 %v391, %v389
    %v572 = vpack.c.b16 %v392, %v390
    %v573 = vpack.c.b16 %v395, %v393
    %v574 = vpack.c.b16 %v396, %v394
    %v575 = vpack.c.b16 %v399, %v397
    %v576 = vpack.c.b16 %v400, %v398
    %v577 = vpack.c.b16 %v403, %v401
    %v578 = vpack.c.b16 %v404, %v402
    %v579 = vpack.c.b16 %v407, %v405
    %v580 = vpack.c.b16 %v408, %v406
    %v581 = vpack.c.b16 %v411, %v409
    %v582 = vpack.c.b16 %v412, %v410
    %v583 = vpack.c.b16 %v415, %v413
    %v584 = vpack.c.b16 %v416, %v414
    %v585 = vpack.c.b16 %v419, %v417
    %v586 = vpack.c.b16 %v420, %v418
    %v587 = vpack.c.b16 %v423, %v421
    %v588 = vpack.c.b16 %v424, %v422
    %v589 = vpack.c.b16 %v427, %v425
    %v590 = vpack.c.b16 %v428, %v426
    %v591 = vpack.c.b16 %v431, %v429
    %v592 = vpack.c.b16 %v432, %v430
    %v593 = vpack.c.b16 %v435, %v433
    %v594 = vpack.c.b16 %v436, %v434
    %v595 = vpack.c.b16 %v439, %v437
    %v596 = vpack.c.b16 %v440, %v438
    %v597 = vpack.c.b16 %v443, %v441
    %v598 = vpack.c.b16 %v444, %v442
    %v599 = vpack.c.b16 %v447, %v445
    %v600 = vpack.c.b16 %v448, %v446
    %v601 = vpack.c.b16 %v451, %v449
    %v602 = vpack.c.b16 %v452, %v450
    %v603 = vpack.c.b16 %v455, %v453
    %v604 = vpack.c.b16 %v456, %v454
    %v605 = vpack.c.b16 %v459, %v457
    %v606 = vpack.c.b16 %v460, %v458
    %v607 = vpack.c.b16 %v463, %v461
    %v608 = vpack.c.b16 %v464, %v462
    %v609 = vpack.c.b16 %v467, %v465
    %v610 = vpack.c.b16 %v468, %v466
    %v611 = vpack.c.b16 %v471, %v469
    %v612 = vpack.c.b16 %v472, %v470
    %v613 = vpack.c.b16 %v475, %v473
    %v614 = vpack.c.b16 %v476, %v474
    %v615 = vpack.c.b16 %v479, %v477
    %v616 = vpack.c.b16 %v480, %v478
    %v617 = vpack.c.b16 %v483, %v481
    %v618 = vpack.c.b16 %v484, %v482
    %v619 = vpack.c.b16 %v487, %v485
    %v620 = vpack.c.b16 %v488, %v486
    %v621 = vpack.c.b16 %v491, %v489
    %v622 = vpack.c.b16 %v492, %v490
    %v623 = vpack.c.b16 %v495, %v493
    %v624 = vpack.c.b16 %v496, %v494
    %v625 = vpack.c.b16 %v499, %v497
    %v626 = vpack.c.b16 %v500, %v498
    %v627 = vpack.c.b16 %v503, %v501
    %v628 = vpack.c.b16 %v504, %v502
    %v629 = vpack.c.b16 %v507, %v505
    %v630 = vpack.c.b16 %v508, %v506
    %v631 = vpack.c.b16 %v511, %v509
    %v632 = vpack.c.b16 %v512, %v510
    %v633 = vpack.c.b16 %v515, %v513
    %v634 = vpack.c.b16 %v516, %v514
    %v635 = vpack.c.b16 %v519, %v517
    %v636 = vpack.c.b16 %v520, %v518
    %v637 = vpack.c.b16 %v523, %v521
    %v638 = vpack.c.b16 %v524, %v522
    %v639 = vpack.c.b16 %v527, %v525
    %v640 = vpack.c.b16 %v528, %v526
    %v641 = vpack.c.b16 %v531, %v529
    %v642 = vpack.c.b16 %v532, %v530
    %v643 = vpack.c.b16 %v535, %v533
    %v644 = vpack.c.b16 %v536, %v534
    %v645 = vpack.c.b16 %v539, %v537
    %v646 = vpack.c.b16 %v540, %v538
    %v647 = vpack.c.b16 %v543, %v541
    %v648 = vpack.c.b16 %v544, %v542
    %v649 = vpack.c.b16 %v547, %v545
    %v650 = vpack.c.b16 %v548, %v546
    %v651 = vpack.c.b16 %v551, %v549
    %v652 = vpack.c.b16 %v552, %v550
    %v653 = vpack.c.b16 %v555, %v553
    %v654 = vpack.c.b16 %v556, %v554
    %vm753 = vcmask 130048
    %v755 = vsel %vm753, %v152, 0
    %757 = vmatprep.subr.bf16.mxu0 %v558
    %758 = vmatpush1.bf16.msra.mxu0 %v557
    %759 = vmatprep.subr.bf16.mxu0 %v560
    %760 = vmatpush1.bf16.msra.mxu0 %v559
    %761 = vmatprep.subr.bf16.mxu0 %v562
    %762 = vmatpush1.bf16.msra.mxu0 %v561
    %763 = vmatprep.subr.bf16.mxu0 %v564
    %764 = vmatpush1.bf16.msra.mxu0 %v563
    %765 = vmatprep.subr.bf16.mxu0 %v566
    %766 = vmatpush1.bf16.msra.mxu0 %v565
    %767 = vmatprep.subr.bf16.mxu0 %v568
    %768 = vmatpush1.bf16.msra.mxu0 %v567
    %769 = vmatprep.subr.bf16.mxu0 %v570
    %770 = vmatpush1.bf16.msra.mxu0 %v569
    %771 = vmatprep.subr.bf16.mxu0 %v572
    %772 = vmatpush1.bf16.msra.mxu0 %v571
    %773 = vmatprep.subr.bf16.mxu0 %v574
    %774 = vmatpush1.bf16.msra.mxu0 %v573
    %775 = vmatprep.subr.bf16.mxu0 %v576
    %776 = vmatpush1.bf16.msra.mxu0 %v575
    %777 = vmatprep.subr.bf16.mxu0 %v578
    %778 = vmatpush1.bf16.msra.mxu0 %v577
    %779 = vmatprep.subr.bf16.mxu0 %v580
    %780 = vmatpush1.bf16.msra.mxu0 %v579
    %781 = vmatprep.subr.bf16.mxu0 %v582
    %782 = vmatpush1.bf16.msra.mxu0 %v581
    %783 = vmatprep.subr.bf16.mxu0 %v584
    %784 = vmatpush1.bf16.msra.mxu0 %v583
    %785 = vmatprep.subr.bf16.mxu0 %v586
    %786 = vmatpush1.bf16.msra.mxu0 %v585
    %787 = vmatprep.subr.bf16.mxu0 %v588
    %788 = vmatpush1.bf16.msra.mxu0 %v587
    %789 = vmatprep.mubr.bf16.mxu0 %v147
    %790 = vmatmul.mubr.bf16.gmra.mrb[0].mxu0 %v146
    %v791 = vpop.f32.mrb[0].mxu0
    %v792 = vadd.f32 %v256, %v791
    %v793 = vpop.f32.mrb[0].mxu0
    %v794 = vadd.f32 %v260, %v793
    %v795 = vpop.f32.mrb[0].mxu0
    %v796 = vpop.f32.mrb[0].mxu0
    %797 = vdwg.mxu0
    %798 = vmatprep.subr.bf16.mxu0 %v590
    %799 = vmatpush1.bf16.msra.mxu0 %v589
    %800 = vmatprep.subr.bf16.mxu0 %v592
    %801 = vmatpush1.bf16.msra.mxu0 %v591
    %802 = vmatprep.subr.bf16.mxu0 %v594
    %803 = vmatpush1.bf16.msra.mxu0 %v593
    %804 = vmatprep.subr.bf16.mxu0 %v596
    %805 = vmatpush1.bf16.msra.mxu0 %v595
    %806 = vmatprep.subr.bf16.mxu0 %v598
    %807 = vmatpush1.bf16.msra.mxu0 %v597
    %808 = vmatprep.subr.bf16.mxu0 %v600
    %809 = vmatpush1.bf16.msra.mxu0 %v599
    %810 = vmatprep.subr.bf16.mxu0 %v602
    %811 = vmatpush1.bf16.msra.mxu0 %v601
    %812 = vmatprep.subr.bf16.mxu0 %v604
    %813 = vmatpush1.bf16.msra.mxu0 %v603
    %814 = vmatprep.subr.bf16.mxu0 %v606
    %815 = vmatpush1.bf16.msra.mxu0 %v605
    %816 = vmatprep.subr.bf16.mxu0 %v608
    %817 = vmatpush1.bf16.msra.mxu0 %v607
    %818 = vmatprep.subr.bf16.mxu0 %v610
    %819 = vmatpush1.bf16.msra.mxu0 %v609
    %820 = vmatprep.subr.bf16.mxu0 %v612
    %821 = vmatpush1.bf16.msra.mxu0 %v611
    %822 = vmatprep.subr.bf16.mxu0 %v614
    %823 = vmatpush1.bf16.msra.mxu0 %v613
    %824 = vmatprep.subr.bf16.mxu0 %v616
    %825 = vmatpush1.bf16.msra.mxu0 %v615
    %826 = vmatprep.subr.bf16.mxu0 %v618
    %827 = vmatpush1.bf16.msra.mxu0 %v617
    %828 = vmatprep.subr.bf16.mxu0 %v620
    %829 = vmatpush1.bf16.msra.mxu0 %v619
    %830 = vmatprep.mubr.bf16.mxu0 %v149
    %831 = vmatmul.mubr.bf16.gmra.mrb[0].mxu0 %v148
    %v832 = vpop.f32.mrb[0].mxu0
    %v833 = vadd.f32 %v792, %v832
    %v834 = vpop.f32.mrb[0].mxu0
    %v835 = vadd.f32 %v794, %v834
    %v836 = vpop.f32.mrb[0].mxu0
    %v837 = vpop.f32.mrb[0].mxu0
    %838 = vdwg.mxu0
    %839 = vmatprep.subr.bf16.mxu0 %v622
    %840 = vmatpush1.bf16.msra.mxu0 %v621
    %841 = vmatprep.subr.bf16.mxu0 %v624
    %842 = vmatpush1.bf16.msra.mxu0 %v623
    %843 = vmatprep.subr.bf16.mxu0 %v626
    %844 = vmatpush1.bf16.msra.mxu0 %v625
    %845 = vmatprep.subr.bf16.mxu0 %v628
    %846 = vmatpush1.bf16.msra.mxu0 %v627
    %847 = vmatprep.subr.bf16.mxu0 %v630
    %848 = vmatpush1.bf16.msra.mxu0 %v629
    %849 = vmatprep.subr.bf16.mxu0 %v632
    %850 = vmatpush1.bf16.msra.mxu0 %v631
    %851 = vmatprep.subr.bf16.mxu0 %v634
    %852 = vmatpush1.bf16.msra.mxu0 %v633
    %853 = vmatprep.subr.bf16.mxu0 %v636
    %854 = vmatpush1.bf16.msra.mxu0 %v635
    %855 = vmatprep.subr.bf16.mxu0 %v638
    %856 = vmatpush1.bf16.msra.mxu0 %v637
    %857 = vmatprep.subr.bf16.mxu0 %v640
    %858 = vmatpush1.bf16.msra.mxu0 %v639
    %859 = vmatprep.subr.bf16.mxu0 %v642
    %860 = vmatpush1.bf16.msra.mxu0 %v641
    %861 = vmatprep.subr.bf16.mxu0 %v644
    %862 = vmatpush1.bf16.msra.mxu0 %v643
    %863 = vmatprep.subr.bf16.mxu0 %v646
    %864 = vmatpush1.bf16.msra.mxu0 %v645
    %865 = vmatprep.subr.bf16.mxu0 %v648
    %866 = vmatpush1.bf16.msra.mxu0 %v647
    %867 = vmatprep.subr.bf16.mxu0 %v650
    %868 = vmatpush1.bf16.msra.mxu0 %v649
    %869 = vmatprep.subr.bf16.mxu0 %v652
    %870 = vmatpush1.bf16.msra.mxu0 %v651
    %871 = vmatprep.mubr.bf16.mxu0 %v151
    %872 = vmatmul.mubr.bf16.gmra.mrb[0].mxu0 %v150
    %v873 = vpop.f32.mrb[0].mxu0
    %v874 = vadd.f32 %v833, %v873
    %v875 = vpop.f32.mrb[0].mxu0
    %v876 = vadd.f32 %v835, %v875
    %v877 = vpop.f32.mrb[0].mxu0
    %v878 = vpop.f32.mrb[0].mxu0
    %879 = vdwg.mxu0
    %880 = vmatprep.subr.bf16.mxu0 %v654
    %881 = vmatpush1.bf16.msra.mxu0 %v653
    %882 = vmatprep.subr.bf16.mxu0 0
    %883 = vmatpush1.bf16.msra.mxu0 0
    %884 = vmatprep.subr.bf16.mxu0 0
    %885 = vmatpush1.bf16.msra.mxu0 0
    %886 = vmatprep.subr.bf16.mxu0 0
    %887 = vmatpush1.bf16.msra.mxu0 0
    %888 = vmatprep.subr.bf16.mxu0 0
    %889 = vmatpush1.bf16.msra.mxu0 0
    %890 = vmatprep.subr.bf16.mxu0 0
    %891 = vmatpush1.bf16.msra.mxu0 0
    %892 = vmatprep.subr.bf16.mxu0 0
    %893 = vmatpush1.bf16.msra.mxu0 0
    %894 = vmatprep.subr.bf16.mxu0 0
    %895 = vmatpush1.bf16.msra.mxu0 0
    %896 = vmatprep.subr.bf16.mxu0 0
    %897 = vmatpush1.bf16.msra.mxu0 0
    %898 = vmatprep.subr.bf16.mxu0 0
    %899 = vmatpush1.bf16.msra.mxu0 0
    %900 = vmatprep.subr.bf16.mxu0 0
    %901 = vmatpush1.bf16.msra.mxu0 0
    %902 = vmatprep.subr.bf16.mxu0 0
    %903 = vmatpush1.bf16.msra.mxu0 0
    %904 = vmatprep.subr.bf16.mxu0 0
    %905 = vmatpush1.bf16.msra.mxu0 0
    %906 = vmatprep.subr.bf16.mxu0 0
    %907 = vmatpush1.bf16.msra.mxu0 0
    %908 = vmatprep.subr.bf16.mxu0 0
    %909 = vmatpush1.bf16.msra.mxu0 0
    %910 = vmatprep.subr.bf16.mxu0 0
    %911 = vmatpush1.bf16.msra.mxu0 0
    %912 = vmatprep.mubr.bf16.mxu0 0
    %913 = vmatmul.mubr.bf16.gmra.mrb[0].mxu0 %v755
    %v914 = vpop.f32.mrb[0].mxu0
    %v915 = vadd.f32 %v874, %v914
    %v916 = vpop.f32.mrb[0].mxu0
    %v917 = vadd.f32 %v876, %v916
    %v918 = vpop.f32.mrb[0].mxu0
    %v919 = vpop.f32.mrb[0].mxu0
    %920 = vdwg.mxu0
    %v921 = vmax.f32 %v915, 0.0
    %v922 = vmax.f32 %v917, 0.0
    %v923 = vpack.c.bf16 %v921, %v921
    %v924 = vpack.c.bf16 %v922, %v922
    %v925 = vld [vmem:[#allocation7] sm:$0xf]
    %v926 = vld [vmem:[#allocation7 + $0x4] sm:$0xf]
    %v927 = vld [vmem:[#allocation7 + $0x8] sm:$0xf]
    %v928 = vld [vmem:[#allocation7 + $0xc] sm:$0xf]
    %v929 = vld [vmem:[#allocation7 + $0x10] sm:$0xf]
    %v930 = vld [vmem:[#allocation7 + $0x14] sm:$0xf]
    %v931 = vld [vmem:[#allocation7 + $0x18] sm:$0xf]
    %v932 = vld [vmem:[#allocation7 + $0x1c] sm:$0xf]
    %v933 = vld [vmem:[#allocation7 + $0x20] sm:$0xf]
    %v934 = vld [vmem:[#allocation7 + $0x24] sm:$0xf]
    %v935 = vld [vmem:[#allocation7 + $0x28] sm:$0xf]
    %v936 = vld [vmem:[#allocation7 + $0x2c] sm:$0xf]
    %v937 = vld [vmem:[#allocation7 + $0x30] sm:$0xf]
    %v938 = vld [vmem:[#allocation7 + $0x34] sm:$0xf]
    %v939 = vld [vmem:[#allocation7 + $0x38] sm:$0xf]
    %v940 = vld [vmem:[#allocation7 + $0x3c] sm:$0xf]
    %v941 = vld [vmem:[#allocation7 + $0x40] sm:$0xf]
    %v942 = vld [vmem:[#allocation7 + $0x44] sm:$0xf]
    %v943 = vld [vmem:[#allocation7 + $0x48] sm:$0xf]
    %v944 = vld [vmem:[#allocation7 + $0x4c] sm:$0xf]
    %v945 = vld [vmem:[#allocation7 + $0x50] sm:$0xf]
    %v946 = vld [vmem:[#allocation7 + $0x54] sm:$0xf]
    %v947 = vld [vmem:[#allocation7 + $0x58] sm:$0xf]
    %v948 = vld [vmem:[#allocation7 + $0x5c] sm:$0xf]
    %v949 = vld [vmem:[#allocation7 + $0x60] sm:$0xf]
    %v950 = vld [vmem:[#allocation7 + $0x64] sm:$0xf]
    %v951 = vld [vmem:[#allocation7 + $0x68] sm:$0xf]
    %v952 = vld [vmem:[#allocation7 + $0x6c] sm:$0xf]
    %v953 = vld [vmem:[#allocation7 + $0x70] sm:$0xf]
    %v954 = vld [vmem:[#allocation7 + $0x74] sm:$0xf]
    %v955 = vld [vmem:[#allocation7 + $0x78] sm:$0xf]
    %v956 = vld [vmem:[#allocation7 + $0x7c] sm:$0xf]
    %v957 = vld [vmem:[%s4] sm:$0x1]
    %v959 = vlaneseq
    %v960 = vshrl.u32 %v959, 7
    %v961 = vsub.s32 0, %v960
    %v962 = vrot.slane %v957, %v961
    %v996 = vunpack.c.l.b16 %v925
    %v997 = vunpack.c.l.b16 %v926
    %v998 = vunpack.c.l.b16 %v927
    %v999 = vunpack.c.l.b16 %v928
    %v1000 = vunpack.c.l.b16 %v929
    %v1001 = vunpack.c.l.b16 %v930
    %v1002 = vunpack.c.l.b16 %v931
    %v1003 = vunpack.c.l.b16 %v932
    %v1004 = vunpack.c.l.b16 %v933
    %v1005 = vunpack.c.l.b16 %v934
    %v1006 = vunpack.c.l.b16 %v935
    %v1007 = vunpack.c.l.b16 %v936
    %v1008 = vunpack.c.l.b16 %v937
    %v1009 = vunpack.c.l.b16 %v938
    %v1010 = vunpack.c.l.b16 %v939
    %v1011 = vunpack.c.l.b16 %v940
    %v1012 = vunpack.c.l.b16 %v941
    %v1013 = vunpack.c.l.b16 %v942
    %v1014 = vunpack.c.l.b16 %v943
    %v1015 = vunpack.c.l.b16 %v944
    %v1016 = vunpack.c.l.b16 %v945
    %v1017 = vunpack.c.l.b16 %v946
    %v1018 = vunpack.c.l.b16 %v947
    %v1019 = vunpack.c.l.b16 %v948
    %v1020 = vunpack.c.l.b16 %v949
    %v1021 = vunpack.c.l.b16 %v950
    %v1022 = vunpack.c.l.b16 %v951
    %v1023 = vunpack.c.l.b16 %v952
    %v1024 = vunpack.c.l.b16 %v953
    %v1025 = vunpack.c.l.b16 %v954
    %v1026 = vunpack.c.l.b16 %v955
    %v1027 = vunpack.c.l.b16 %v956
    %v1028 = vpack.c.b16 %v997, %v996
    %v1029 = vpack.c.b16 %v999, %v998
    %v1030 = vpack.c.b16 %v1001, %v1000
    %v1031 = vpack.c.b16 %v1003, %v1002
    %v1032 = vpack.c.b16 %v1005, %v1004
    %v1033 = vpack.c.b16 %v1007, %v1006
    %v1034 = vpack.c.b16 %v1009, %v1008
    %v1035 = vpack.c.b16 %v1011, %v1010
    %v1036 = vpack.c.b16 %v1013, %v1012
    %v1037 = vpack.c.b16 %v1015, %v1014
    %v1038 = vpack.c.b16 %v1017, %v1016
    %v1039 = vpack.c.b16 %v1019, %v1018
    %v1040 = vpack.c.b16 %v1021, %v1020
    %v1041 = vpack.c.b16 %v1023, %v1022
    %v1042 = vpack.c.b16 %v1025, %v1024
    %v1043 = vpack.c.b16 %v1027, %v1026
    %1060 = vmatprep.subr.bf16.mxu0 0
    %1061 = vmatpush1.bf16.msra.mxu0 %v1028
    %1062 = vmatprep.subr.bf16.mxu0 0
    %1063 = vmatpush1.bf16.msra.mxu0 %v1029
    %1064 = vmatprep.subr.bf16.mxu0 0
    %1065 = vmatpush1.bf16.msra.mxu0 %v1030
    %1066 = vmatprep.subr.bf16.mxu0 0
    %1067 = vmatpush1.bf16.msra.mxu0 %v1031
    %1068 = vmatprep.subr.bf16.mxu0 0
    %1069 = vmatpush1.bf16.msra.mxu0 %v1032
    %1070 = vmatprep.subr.bf16.mxu0 0
    %1071 = vmatpush1.bf16.msra.mxu0 %v1033
    %1072 = vmatprep.subr.bf16.mxu0 0
    %1073 = vmatpush1.bf16.msra.mxu0 %v1034
    %1074 = vmatprep.subr.bf16.mxu0 0
    %1075 = vmatpush1.bf16.msra.mxu0 %v1035
    %1076 = vmatprep.subr.bf16.mxu0 0
    %1077 = vmatpush1.bf16.msra.mxu0 %v1036
    %1078 = vmatprep.subr.bf16.mxu0 0
    %1079 = vmatpush1.bf16.msra.mxu0 %v1037
    %1080 = vmatprep.subr.bf16.mxu0 0
    %1081 = vmatpush1.bf16.msra.mxu0 %v1038
    %1082 = vmatprep.subr.bf16.mxu0 0
    %1083 = vmatpush1.bf16.msra.mxu0 %v1039
    %1084 = vmatprep.subr.bf16.mxu0 0
    %1085 = vmatpush1.bf16.msra.mxu0 %v1040
    %1086 = vmatprep.subr.bf16.mxu0 0
    %1087 = vmatpush1.bf16.msra.mxu0 %v1041
    %1088 = vmatprep.subr.bf16.mxu0 0
    %1089 = vmatpush1.bf16.msra.mxu0 %v1042
    %1090 = vmatprep.subr.bf16.mxu0 0
    %1091 = vmatpush1.bf16.msra.mxu0 %v1043
    %1092 = vmatprep.mubr.bf16.mxu0 %v924
    %1093 = vmatmul.mubr.bf16.gmra.mrb[0].mxu0 %v923
    %v1094 = vpop.f32.mrb[0].mxu0
    %v1095 = vadd.f32 %v962, %v1094
    %v1096 = vpop.f32.mrb[0].mxu0
    %v1097 = vpop.f32.mrb[0].mxu0
    %v1098 = vpop.f32.mrb[0].mxu0
    %1099 = vdwg.mxu0
    %v1100 = vmax.f32 %v1095, 0.0
    %v1101 = vpack.c.bf16 %v1100, %v1100
    %v1102 = vld [vmem:[#allocation8] sm:$0xf]
    %v1103 = vld [vmem:[#allocation8 + $0x4] sm:$0xf]
    %v1104 = vld [vmem:[#allocation8 + $0x8] sm:$0xf]
    %v1105 = vld [vmem:[#allocation8 + $0xc] sm:$0xf]
    %v1106 = vld [vmem:[#allocation8 + $0x10] sm:$0xf]
    %v1107 = vld [vmem:[#allocation8 + $0x14] sm:$0xf]
    %v1108 = vld [vmem:[#allocation8 + $0x18] sm:$0xf]
    %v1109 = vld [vmem:[#allocation8 + $0x1c] sm:$0xf]
    %v1110 = vld [vmem:[#allocation8 + $0x20] sm:$0xf]
    %v1111 = vld [vmem:[#allocation8 + $0x24] sm:$0xf]
    %v1112 = vld [vmem:[#allocation8 + $0x28] sm:$0xf]
    %v1113 = vld [vmem:[#allocation8 + $0x2c] sm:$0xf]
    %v1114 = vld [vmem:[#allocation8 + $0x30] sm:$0xf]
    %v1115 = vld [vmem:[#allocation8 + $0x34] sm:$0xf]
    %v1116 = vld [vmem:[#allocation8 + $0x38] sm:$0xf]
    %v1117 = vld [vmem:[#allocation8 + $0x3c] sm:$0xf]
    %v1118 = vld [vmem:[%s6] sm:$0x1]
    %v1120 = vlaneseq
    %v1121 = vshrl.u32 %v1120, 7
    %v1122 = vsub.s32 0, %v1121
    %v1123 = vrot.slane %v1118, %v1122
    %v1141 = vunpack.c.l.b16 %v1102
    %v1142 = vunpack.c.l.b16 %v1103
    %v1143 = vunpack.c.l.b16 %v1104
    %v1144 = vunpack.c.l.b16 %v1105
    %v1145 = vunpack.c.l.b16 %v1106
    %v1146 = vunpack.c.l.b16 %v1107
    %v1147 = vunpack.c.l.b16 %v1108
    %v1148 = vunpack.c.l.b16 %v1109
    %v1149 = vunpack.c.l.b16 %v1110
    %v1150 = vunpack.c.l.b16 %v1111
    %v1151 = vunpack.c.l.b16 %v1112
    %v1152 = vunpack.c.l.b16 %v1113
    %v1153 = vunpack.c.l.b16 %v1114
    %v1154 = vunpack.c.l.b16 %v1115
    %v1155 = vunpack.c.l.b16 %v1116
    %v1156 = vunpack.c.l.b16 %v1117
    %v1157 = vpack.c.b16 %v1142, %v1141
    %v1158 = vpack.c.b16 %v1144, %v1143
    %v1159 = vpack.c.b16 %v1146, %v1145
    %v1160 = vpack.c.b16 %v1148, %v1147
    %v1161 = vpack.c.b16 %v1150, %v1149
    %v1162 = vpack.c.b16 %v1152, %v1151
    %v1163 = vpack.c.b16 %v1154, %v1153
    %v1164 = vpack.c.b16 %v1156, %v1155
    %1173 = vmatprep.subr.bf16.mxu0 0
    %1174 = vmatpush1.bf16.msra.mxu0 %v1157
    %1175 = vmatprep.subr.bf16.mxu0 0
    %1176 = vmatpush1.bf16.msra.mxu0 %v1158
    %1177 = vmatprep.subr.bf16.mxu0 0
    %1178 = vmatpush1.bf16.msra.mxu0 %v1159
    %1179 = vmatprep.subr.bf16.mxu0 0
    %1180 = vmatpush1.bf16.msra.mxu0 %v1160
    %1181 = vmatprep.subr.bf16.mxu0 0
    %1182 = vmatpush1.bf16.msra.mxu0 %v1161
    %1183 = vmatprep.subr.bf16.mxu0 0
    %1184 = vmatpush1.bf16.msra.mxu0 %v1162
    %1185 = vmatprep.subr.bf16.mxu0 0
    %1186 = vmatpush1.bf16.msra.mxu0 %v1163
    %1187 = vmatprep.subr.bf16.mxu0 0
    %1188 = vmatpush1.bf16.msra.mxu0 %v1164
    %1189 = vmatprep.subr.bf16.mxu0 0
    %1190 = vmatpush1.bf16.msra.mxu0 0
    %1191 = vmatprep.subr.bf16.mxu0 0
    %1192 = vmatpush1.bf16.msra.mxu0 0
    %1193 = vmatprep.subr.bf16.mxu0 0
    %1194 = vmatpush1.bf16.msra.mxu0 0
    %1195 = vmatprep.subr.bf16.mxu0 0
    %1196 = vmatpush1.bf16.msra.mxu0 0
    %1197 = vmatprep.subr.bf16.mxu0 0
    %1198 = vmatpush1.bf16.msra.mxu0 0
    %1199 = vmatprep.subr.bf16.mxu0 0
    %1200 = vmatpush1.bf16.msra.mxu0 0
    %1201 = vmatprep.subr.bf16.mxu0 0
    %1202 = vmatpush1.bf16.msra.mxu0 0
    %1203 = vmatprep.subr.bf16.mxu0 0
    %1204 = vmatpush1.bf16.msra.mxu0 0
    %1205 = vmatprep.mubr.bf16.mxu0 0
    %1206 = vmatmul.mubr.bf16.gmra.mrb[0].mxu0 %v1101
    %v1207 = vpop.f32.mrb[0].mxu0
    %v1208 = vadd.f32 %v1123, %v1207
    %v1209 = vpop.f32.mrb[0].mxu0
    %v1210 = vpop.f32.mrb[0].mxu0
    %v1211 = vpop.f32.mrb[0].mxu0
    %1212 = vdwg.mxu0
    %v1213 = vmax.f32 %v1208, 0.0
    %v1214 = vpack.c.bf16 %v1213, %v1213
    %v1215 = vld [vmem:[#allocation10] sm:$0xf]
    %v1216 = vld [vmem:[#allocation10 + $0x4] sm:$0xf]
    %v1217 = vld [vmem:[#allocation10 + $0x8] sm:$0xf]
    %v1218 = vld [vmem:[#allocation10 + $0xc] sm:$0xf]
    %v1219 = vld [vmem:[#allocation10 + $0x10] sm:$0xf]
    %v1220 = vld [vmem:[#allocation10 + $0x14] sm:$0xf]
    %v1221 = vld [vmem:[#allocation10 + $0x18] sm:$0xf]
    %v1222 = vld [vmem:[#allocation10 + $0x1c] sm:$0xf]
    %v1223 = vld [vmem:[#allocation10 + $0x20] sm:$0xf]
    %v1224 = vld [vmem:[#allocation10 + $0x24] sm:$0xf]
    %v1225 = vld [vmem:[#allocation10 + $0x28] sm:$0xf]
    %v1226 = vld [vmem:[#allocation10 + $0x2c] sm:$0xf]
    %v1227 = vld [vmem:[#allocation10 + $0x30] sm:$0xf]
    %v1228 = vld [vmem:[#allocation10 + $0x34] sm:$0xf]
    %v1229 = vld [vmem:[#allocation10 + $0x38] sm:$0xf]
    %v1230 = vld [vmem:[#allocation10 + $0x3c] sm:$0xf]
    %v1231 = vld [vmem:[%s8] sm:$0x1]
    %v1233 = vlaneseq
    %v1234 = vshrl.u32 %v1233, 7
    %v1235 = vsub.s32 0, %v1234
    %v1236 = vrot.slane %v1231, %v1235
    %v1254 = vunpack.c.l.b16 %v1215
    %v1255 = vunpack.c.l.b16 %v1216
    %v1256 = vunpack.c.l.b16 %v1217
    %v1257 = vunpack.c.l.b16 %v1218
    %v1258 = vunpack.c.l.b16 %v1219
    %v1259 = vunpack.c.l.b16 %v1220
    %v1260 = vunpack.c.l.b16 %v1221
    %v1261 = vunpack.c.l.b16 %v1222
    %v1262 = vunpack.c.l.b16 %v1223
    %v1263 = vunpack.c.l.b16 %v1224
    %v1264 = vunpack.c.l.b16 %v1225
    %v1265 = vunpack.c.l.b16 %v1226
    %v1266 = vunpack.c.l.b16 %v1227
    %v1267 = vunpack.c.l.b16 %v1228
    %v1268 = vunpack.c.l.b16 %v1229
    %v1269 = vunpack.c.l.b16 %v1230
    %v1270 = vpack.c.b16 %v1255, %v1254
    %v1271 = vpack.c.b16 %v1257, %v1256
    %v1272 = vpack.c.b16 %v1259, %v1258
    %v1273 = vpack.c.b16 %v1261, %v1260
    %v1274 = vpack.c.b16 %v1263, %v1262
    %v1275 = vpack.c.b16 %v1265, %v1264
    %v1276 = vpack.c.b16 %v1267, %v1266
    %v1277 = vpack.c.b16 %v1269, %v1268
    %1286 = vmatprep.subr.bf16.mxu0 0
    %1287 = vmatpush1.bf16.msra.mxu0 %v1270
    %1288 = vmatprep.subr.bf16.mxu0 0
    %1289 = vmatpush1.bf16.msra.mxu0 %v1271
    %1290 = vmatprep.subr.bf16.mxu0 0
    %1291 = vmatpush1.bf16.msra.mxu0 %v1272
    %1292 = vmatprep.subr.bf16.mxu0 0
    %1293 = vmatpush1.bf16.msra.mxu0 %v1273
    %1294 = vmatprep.subr.bf16.mxu0 0
    %1295 = vmatpush1.bf16.msra.mxu0 %v1274
    %1296 = vmatprep.subr.bf16.mxu0 0
    %1297 = vmatpush1.bf16.msra.mxu0 %v1275
    %1298 = vmatprep.subr.bf16.mxu0 0
    %1299 = vmatpush1.bf16.msra.mxu0 %v1276
    %1300 = vmatprep.subr.bf16.mxu0 0
    %1301 = vmatpush1.bf16.msra.mxu0 %v1277
    %1302 = vmatprep.subr.bf16.mxu0 0
    %1303 = vmatpush1.bf16.msra.mxu0 0
    %1304 = vmatprep.subr.bf16.mxu0 0
    %1305 = vmatpush1.bf16.msra.mxu0 0
    %1306 = vmatprep.subr.bf16.mxu0 0
    %1307 = vmatpush1.bf16.msra.mxu0 0
    %1308 = vmatprep.subr.bf16.mxu0 0
    %1309 = vmatpush1.bf16.msra.mxu0 0
    %1310 = vmatprep.subr.bf16.mxu0 0
    %1311 = vmatpush1.bf16.msra.mxu0 0
    %1312 = vmatprep.subr.bf16.mxu0 0
    %1313 = vmatpush1.bf16.msra.mxu0 0
    %1314 = vmatprep.subr.bf16.mxu0 0
    %1315 = vmatpush1.bf16.msra.mxu0 0
    %1316 = vmatprep.subr.bf16.mxu0 0
    %1317 = vmatpush1.bf16.msra.mxu0 0
    %1318 = vmatprep.mubr.bf16.mxu0 0
    %1319 = vmatmul.mubr.bf16.gmra.mrb[0].mxu0 %v1214
    %v1320 = vpop.f32.mrb[0].mxu0
    %v1321 = vadd.f32 %v1236, %v1320
    %v1322 = vpop.f32.mrb[0].mxu0
    %v1323 = vpop.f32.mrb[0].mxu0
    %v1324 = vpop.f32.mrb[0].mxu0
    %1325 = vdwg.mxu0
    %v1326 = vmax.f32 %v1321, 0.0
    %v1327 = vpack.c.bf16 %v1326, %v1326
    %v1328 = vld [vmem:[#allocation11] sm:$0xf]
    %v1329 = vld [vmem:[#allocation11 + $0x4] sm:$0xf]
    %v1330 = vld [vmem:[#allocation11 + $0x8] sm:$0xf]
    %v1331 = vld [vmem:[#allocation11 + $0xc] sm:$0xf]
    %v1332 = vld [vmem:[#allocation11 + $0x10] sm:$0xf]
    %v1333 = vld [vmem:[#allocation11 + $0x14] sm:$0xf]
    %v1334 = vld [vmem:[#allocation11 + $0x18] sm:$0xf]
    %v1335 = vld [vmem:[#allocation11 + $0x1c] sm:$0xf]
    %v1336 = vld [vmem:[#allocation11 + $0x20] sm:$0xf]
    %v1337 = vld [vmem:[#allocation11 + $0x24] sm:$0xf]
    %v1338 = vld [vmem:[#allocation11 + $0x28] sm:$0xf]
    %v1339 = vld [vmem:[#allocation11 + $0x2c] sm:$0xf]
    %v1340 = vld [vmem:[#allocation11 + $0x30] sm:$0xf]
    %v1341 = vld [vmem:[#allocation11 + $0x34] sm:$0xf]
    %v1342 = vld [vmem:[#allocation11 + $0x38] sm:$0xf]
    %v1343 = vld [vmem:[#allocation11 + $0x3c] sm:$0xf]
    %v1344 = vld [vmem:[%s10] sm:$0x1]
    %v1346 = vlaneseq
    %v1347 = vshrl.u32 %v1346, 7
    %v1348 = vsub.s32 0, %v1347
    %v1349 = vrot.slane %v1344, %v1348
    %v1367 = vunpack.c.l.b16 %v1328
    %v1368 = vunpack.c.l.b16 %v1329
    %v1369 = vunpack.c.l.b16 %v1330
    %v1370 = vunpack.c.l.b16 %v1331
    %v1371 = vunpack.c.l.b16 %v1332
    %v1372 = vunpack.c.l.b16 %v1333
    %v1373 = vunpack.c.l.b16 %v1334
    %v1374 = vunpack.c.l.b16 %v1335
    %v1375 = vunpack.c.l.b16 %v1336
    %v1376 = vunpack.c.l.b16 %v1337
    %v1377 = vunpack.c.l.b16 %v1338
    %v1378 = vunpack.c.l.b16 %v1339
    %v1379 = vunpack.c.l.b16 %v1340
    %v1380 = vunpack.c.l.b16 %v1341
    %v1381 = vunpack.c.l.b16 %v1342
    %v1382 = vunpack.c.l.b16 %v1343
    %v1383 = vpack.c.b16 %v1368, %v1367
    %v1384 = vpack.c.b16 %v1370, %v1369
    %v1385 = vpack.c.b16 %v1372, %v1371
    %v1386 = vpack.c.b16 %v1374, %v1373
    %v1387 = vpack.c.b16 %v1376, %v1375
    %v1388 = vpack.c.b16 %v1378, %v1377
    %v1389 = vpack.c.b16 %v1380, %v1379
    %v1390 = vpack.c.b16 %v1382, %v1381
    %1399 = vmatprep.subr.bf16.mxu0 0
    %1400 = vmatpush1.bf16.msra.mxu0 %v1383
    %1401 = vmatprep.subr.bf16.mxu0 0
    %1402 = vmatpush1.bf16.msra.mxu0 %v1384
    %1403 = vmatprep.subr.bf16.mxu0 0
    %1404 = vmatpush1.bf16.msra.mxu0 %v1385
    %1405 = vmatprep.subr.bf16.mxu0 0
    %1406 = vmatpush1.bf16.msra.mxu0 %v1386
    %1407 = vmatprep.subr.bf16.mxu0 0
    %1408 = vmatpush1.bf16.msra.mxu0 %v1387
    %1409 = vmatprep.subr.bf16.mxu0 0
    %1410 = vmatpush1.bf16.msra.mxu0 %v1388
    %1411 = vmatprep.subr.bf16.mxu0 0
    %1412 = vmatpush1.bf16.msra.mxu0 %v1389
    %1413 = vmatprep.subr.bf16.mxu0 0
    %1414 = vmatpush1.bf16.msra.mxu0 %v1390
    %1415 = vmatprep.subr.bf16.mxu0 0
    %1416 = vmatpush1.bf16.msra.mxu0 0
    %1417 = vmatprep.subr.bf16.mxu0 0
    %1418 = vmatpush1.bf16.msra.mxu0 0
    %1419 = vmatprep.subr.bf16.mxu0 0
    %1420 = vmatpush1.bf16.msra.mxu0 0
    %1421 = vmatprep.subr.bf16.mxu0 0
    %1422 = vmatpush1.bf16.msra.mxu0 0
    %1423 = vmatprep.subr.bf16.mxu0 0
    %1424 = vmatpush1.bf16.msra.mxu0 0
    %1425 = vmatprep.subr.bf16.mxu0 0
    %1426 = vmatpush1.bf16.msra.mxu0 0
    %1427 = vmatprep.subr.bf16.mxu0 0
    %1428 = vmatpush1.bf16.msra.mxu0 0
    %1429 = vmatprep.subr.bf16.mxu0 0
    %1430 = vmatpush1.bf16.msra.mxu0 0
    %1431 = vmatprep.mubr.bf16.mxu0 0
    %1432 = vmatmul.mubr.bf16.gmra.mrb[0].mxu0 %v1327
    %v1433 = vpop.f32.mrb[0].mxu0
    %v1434 = vadd.f32 %v1349, %v1433
    %v1435 = vpop.f32.mrb[0].mxu0
    %v1436 = vpop.f32.mrb[0].mxu0
    %v1437 = vpop.f32.mrb[0].mxu0
    %1438 = vdwg.mxu0
    %v1439 = vmax.f32 %v1434, 0.0
    %v1440 = vpack.c.bf16 %v1439, %v1439
    %v1441 = vld [vmem:[#allocation13] sm:$0xf]
    %v1442 = vld [vmem:[#allocation13 + $0x4] sm:$0xf]
    %v1443 = vld [vmem:[#allocation13 + $0x8] sm:$0xf]
    %v1444 = vld [vmem:[#allocation13 + $0xc] sm:$0xf]
    %v1445 = vld [vmem:[#allocation13 + $0x10] sm:$0xf]
    %v1446 = vld [vmem:[#allocation13 + $0x14] sm:$0xf]
    %v1447 = vld [vmem:[#allocation13 + $0x18] sm:$0xf]
    %v1448 = vld [vmem:[#allocation13 + $0x1c] sm:$0xf]
    %v1449 = vld [vmem:[#allocation13 + $0x20] sm:$0xf]
    %v1450 = vld [vmem:[#allocation13 + $0x24] sm:$0xf]
    %v1451 = vld [vmem:[#allocation13 + $0x28] sm:$0xf]
    %v1452 = vld [vmem:[#allocation13 + $0x2c] sm:$0xf]
    %v1453 = vld [vmem:[#allocation13 + $0x30] sm:$0xf]
    %v1454 = vld [vmem:[#allocation13 + $0x34] sm:$0xf]
    %v1455 = vld [vmem:[#allocation13 + $0x38] sm:$0xf]
    %v1456 = vld [vmem:[#allocation13 + $0x3c] sm:$0xf]
    %v1457 = vld [vmem:[%s12] sm:$0x1]
    %v1459 = vlaneseq
    %v1460 = vshrl.u32 %v1459, 7
    %v1461 = vsub.s32 0, %v1460
    %v1462 = vrot.slane %v1457, %v1461
    %v1480 = vunpack.c.l.b16 %v1441
    %v1481 = vunpack.c.l.b16 %v1442
    %v1482 = vunpack.c.l.b16 %v1443
    %v1483 = vunpack.c.l.b16 %v1444
    %v1484 = vunpack.c.l.b16 %v1445
    %v1485 = vunpack.c.l.b16 %v1446
    %v1486 = vunpack.c.l.b16 %v1447
    %v1487 = vunpack.c.l.b16 %v1448
    %v1488 = vunpack.c.l.b16 %v1449
    %v1489 = vunpack.c.l.b16 %v1450
    %v1490 = vunpack.c.l.b16 %v1451
    %v1491 = vunpack.c.l.b16 %v1452
    %v1492 = vunpack.c.l.b16 %v1453
    %v1493 = vunpack.c.l.b16 %v1454
    %v1494 = vunpack.c.l.b16 %v1455
    %v1495 = vunpack.c.l.b16 %v1456
    %v1496 = vpack.c.b16 %v1481, %v1480
    %v1497 = vpack.c.b16 %v1483, %v1482
    %v1498 = vpack.c.b16 %v1485, %v1484
    %v1499 = vpack.c.b16 %v1487, %v1486
    %v1500 = vpack.c.b16 %v1489, %v1488
    %v1501 = vpack.c.b16 %v1491, %v1490
    %v1502 = vpack.c.b16 %v1493, %v1492
    %v1503 = vpack.c.b16 %v1495, %v1494
    %1512 = vmatprep.subr.bf16.mxu0 0
    %1513 = vmatpush1.bf16.msra.mxu0 %v1496
    %1514 = vmatprep.subr.bf16.mxu0 0
    %1515 = vmatpush1.bf16.msra.mxu0 %v1497
    %1516 = vmatprep.subr.bf16.mxu0 0
    %1517 = vmatpush1.bf16.msra.mxu0 %v1498
    %1518 = vmatprep.subr.bf16.mxu0 0
    %1519 = vmatpush1.bf16.msra.mxu0 %v1499
    %1520 = vmatprep.subr.bf16.mxu0 0
    %1521 = vmatpush1.bf16.msra.mxu0 %v1500
    %1522 = vmatprep.subr.bf16.mxu0 0
    %1523 = vmatpush1.bf16.msra.mxu0 %v1501
    %1524 = vmatprep.subr.bf16.mxu0 0
    %1525 = vmatpush1.bf16.msra.mxu0 %v1502
    %1526 = vmatprep.subr.bf16.mxu0 0
    %1527 = vmatpush1.bf16.msra.mxu0 %v1503
    %1528 = vmatprep.subr.bf16.mxu0 0
    %1529 = vmatpush1.bf16.msra.mxu0 0
    %1530 = vmatprep.subr.bf16.mxu0 0
    %1531 = vmatpush1.bf16.msra.mxu0 0
    %1532 = vmatprep.subr.bf16.mxu0 0
    %1533 = vmatpush1.bf16.msra.mxu0 0
    %1534 = vmatprep.subr.bf16.mxu0 0
    %1535 = vmatpush1.bf16.msra.mxu0 0
    %1536 = vmatprep.subr.bf16.mxu0 0
    %1537 = vmatpush1.bf16.msra.mxu0 0
    %1538 = vmatprep.subr.bf16.mxu0 0
    %1539 = vmatpush1.bf16.msra.mxu0 0
    %1540 = vmatprep.subr.bf16.mxu0 0
    %1541 = vmatpush1.bf16.msra.mxu0 0
    %1542 = vmatprep.subr.bf16.mxu0 0
    %1543 = vmatpush1.bf16.msra.mxu0 0
    %1544 = vmatprep.mubr.bf16.mxu0 0
    %1545 = vmatmul.mubr.bf16.gmra.mrb[0].mxu0 %v1440
    %v1546 = vpop.f32.mrb[0].mxu0
    %v1547 = vadd.f32 %v1462, %v1546
    %v1548 = vpop.f32.mrb[0].mxu0
    %v1549 = vpop.f32.mrb[0].mxu0
    %v1550 = vpop.f32.mrb[0].mxu0
    %1551 = vdwg.mxu0
    %v1552 = vlaneseq
    %v1553 = vand.u32 %v1552, 127
    %vm1554 = vcmp.lt.s32.totalorder %v1553, 10
    %v1555 = vsel %vm1554, %v1547, -1e+30
    %1556 = vmax.xlane.f32.xlu0 %v1555
    %v1557 = vpop.xlane.xlu0 %1556
    %v1558 = vsub.f32 %v1555, %v1557
    %v1559 = vmul.f32 %v1558, 1.442695
    %v1560 = vpow.pop %v1559
    %1561 = vadd.xlane.f32.xlu0 %v1560
    %v1562 = vpop.xlane.xlu0 %1561
    %v1563 = vlog2.pop %v1562
    %v1564 = vmul.f32 %v1563, 0.6931472
    %v1565 = vsub.f32 %v1558, %v1564
    %1566 = vst [vmem:[#allocation14] sm:$0xff] %v1565
    // Predicated region
    $region82: #{tpu_custom_call.1} parent=1 // pred_check
      _
    $region83: #{tpu_custom_call.1} parent=1 // pred_check_branch
      %1568 = sbr.rel (0) target = $region85
    $region84: #{tpu_custom_call.1} parent=1 // pred_region
      %s1570 = ssub.s32 128, 128
      %1571 = vsyncadd [#allocation4], %s1570
      %s1573 = sshll.u32 [#allocation14], 4
      %s1574 = int_to_ptr.vmem [resolvable:$true] %s1573
      %1576 = dma.vmem_to_hbm [thread:$0]  %s1574, 128, %s13, [#allocation4]
    $region85: #{tpu_custom_call.1} parent=1 // pred_fallthru
      _
    // Predicated region
    $region86: #{tpu_custom_call.1} parent=1 // pred_check
      _
    $region87: #{tpu_custom_call.1} parent=1 // pred_check_branch
      %1578 = sbr.rel (0) target = $region89
    $region88: #{tpu_custom_call.1} parent=1 // pred_region
      %1579 = dma.done [#allocation4], 128
    $region89: #{tpu_custom_call.1} parent=1 // pred_fallthru
      _
    %1580 = vsyncpa [#allocation3], 1
    %1581 = vsyncpa [#allocation6], 1
    %1582 = vsyncpa [#allocation9], 1
    %1583 = vsyncpa [#allocation12], 1
    %1584 = vsyncpa [#allocation4], 1

</llo_original>
